<compile_context>
chip_gen: v6e
topology: v6e:2x2x1
jax: 0.10.0
libtpu: 0.0.40
codegen_flags: <defaults>
</compile_context>

<pallas_src>
import functools

import jax
import jax.numpy as jnp
from jax.experimental import pallas as pl
from jax.experimental.pallas import tpu as pltpu

_NEG_SLOPE = 0.2
_BN_EPS = 1e-5
_VMEM_LIMIT = 48 * 1024 * 1024   # fits v7x's 64 MiB/TC with headroom


# ----------------------------------------------------------------------------
# Conv kernel: one space-to-depth image per grid step.
#   prologue  : per-channel affine (previous layer's BN) + LeakyReLU
#   conv      : 4x4 / stride-2 / pad-1 conv expressed as 4 tap matmuls on the
#               space-to-depth input, f32 accumulation
#   outputs   : raw conv+bias (compute dtype) and, optionally, per-image
#               (sum, sum of squares) partial BatchNorm statistics (f32).
# ----------------------------------------------------------------------------
def _conv_s2d_kernel(*refs, c4, cout, oh, ow, prologue, want_stats):
    if prologue:
        xs_ref, w_ref, b_ref, sc_ref, sh_ref = refs[:5]
        rest = refs[5:]
    else:
        xs_ref, w_ref, b_ref = refs[:3]
        rest = refs[3:]
    if want_stats:
        out_ref, stats_ref = rest
    else:
        (out_ref,) = rest

    x = xs_ref[0].astype(jnp.float32)                 # (Hs, Ws, 4C)
    if prologue:
        y = x * sc_ref[...] + sh_ref[...]             # BN affine of prev layer
        y = jnp.where(y > 0, y, _NEG_SLOPE * y)       # LeakyReLU of prev layer
    else:
        y = x
    y = y.astype(w_ref.dtype)                         # MXU operand dtype

    m = oh * ow
    acc = jnp.zeros((m, cout), jnp.float32)
    # 2x2 window on the space-to-depth image == the original 4x4/stride-2 conv.
    for t, (ri, rj) in enumerate(((0, 0), (0, 1), (1, 0), (1, 1))):
        tap = y[ri:ri + oh, rj:rj + ow, :].reshape(m, c4)
        acc = acc + jnp.dot(tap, w_ref[t * c4:(t + 1) * c4, :],
                            preferred_element_type=jnp.float32)
    acc = acc + b_ref[...]
    out_ref[0] = acc.astype(out_ref.dtype)

    if want_stats:
        stats_ref[0] = jnp.concatenate(
            [jnp.sum(acc, axis=0, keepdims=True),
             jnp.sum(acc * acc, axis=0, keepdims=True)], axis=0)


# ----------------------------------------------------------------------------
# Host-side layout glue (1x copies, no patch-matrix amplification)
# ----------------------------------------------------------------------------
def space_to_depth_pad1(x, pad_val_c=None):
    """(N,H,W,C) -> (N,(H+2)/2,(W+2)/2,4C); border padded with pad_val_c (per C)."""
    N, H, W, C = x.shape
    if pad_val_c is None:
        xp = jnp.pad(x, ((0, 0), (1, 1), (1, 1), (0, 0)))
    else:
        xp = jnp.broadcast_to(pad_val_c.astype(x.dtype).reshape(1, 1, 1, C),
                              (N, H + 2, W + 2, C))
        xp = jax.lax.dynamic_update_slice(xp, x, (0, 1, 1, 0))
    Hp, Wp = H + 2, W + 2
    xs = xp.reshape(N, Hp // 2, 2, Wp // 2, 2, C)
    xs = xs.transpose(0, 1, 3, 2, 4, 5).reshape(N, Hp // 2, Wp // 2, 4 * C)
    return xs


def weight_4x4s2_to_mat(w_oihw):
    # (Cout, Cin, 4, 4) -> (16*Cin, Cout), row order (ri, rj, pi, pj, ci)
    # matching the space-to-depth channel layout and the kernel's tap order.
    Cout, Cin = w_oihw.shape[:2]
    wr = w_oihw.reshape(Cout, Cin, 2, 2, 2, 2)        # (co, ci, ri, pi, rj, pj)
    return wr.transpose(2, 4, 3, 5, 1, 0).reshape(16 * Cin, Cout)


def conv_block(x_nhwc, w_oihw, b, *, prologue, pad_val, want_stats, compute_dtype):
    """One 4x4/stride-2/pad-1 conv layer as a single batch-gridded pallas_call."""
    N, H, W, C = x_nhwc.shape
    Cout = w_oihw.shape[0]
    xs = space_to_depth_pad1(x_nhwc.astype(compute_dtype), pad_val)
    _, Hs, Ws, C4 = xs.shape
    oh, ow = Hs - 1, Ws - 1
    M = oh * ow
    wmat = weight_4x4s2_to_mat(w_oihw).astype(compute_dtype)     # (16C, Cout)

    args = [xs, wmat, b.reshape(1, Cout).astype(jnp.float32)]
    in_specs = [
        pl.BlockSpec((1, Hs, Ws, C4), lambda i: (i, 0, 0, 0)),
        pl.BlockSpec((4 * C4, Cout), lambda i: (0, 0)),
        pl.BlockSpec((1, Cout), lambda i: (0, 0)),
    ]
    if prologue is not None:
        scale_c, shift_c = prologue
        # per-original-channel affine broadcast over the 4 space-to-depth taps
        sc = jnp.tile(scale_c.astype(jnp.float32), 4).reshape(1, 1, C4)
        sh = jnp.tile(shift_c.astype(jnp.float32), 4).reshape(1, 1, C4)
        args += [sc, sh]
        in_specs += [pl.BlockSpec((1, 1, C4), lambda i: (0, 0, 0))] * 2

    out_shapes = [jax.ShapeDtypeStruct((N, M, Cout), compute_dtype)]
    out_specs = [pl.BlockSpec((1, M, Cout), lambda i: (i, 0, 0))]
    if want_stats:
        out_shapes.append(jax.ShapeDtypeStruct((N, 2, Cout), jnp.float32))
        out_specs.append(pl.BlockSpec((1, 2, Cout), lambda i: (i, 0, 0)))

    kernel = functools.partial(_conv_s2d_kernel, c4=C4, cout=Cout, oh=oh, ow=ow,
                               prologue=prologue is not None, want_stats=want_stats)
    res = pl.pallas_call(
        kernel,
        out_shape=tuple(out_shapes) if want_stats else out_shapes[0],
        grid=(N,),
        in_specs=in_specs,
        out_specs=tuple(out_specs) if want_stats else out_specs[0],
        compiler_params=pltpu.CompilerParams(
            dimension_semantics=("parallel",),
            vmem_limit_bytes=_VMEM_LIMIT),
    )(*args)

    if want_stats:
        out, stats = res
        return out.reshape(N, oh, ow, Cout), stats
    return res.reshape(N, oh, ow, Cout), None


def _bn_scale_shift(stats, gamma, beta, count):
    """Reduce per-image (sum, sumsq) partials -> training-mode BN scale/shift."""
    s = jnp.sum(stats.astype(jnp.float32), axis=0)     # (2, Cout)
    mean = s[0] / count
    var = jnp.maximum(s[1] / count - mean * mean, 0.0)  # biased variance
    scale = gamma.astype(jnp.float32) * jax.lax.rsqrt(var + _BN_EPS)
    shift = beta.astype(jnp.float32) - mean * scale
    return scale, shift


def _zero_preimage(scale, shift):
    # value v with scale*v + shift == 0, so the next layer's prologue maps
    # zero-pad positions back to (approximately) zero.
    safe = jnp.where(scale == 0, 1.0, scale)
    return jnp.where(scale == 0, 0.0, -shift / safe)


# ----------------------------------------------------------------------------
# Discriminator forward (mirrors the PyTorch module)
# ----------------------------------------------------------------------------
def discriminator_forward(params, img_nchw, label_nchw, *,
                          compute_dtype=jnp.bfloat16):
    img = jnp.transpose(img_nchw, (0, 2, 3, 1))        # NCHW -> NHWC
    lab = jnp.transpose(label_nchw, (0, 2, 3, 1))
    c_img, c_lab = img.shape[-1], lab.shape[-1]
    half = params["w1"].shape[0]
    d = 2 * half

    # Fused conv_layer_1 + conv_layer_2: block-diagonal weight on the
    # channel-concatenated input (== torch.cat of the two branch outputs).
    x = jnp.concatenate([img, lab], axis=-1)
    wc = jnp.zeros((d, c_img + c_lab, 4, 4), jnp.float32)
    wc = wc.at[:half, :c_img].set(params["w1"])
    wc = wc.at[half:, c_img:].set(params["w2"])
    bc = jnp.concatenate([params["b1"], params["b2"]])
    h12, _ = conv_block(x, wc, bc, prologue=None, pad_val=None,
                        want_stats=False, compute_dtype=compute_dtype)

    # Layer 3: LeakyReLU of layers 1/2 applied in the prologue (scale=1, shift=0).
    ones = jnp.ones((d,), jnp.float32)
    zeros = jnp.zeros((d,), jnp.float32)
    h3, stats3 = conv_block(h12, params["w3"], params["b3"],
                            prologue=(ones, zeros), pad_val=None,
                            want_stats=True, compute_dtype=compute_dtype)
    n3, oh3, ow3, _ = h3.shape
    scale3, shift3 = _bn_scale_shift(stats3, params["g3"], params["bt3"],
                                     n3 * oh3 * ow3)

    # Layer 4: BN3 affine + LeakyReLU fused into this layer's prologue.
    h4, stats4 = conv_block(h3, params["w4"], params["b4"],
                            prologue=(scale3, shift3),
                            pad_val=_zero_preimage(scale3, shift3),
                            want_stats=True, compute_dtype=compute_dtype)
    n4, oh4, ow4, c4out = h4.shape
    scale4, shift4 = _bn_scale_shift(stats4, params["g4"], params["bt4"],
                                     n4 * oh4 * ow4)

    # Final 4x4 valid conv on a 4x4 map == tiny matvec + sigmoid; BN4 affine +
    # LeakyReLU applied here in plain JAX (a pallas dispatch would dominate).
    hf = h4.astype(jnp.float32) * scale4.reshape(1, 1, 1, -1) \
        + shift4.reshape(1, 1, 1, -1)
    hf = jnp.where(hf > 0, hf, _NEG_SLOPE * hf)
    KH, KW = params["w5"].shape[2:]
    assert (oh4, ow4) == (KH, KW), "final layer expects spatial extent == kernel size"
    wmat5 = jnp.transpose(params["w5"], (2, 3, 1, 0)).reshape(KH * KW * c4out, -1)
    out = jax.nn.sigmoid(hf.reshape(n4, -1) @ wmat5 + params["b5"])
    return out.reshape(n4, -1, 1, 1)                   # (N, out_channels, 1, 1)


# ----------------------------------------------------------------------------
# Pure-JAX reference (independent path, for correctness check)
# ----------------------------------------------------------------------------
def _ref_conv(x, w_oihw, b, stride, pad):
    w = jnp.transpose(w_oihw, (2, 3, 1, 0))            # OIHW -> HWIO
    out = jax.lax.conv_general_dilated(
        x, w, window_strides=(stride, stride),
        padding=[(pad, pad), (pad, pad)],
        dimension_numbers=("NHWC", "HWIO", "NHWC"))
    return out + b.reshape(1, 1, 1, -1)


def _ref_bn(x, gamma, beta, eps=_BN_EPS):
    mean = jnp.mean(x, axis=(0, 1, 2), keepdims=True)
    var = jnp.mean((x - mean) ** 2, axis=(0, 1, 2), keepdims=True)
    return (x - mean) * gamma.reshape(1, 1, 1, -1) / jnp.sqrt(var + eps) \
        + beta.reshape(1, 1, 1, -1)


def _leaky(x):
    return jnp.where(x > 0, x, _NEG_SLOPE * x)


def reference_forward(params, img_nchw, label_nchw):
    x = jnp.transpose(img_nchw, (0, 2, 3, 1))
    y = jnp.transpose(label_nchw, (0, 2, 3, 1))
    x = _leaky(_ref_conv(x, params["w1"], params["b1"], 2, 1))
    y = _leaky(_ref_conv(y, params["w2"], params["b2"], 2, 1))
    h = jnp.concatenate([x, y], axis=-1)
    h = _leaky(_ref_bn(_ref_conv(h, params["w3"], params["b3"], 2, 1),
                       params["g3"], params["bt3"]))
    h = _leaky(_ref_bn(_ref_conv(h, params["w4"], params["b4"], 2, 1),
                       params["g4"], params["bt4"]))
    out = jax.nn.sigmoid(_ref_conv(h, params["w5"], params["b5"], 1, 0))
    return jnp.transpose(out, (0, 3, 1, 2))


# ----------------------------------------------------------------------------
# Deterministic parameter init (shapes from Discriminator.__init__, small d)
# ----------------------------------------------------------------------------
def init_params(key, img_channels=1, label_channels=10, out_channels=1, d=16):
    ks = jax.random.split(key, 10)

    def w(k, shape):
        return (0.05 * jax.random.normal(k, shape)).astype(jnp.float32)

    return {
        "w1": w(ks[0], (d // 2, img_channels, 4, 4)),
        "b1": w(ks[1], (d // 2,)),
        "w2": w(ks[2], (d // 2, label_channels, 4, 4)),
        "b2": w(ks[3], (d // 2,)),
        "w3": w(ks[4], (d * 2, d, 4, 4)),
        "b3": w(ks[5], (d * 2,)),
        "g3": 1.0 + 0.1 * jax.random.normal(ks[6], (d * 2,)).astype(jnp.float32),
        "bt3": 0.1 * jax.random.normal(ks[6], (d * 2,)).astype(jnp.float32),
        "w4": w(ks[7], (d * 4, d * 2, 4, 4)),
        "b4": w(ks[8], (d * 4,)),
        "g4": 1.0 + 0.1 * jax.random.normal(ks[9], (d * 4,)).astype(jnp.float32),
        "bt4": 0.1 * jax.random.normal(ks[9], (d * 4,)).astype(jnp.float32),
        "w5": w(ks[9], (out_channels, d * 4, 4, 4)),
        "b5": w(ks[0], (out_channels,)),
    }


if __name__ == "__main__":
    key = jax.random.PRNGKey(0)
    kp, ki, kl = jax.random.split(key, 3)

    # 32x32 inputs (final 4x4 valid conv reduces 4x4 -> 1x1), batch=2,
    # 1 image channel, 10 label maps, d=16.
    batch, H, W = 2, 32, 32
    params = init_params(kp, img_channels=1, label_channels=10, out_channels=1, d=16)
    img = jax.random.normal(ki, (batch, 1, H, W), dtype=jnp.float32)
    label = jax.random.normal(kl, (batch, 10, H, W), dtype=jnp.float32)

    ref = jax.block_until_ready(reference_forward(params, img, label))

    # f32 path: tight structural-correctness check of the kernels.
    fwd_f32 = jax.jit(functools.partial(discriminator_forward,
                                        compute_dtype=jnp.float32))
    out_f32 = jax.block_until_ready(fwd_f32(params, img, label))
    assert out_f32.shape == (batch, 1, 1, 1), out_f32.shape
    assert jnp.allclose(out_f32, ref, rtol=1e-4, atol=1e-4), (out_f32, ref)

    # bf16 path: the performance configuration (bf16 MXU operands + bf16
    # inter-layer activations, f32 accumulation / BN math) — loose tolerance.
    fwd_bf16 = jax.jit(functools.partial(discriminator_forward,
                                         compute_dtype=jnp.bfloat16))
    out_bf16 = jax.block_until_ready(fwd_bf16(params, img, label))
    assert out_bf16.shape == (batch, 1, 1, 1), out_bf16.shape
    assert jnp.allclose(out_bf16, ref, rtol=7.5e-2, atol=7.5e-2), (out_bf16, ref)

    print("KERNEL_OK")
</pallas_src>

<mosaic_0001>
module attributes {stable_mosaic.version = 11 : i64} {
  func.func @_conv_s2d_kernel(%arg0: i32, %arg1: memref<1x17x17x44xf32, #tpu.memory_space<vmem>>, %arg2: memref<176x16xf32, #tpu.memory_space<vmem>>, %arg3: memref<1x16xf32, #tpu.memory_space<vmem>>, %arg4: memref<1x256x16xf32, #tpu.memory_space<vmem>>) attributes {dimension_semantics = [#tpu.dimension_semantics<parallel>], iteration_bounds = array<i64: 2>, scalar_prefetch = 0 : i64, scratch_operands = 0 : i64, tpu.core_type = #tpu.core_type<tc>, window_params = [{transform_indices = @transform_0, window_bounds = array<i64: 1, 17, 17, 44>}, {pipeline_mode = #tpu.pipeline_mode<synchronous>, transform_indices = @transform_1, window_bounds = array<i64: 176, 16>}, {pipeline_mode = #tpu.pipeline_mode<synchronous>, transform_indices = @transform_2, window_bounds = array<i64: 1, 16>}, {transform_indices = @transform_3, window_bounds = array<i64: 1, 256, 16>}]} {
    %c0 = arith.constant 0 : index
    %c0_0 = arith.constant 0 : index
    %c0_1 = arith.constant 0 : index
    %c0_2 = arith.constant 0 : index
    %0 = vector.load %arg1[%c0, %c0_0, %c0_1, %c0_2] : memref<1x17x17x44xf32, #tpu.memory_space<vmem>>, vector<1x17x17x44xf32>
    %1 = vector.shape_cast %0 : vector<1x17x17x44xf32> to vector<17x17x44xf32>
    %cst = arith.constant 0.000000e+00 : f32
    %2 = vector.broadcast %cst : f32 to vector<256x16xf32>
    %3 = vector.extract_strided_slice %1 {offsets = [0, 0, 0], sizes = [16, 16, 44], strides = [1, 1, 1]} : vector<17x17x44xf32> to vector<16x16x44xf32>
    %4 = vector.shape_cast %3 : vector<16x16x44xf32> to vector<256x44xf32>
    %c0_3 = arith.constant 0 : index
    %c0_4 = arith.constant 0 : index
    %5 = vector.load %arg2[%c0_3, %c0_4] : memref<176x16xf32, #tpu.memory_space<vmem>>, vector<44x16xf32>
    %cst_5 = arith.constant dense<0.000000e+00> : vector<256x16xf32>
    %6 = tpu.matmul %4, %5, %cst_5 {dimension_numbers = #tpu.dot_dimension_numbers<[1], [0], [0], [1], [0, 0, 1, 1], [], []>} : vector<256x44xf32>, vector<44x16xf32>, vector<256x16xf32> -> vector<256x16xf32>
    %7 = arith.addf %2, %6 : vector<256x16xf32>
    %8 = vector.extract_strided_slice %1 {offsets = [0, 1, 0], sizes = [16, 16, 44], strides = [1, 1, 1]} : vector<17x17x44xf32> to vector<16x16x44xf32>
    %9 = vector.shape_cast %8 : vector<16x16x44xf32> to vector<256x44xf32>
    %c44 = arith.constant 44 : index
    %c0_6 = arith.constant 0 : index
    %10 = vector.load %arg2[%c44, %c0_6] : memref<176x16xf32, #tpu.memory_space<vmem>>, vector<44x16xf32>
    %cst_7 = arith.constant dense<0.000000e+00> : vector<256x16xf32>
    %11 = tpu.matmul %9, %10, %cst_7 {dimension_numbers = #tpu.dot_dimension_numbers<[1], [0], [0], [1], [0, 0, 1, 1], [], []>} : vector<256x44xf32>, vector<44x16xf32>, vector<256x16xf32> -> vector<256x16xf32>
    %12 = arith.addf %7, %11 : vector<256x16xf32>
    %13 = vector.extract_strided_slice %1 {offsets = [1, 0, 0], sizes = [16, 16, 44], strides = [1, 1, 1]} : vector<17x17x44xf32> to vector<16x16x44xf32>
    %14 = vector.shape_cast %13 : vector<16x16x44xf32> to vector<256x44xf32>
    %c88 = arith.constant 88 : index
    %c0_8 = arith.constant 0 : index
    %15 = vector.load %arg2[%c88, %c0_8] : memref<176x16xf32, #tpu.memory_space<vmem>>, vector<44x16xf32>
    %cst_9 = arith.constant dense<0.000000e+00> : vector<256x16xf32>
    %16 = tpu.matmul %14, %15, %cst_9 {dimension_numbers = #tpu.dot_dimension_numbers<[1], [0], [0], [1], [0, 0, 1, 1], [], []>} : vector<256x44xf32>, vector<44x16xf32>, vector<256x16xf32> -> vector<256x16xf32>
    %17 = arith.addf %12, %16 : vector<256x16xf32>
    %18 = vector.extract_strided_slice %1 {offsets = [1, 1, 0], sizes = [16, 16, 44], strides = [1, 1, 1]} : vector<17x17x44xf32> to vector<16x16x44xf32>
    %19 = vector.shape_cast %18 : vector<16x16x44xf32> to vector<256x44xf32>
    %c132 = arith.constant 132 : index
    %c0_10 = arith.constant 0 : index
    %20 = vector.load %arg2[%c132, %c0_10] : memref<176x16xf32, #tpu.memory_space<vmem>>, vector<44x16xf32>
    %cst_11 = arith.constant dense<0.000000e+00> : vector<256x16xf32>
    %21 = tpu.matmul %19, %20, %cst_11 {dimension_numbers = #tpu.dot_dimension_numbers<[1], [0], [0], [1], [0, 0, 1, 1], [], []>} : vector<256x44xf32>, vector<44x16xf32>, vector<256x16xf32> -> vector<256x16xf32>
    %22 = arith.addf %17, %21 : vector<256x16xf32>
    %c0_12 = arith.constant 0 : index
    %c0_13 = arith.constant 0 : index
    %23 = vector.load %arg3[%c0_12, %c0_13] : memref<1x16xf32, #tpu.memory_space<vmem>>, vector<1x16xf32>
    %24 = vector.broadcast %23 : vector<1x16xf32> to vector<256x16xf32>
    %25 = arith.addf %22, %24 : vector<256x16xf32>
    %c0_14 = arith.constant 0 : index
    %c0_15 = arith.constant 0 : index
    %c0_16 = arith.constant 0 : index
    %26 = vector.load %arg4[%c0_14, %c0_15, %c0_16] : memref<1x256x16xf32, #tpu.memory_space<vmem>>, vector<1x256x16xf32>
    %27 = vector.shape_cast %26 : vector<1x256x16xf32> to vector<256x16xf32>
    %28 = vector.shape_cast %25 : vector<256x16xf32> to vector<1x256x16xf32>
    tpu.vector_store %arg4[%c0_14, %c0_15, %c0_16], %28 {strides = array<i32>} : memref<1x256x16xf32, #tpu.memory_space<vmem>>, vector<1x256x16xf32>,
    return
  }
  func.func @transform_0(%arg0: i32) -> (i32, i32, i32, i32) {
    %c0_i32 = arith.constant 0 : i32
    %c0_i32_0 = arith.constant 0 : i32
    %c0_i32_1 = arith.constant 0 : i32
    %c0_i32_2 = arith.constant 0 : i32
    return %arg0, %c0_i32, %c0_i32_0, %c0_i32_1 : i32, i32, i32, i32
  }
  func.func @transform_1(%arg0: i32) -> (i32, i32) {
    %c0_i32 = arith.constant 0 : i32
    %c0_i32_0 = arith.constant 0 : i32
    %c0_i32_1 = arith.constant 0 : i32
    return %c0_i32, %c0_i32_0 : i32, i32
  }
  func.func @transform_2(%arg0: i32) -> (i32, i32) {
    %c0_i32 = arith.constant 0 : i32
    %c0_i32_0 = arith.constant 0 : i32
    %c0_i32_1 = arith.constant 0 : i32
    return %c0_i32, %c0_i32_0 : i32, i32
  }
  func.func @transform_3(%arg0: i32) -> (i32, i32, i32) {
    %c0_i32 = arith.constant 0 : i32
    %c0_i32_0 = arith.constant 0 : i32
    %c0_i32_1 = arith.constant 0 : i32
    return %arg0, %c0_i32, %c0_i32_0 : i32, i32, i32
  }
}

module attributes {stable_mosaic.version = 11 : i64} {
  func.func @_conv_s2d_kernel(%arg0: i32, %arg1: memref<1x9x9x64xf32, #tpu.memory_space<vmem>>, %arg2: memref<256x32xf32, #tpu.memory_space<vmem>>, %arg3: memref<1x32xf32, #tpu.memory_space<vmem>>, %arg4: memref<1x1x64xf32, #tpu.memory_space<vmem>>, %arg5: memref<1x1x64xf32, #tpu.memory_space<vmem>>, %arg6: memref<1x64x32xf32, #tpu.memory_space<vmem>>, %arg7: memref<1x2x32xf32, #tpu.memory_space<vmem>>) attributes {dimension_semantics = [#tpu.dimension_semantics<parallel>], iteration_bounds = array<i64: 2>, scalar_prefetch = 0 : i64, scratch_operands = 0 : i64, tpu.core_type = #tpu.core_type<tc>, window_params = [{transform_indices = @transform_0, window_bounds = array<i64: 1, 9, 9, 64>}, {pipeline_mode = #tpu.pipeline_mode<synchronous>, transform_indices = @transform_1, window_bounds = array<i64: 256, 32>}, {pipeline_mode = #tpu.pipeline_mode<synchronous>, transform_indices = @transform_2, window_bounds = array<i64: 1, 32>}, {pipeline_mode = #tpu.pipeline_mode<synchronous>, transform_indices = @transform_3, window_bounds = array<i64: 1, 1, 64>}, {pipeline_mode = #tpu.pipeline_mode<synchronous>, transform_indices = @transform_4, window_bounds = array<i64: 1, 1, 64>}, {transform_indices = @transform_5, window_bounds = array<i64: 1, 64, 32>}, {transform_indices = @transform_6, window_bounds = array<i64: 1, 2, 32>}]} {
    %c0 = arith.constant 0 : index
    %c0_0 = arith.constant 0 : index
    %c0_1 = arith.constant 0 : index
    %c0_2 = arith.constant 0 : index
    %0 = vector.load %arg1[%c0, %c0_0, %c0_1, %c0_2] : memref<1x9x9x64xf32, #tpu.memory_space<vmem>>, vector<1x9x9x64xf32>
    %1 = vector.shape_cast %0 : vector<1x9x9x64xf32> to vector<9x9x64xf32>
    %c0_3 = arith.constant 0 : index
    %c0_4 = arith.constant 0 : index
    %c0_5 = arith.constant 0 : index
    %2 = vector.load %arg4[%c0_3, %c0_4, %c0_5] : memref<1x1x64xf32, #tpu.memory_space<vmem>>, vector<1x1x64xf32>
    %3 = vector.broadcast %2 : vector<1x1x64xf32> to vector<9x9x64xf32>
    %4 = arith.mulf %1, %3 : vector<9x9x64xf32>
    %c0_6 = arith.constant 0 : index
    %c0_7 = arith.constant 0 : index
    %c0_8 = arith.constant 0 : index
    %5 = vector.load %arg5[%c0_6, %c0_7, %c0_8] : memref<1x1x64xf32, #tpu.memory_space<vmem>>, vector<1x1x64xf32>
    %6 = vector.broadcast %5 : vector<1x1x64xf32> to vector<9x9x64xf32>
    %7 = arith.addf %4, %6 : vector<9x9x64xf32>
    %cst = arith.constant 0.000000e+00 : f32
    %8 = vector.broadcast %cst : f32 to vector<9x9x64xf32>
    %9 = arith.cmpf ogt, %7, %8 : vector<9x9x64xf32>
    %cst_9 = arith.constant 2.000000e-01 : f32
    %10 = vector.broadcast %cst_9 : f32 to vector<9x9x64xf32>
    %11 = arith.mulf %10, %7 : vector<9x9x64xf32>
    %12 = arith.select %9, %7, %11 : vector<9x9x64xi1>, vector<9x9x64xf32>
    %cst_10 = arith.constant 0.000000e+00 : f32
    %13 = vector.broadcast %cst_10 : f32 to vector<64x32xf32>
    %14 = vector.extract_strided_slice %12 {offsets = [0, 0, 0], sizes = [8, 8, 64], strides = [1, 1, 1]} : vector<9x9x64xf32> to vector<8x8x64xf32>
    %15 = vector.shape_cast %14 : vector<8x8x64xf32> to vector<64x64xf32>
    %c0_11 = arith.constant 0 : index
    %c0_12 = arith.constant 0 : index
    %16 = vector.load %arg2[%c0_11, %c0_12] : memref<256x32xf32, #tpu.memory_space<vmem>>, vector<64x32xf32>
    %cst_13 = arith.constant dense<0.000000e+00> : vector<64x32xf32>
    %17 = tpu.matmul %15, %16, %cst_13 {dimension_numbers = #tpu.dot_dimension_numbers<[1], [0], [0], [1], [0, 0, 1, 1], [], []>} : vector<64x64xf32>, vector<64x32xf32>, vector<64x32xf32> -> vector<64x32xf32>
    %18 = arith.addf %13, %17 : vector<64x32xf32>
    %19 = vector.extract_strided_slice %12 {offsets = [0, 1, 0], sizes = [8, 8, 64], strides = [1, 1, 1]} : vector<9x9x64xf32> to vector<8x8x64xf32>
    %20 = vector.shape_cast %19 : vector<8x8x64xf32> to vector<64x64xf32>
    %c64 = arith.constant 64 : index
    %c0_14 = arith.constant 0 : index
    %21 = vector.load %arg2[%c64, %c0_14] : memref<256x32xf32, #tpu.memory_space<vmem>>, vector<64x32xf32>
    %cst_15 = arith.constant dense<0.000000e+00> : vector<64x32xf32>
    %22 = tpu.matmul %20, %21, %cst_15 {dimension_numbers = #tpu.dot_dimension_numbers<[1], [0], [0], [1], [0, 0, 1, 1], [], []>} : vector<64x64xf32>, vector<64x32xf32>, vector<64x32xf32> -> vector<64x32xf32>
    %23 = arith.addf %18, %22 : vector<64x32xf32>
    %24 = vector.extract_strided_slice %12 {offsets = [1, 0, 0], sizes = [8, 8, 64], strides = [1, 1, 1]} : vector<9x9x64xf32> to vector<8x8x64xf32>
    %25 = vector.shape_cast %24 : vector<8x8x64xf32> to vector<64x64xf32>
    %c128 = arith.constant 128 : index
    %c0_16 = arith.constant 0 : index
    %26 = vector.load %arg2[%c128, %c0_16] : memref<256x32xf32, #tpu.memory_space<vmem>>, vector<64x32xf32>
    %cst_17 = arith.constant dense<0.000000e+00> : vector<64x32xf32>
    %27 = tpu.matmul %25, %26, %cst_17 {dimension_numbers = #tpu.dot_dimension_numbers<[1], [0], [0], [1], [0, 0, 1, 1], [], []>} : vector<64x64xf32>, vector<64x32xf32>, vector<64x32xf32> -> vector<64x32xf32>
    %28 = arith.addf %23, %27 : vector<64x32xf32>
    %29 = vector.extract_strided_slice %12 {offsets = [1, 1, 0], sizes = [8, 8, 64], strides = [1, 1, 1]} : vector<9x9x64xf32> to vector<8x8x64xf32>
    %30 = vector.shape_cast %29 : vector<8x8x64xf32> to vector<64x64xf32>
    %c192 = arith.constant 192 : index
    %c0_18 = arith.constant 0 : index
    %31 = vector.load %arg2[%c192, %c0_18] : memref<256x32xf32, #tpu.memory_space<vmem>>, vector<64x32xf32>
    %cst_19 = arith.constant dense<0.000000e+00> : vector<64x32xf32>
    %32 = tpu.matmul %30, %31, %cst_19 {dimension_numbers = #tpu.dot_dimension_numbers<[1], [0], [0], [1], [0, 0, 1, 1], [], []>} : vector<64x64xf32>, vector<64x32xf32>, vector<64x32xf32> -> vector<64x32xf32>
    %33 = arith.addf %28, %32 : vector<64x32xf32>
    %c0_20 = arith.constant 0 : index
    %c0_21 = arith.constant 0 : index
    %34 = vector.load %arg3[%c0_20, %c0_21] : memref<1x32xf32, #tpu.memory_space<vmem>>, vector<1x32xf32>
    %35 = vector.broadcast %34 : vector<1x32xf32> to vector<64x32xf32>
    %36 = arith.addf %33, %35 : vector<64x32xf32>
    %c0_22 = arith.constant 0 : index
    %c0_23 = arith.constant 0 : index
    %c0_24 = arith.constant 0 : index
    %37 = vector.load %arg6[%c0_22, %c0_23, %c0_24] : memref<1x64x32xf32, #tpu.memory_space<vmem>>, vector<1x64x32xf32>
    %38 = vector.shape_cast %37 : vector<1x64x32xf32> to vector<64x32xf32>
    %39 = vector.shape_cast %36 : vector<64x32xf32> to vector<1x64x32xf32>
    tpu.vector_store %arg6[%c0_22, %c0_23, %c0_24], %39 {strides = array<i32>} : memref<1x64x32xf32, #tpu.memory_space<vmem>>, vector<1x64x32xf32>,
    %cst_25 = arith.constant dense<0.000000e+00> : vector<32xf32>
    %40 = vector.multi_reduction <add>, %36, %cst_25 [0] : vector<64x32xf32> to vector<32xf32>
    %41 = vector.shape_cast %40 : vector<32xf32> to vector<1x32xf32>
    %42 = arith.mulf %36, %36 : vector<64x32xf32>
    %cst_26 = arith.constant dense<0.000000e+00> : vector<32xf32>
    %43 = vector.multi_reduction <add>, %42, %cst_26 [0] : vector<64x32xf32> to vector<32xf32>
    %44 = vector.shape_cast %43 : vector<32xf32> to vector<1x32xf32>
    %45 = tpu.concatenate %41, %44 in 0 : vector<1x32xf32>, vector<1x32xf32> -> vector<2x32xf32>
    %c0_27 = arith.constant 0 : index
    %c0_28 = arith.constant 0 : index
    %c0_29 = arith.constant 0 : index
    %46 = vector.load %arg7[%c0_27, %c0_28, %c0_29] : memref<1x2x32xf32, #tpu.memory_space<vmem>>, vector<1x2x32xf32>
    %47 = vector.shape_cast %46 : vector<1x2x32xf32> to vector<2x32xf32>
    %48 = vector.shape_cast %45 : vector<2x32xf32> to vector<1x2x32xf32>
    tpu.vector_store %arg7[%c0_27, %c0_28, %c0_29], %48 {strides = array<i32>} : memref<1x2x32xf32, #tpu.memory_space<vmem>>, vector<1x2x32xf32>,
    return
  }
  func.func @transform_0(%arg0: i32) -> (i32, i32, i32, i32) {
    %c0_i32 = arith.constant 0 : i32
    %c0_i32_0 = arith.constant 0 : i32
    %c0_i32_1 = arith.constant 0 : i32
    %c0_i32_2 = arith.constant 0 : i32
    return %arg0, %c0_i32, %c0_i32_0, %c0_i32_1 : i32, i32, i32, i32
  }
  func.func @transform_1(%arg0: i32) -> (i32, i32) {
    %c0_i32 = arith.constant 0 : i32
    %c0_i32_0 = arith.constant 0 : i32
    %c0_i32_1 = arith.constant 0 : i32
    return %c0_i32, %c0_i32_0 : i32, i32
  }
  func.func @transform_2(%arg0: i32) -> (i32, i32) {
    %c0_i32 = arith.constant 0 : i32
    %c0_i32_0 = arith.constant 0 : i32
    %c0_i32_1 = arith.constant 0 : i32
    return %c0_i32, %c0_i32_0 : i32, i32
  }
  func.func @transform_3(%arg0: i32) -> (i32, i32, i32) {
    %c0_i32 = arith.constant 0 : i32
    %c0_i32_0 = arith.constant 0 : i32
    %c0_i32_1 = arith.constant 0 : i32
    %c0_i32_2 = arith.constant 0 : i32
    return %c0_i32, %c0_i32_0, %c0_i32_1 : i32, i32, i32
  }
  func.func @transform_4(%arg0: i32) -> (i32, i32, i32) {
    %c0_i32 = arith.constant 0 : i32
    %c0_i32_0 = arith.constant 0 : i32
    %c0_i32_1 = arith.constant 0 : i32
    %c0_i32_2 = arith.constant 0 : i32
    return %c0_i32, %c0_i32_0, %c0_i32_1 : i32, i32, i32
  }
  func.func @transform_5(%arg0: i32) -> (i32, i32, i32) {
    %c0_i32 = arith.constant 0 : i32
    %c0_i32_0 = arith.constant 0 : i32
    %c0_i32_1 = arith.constant 0 : i32
    return %arg0, %c0_i32, %c0_i32_0 : i32, i32, i32
  }
  func.func @transform_6(%arg0: i32) -> (i32, i32, i32) {
    %c0_i32 = arith.constant 0 : i32
    %c0_i32_0 = arith.constant 0 : i32
    %c0_i32_1 = arith.constant 0 : i32
    return %arg0, %c0_i32, %c0_i32_0 : i32, i32, i32
  }
}

module attributes {stable_mosaic.version = 11 : i64} {
  func.func @_conv_s2d_kernel(%arg0: i32, %arg1: memref<1x5x5x128xf32, #tpu.memory_space<vmem>>, %arg2: memref<512x64xf32, #tpu.memory_space<vmem>>, %arg3: memref<1x64xf32, #tpu.memory_space<vmem>>, %arg4: memref<1x1x128xf32, #tpu.memory_space<vmem>>, %arg5: memref<1x1x128xf32, #tpu.memory_space<vmem>>, %arg6: memref<1x16x64xf32, #tpu.memory_space<vmem>>, %arg7: memref<1x2x64xf32, #tpu.memory_space<vmem>>) attributes {dimension_semantics = [#tpu.dimension_semantics<parallel>], iteration_bounds = array<i64: 2>, scalar_prefetch = 0 : i64, scratch_operands = 0 : i64, tpu.core_type = #tpu.core_type<tc>, window_params = [{transform_indices = @transform_0, window_bounds = array<i64: 1, 5, 5, 128>}, {pipeline_mode = #tpu.pipeline_mode<synchronous>, transform_indices = @transform_1, window_bounds = array<i64: 512, 64>}, {pipeline_mode = #tpu.pipeline_mode<synchronous>, transform_indices = @transform_2, window_bounds = array<i64: 1, 64>}, {pipeline_mode = #tpu.pipeline_mode<synchronous>, transform_indices = @transform_3, window_bounds = array<i64: 1, 1, 128>}, {pipeline_mode = #tpu.pipeline_mode<synchronous>, transform_indices = @transform_4, window_bounds = array<i64: 1, 1, 128>}, {transform_indices = @transform_5, window_bounds = array<i64: 1, 16, 64>}, {transform_indices = @transform_6, window_bounds = array<i64: 1, 2, 64>}]} {
    %c0 = arith.constant 0 : index
    %c0_0 = arith.constant 0 : index
    %c0_1 = arith.constant 0 : index
    %c0_2 = arith.constant 0 : index
    %0 = vector.load %arg1[%c0, %c0_0, %c0_1, %c0_2] : memref<1x5x5x128xf32, #tpu.memory_space<vmem>>, vector<1x5x5x128xf32>
    %1 = vector.shape_cast %0 : vector<1x5x5x128xf32> to vector<5x5x128xf32>
    %c0_3 = arith.constant 0 : index
    %c0_4 = arith.constant 0 : index
    %c0_5 = arith.constant 0 : index
    %2 = vector.load %arg4[%c0_3, %c0_4, %c0_5] : memref<1x1x128xf32, #tpu.memory_space<vmem>>, vector<1x1x128xf32>
    %3 = vector.broadcast %2 : vector<1x1x128xf32> to vector<5x5x128xf32>
    %4 = arith.mulf %1, %3 : vector<5x5x128xf32>
    %c0_6 = arith.constant 0 : index
    %c0_7 = arith.constant 0 : index
    %c0_8 = arith.constant 0 : index
    %5 = vector.load %arg5[%c0_6, %c0_7, %c0_8] : memref<1x1x128xf32, #tpu.memory_space<vmem>>, vector<1x1x128xf32>
    %6 = vector.broadcast %5 : vector<1x1x128xf32> to vector<5x5x128xf32>
    %7 = arith.addf %4, %6 : vector<5x5x128xf32>
    %cst = arith.constant 0.000000e+00 : f32
    %8 = vector.broadcast %cst : f32 to vector<5x5x128xf32>
    %9 = arith.cmpf ogt, %7, %8 : vector<5x5x128xf32>
    %cst_9 = arith.constant 2.000000e-01 : f32
    %10 = vector.broadcast %cst_9 : f32 to vector<5x5x128xf32>
    %11 = arith.mulf %10, %7 : vector<5x5x128xf32>
    %12 = arith.select %9, %7, %11 : vector<5x5x128xi1>, vector<5x5x128xf32>
    %cst_10 = arith.constant 0.000000e+00 : f32
    %13 = vector.broadcast %cst_10 : f32 to vector<16x64xf32>
    %14 = vector.extract_strided_slice %12 {offsets = [0, 0, 0], sizes = [4, 4, 128], strides = [1, 1, 1]} : vector<5x5x128xf32> to vector<4x4x128xf32>
    %15 = vector.shape_cast %14 : vector<4x4x128xf32> to vector<16x128xf32>
    %c0_11 = arith.constant 0 : index
    %c0_12 = arith.constant 0 : index
    %16 = vector.load %arg2[%c0_11, %c0_12] : memref<512x64xf32, #tpu.memory_space<vmem>>, vector<128x64xf32>
    %cst_13 = arith.constant dense<0.000000e+00> : vector<16x64xf32>
    %17 = tpu.matmul %15, %16, %cst_13 {dimension_numbers = #tpu.dot_dimension_numbers<[1], [0], [0], [1], [0, 0, 1, 1], [], []>} : vector<16x128xf32>, vector<128x64xf32>, vector<16x64xf32> -> vector<16x64xf32>
    %18 = arith.addf %13, %17 : vector<16x64xf32>
    %19 = vector.extract_strided_slice %12 {offsets = [0, 1, 0], sizes = [4, 4, 128], strides = [1, 1, 1]} : vector<5x5x128xf32> to vector<4x4x128xf32>
    %20 = vector.shape_cast %19 : vector<4x4x128xf32> to vector<16x128xf32>
    %c128 = arith.constant 128 : index
    %c0_14 = arith.constant 0 : index
    %21 = vector.load %arg2[%c128, %c0_14] : memref<512x64xf32, #tpu.memory_space<vmem>>, vector<128x64xf32>
    %cst_15 = arith.constant dense<0.000000e+00> : vector<16x64xf32>
    %22 = tpu.matmul %20, %21, %cst_15 {dimension_numbers = #tpu.dot_dimension_numbers<[1], [0], [0], [1], [0, 0, 1, 1], [], []>} : vector<16x128xf32>, vector<128x64xf32>, vector<16x64xf32> -> vector<16x64xf32>
    %23 = arith.addf %18, %22 : vector<16x64xf32>
    %24 = vector.extract_strided_slice %12 {offsets = [1, 0, 0], sizes = [4, 4, 128], strides = [1, 1, 1]} : vector<5x5x128xf32> to vector<4x4x128xf32>
    %25 = vector.shape_cast %24 : vector<4x4x128xf32> to vector<16x128xf32>
    %c256 = arith.constant 256 : index
    %c0_16 = arith.constant 0 : index
    %26 = vector.load %arg2[%c256, %c0_16] : memref<512x64xf32, #tpu.memory_space<vmem>>, vector<128x64xf32>
    %cst_17 = arith.constant dense<0.000000e+00> : vector<16x64xf32>
    %27 = tpu.matmul %25, %26, %cst_17 {dimension_numbers = #tpu.dot_dimension_numbers<[1], [0], [0], [1], [0, 0, 1, 1], [], []>} : vector<16x128xf32>, vector<128x64xf32>, vector<16x64xf32> -> vector<16x64xf32>
    %28 = arith.addf %23, %27 : vector<16x64xf32>
    %29 = vector.extract_strided_slice %12 {offsets = [1, 1, 0], sizes = [4, 4, 128], strides = [1, 1, 1]} : vector<5x5x128xf32> to vector<4x4x128xf32>
    %30 = vector.shape_cast %29 : vector<4x4x128xf32> to vector<16x128xf32>
    %c384 = arith.constant 384 : index
    %c0_18 = arith.constant 0 : index
    %31 = vector.load %arg2[%c384, %c0_18] : memref<512x64xf32, #tpu.memory_space<vmem>>, vector<128x64xf32>
    %cst_19 = arith.constant dense<0.000000e+00> : vector<16x64xf32>
    %32 = tpu.matmul %30, %31, %cst_19 {dimension_numbers = #tpu.dot_dimension_numbers<[1], [0], [0], [1], [0, 0, 1, 1], [], []>} : vector<16x128xf32>, vector<128x64xf32>, vector<16x64xf32> -> vector<16x64xf32>
    %33 = arith.addf %28, %32 : vector<16x64xf32>
    %c0_20 = arith.constant 0 : index
    %c0_21 = arith.constant 0 : index
    %34 = vector.load %arg3[%c0_20, %c0_21] : memref<1x64xf32, #tpu.memory_space<vmem>>, vector<1x64xf32>
    %35 = vector.broadcast %34 : vector<1x64xf32> to vector<16x64xf32>
    %36 = arith.addf %33, %35 : vector<16x64xf32>
    %c0_22 = arith.constant 0 : index
    %c0_23 = arith.constant 0 : index
    %c0_24 = arith.constant 0 : index
    %37 = vector.load %arg6[%c0_22, %c0_23, %c0_24] : memref<1x16x64xf32, #tpu.memory_space<vmem>>, vector<1x16x64xf32>
    %38 = vector.shape_cast %37 : vector<1x16x64xf32> to vector<16x64xf32>
    %39 = vector.shape_cast %36 : vector<16x64xf32> to vector<1x16x64xf32>
    tpu.vector_store %arg6[%c0_22, %c0_23, %c0_24], %39 {strides = array<i32>} : memref<1x16x64xf32, #tpu.memory_space<vmem>>, vector<1x16x64xf32>,
    %cst_25 = arith.constant dense<0.000000e+00> : vector<64xf32>
    %40 = vector.multi_reduction <add>, %36, %cst_25 [0] : vector<16x64xf32> to vector<64xf32>
    %41 = vector.shape_cast %40 : vector<64xf32> to vector<1x64xf32>
    %42 = arith.mulf %36, %36 : vector<16x64xf32>
    %cst_26 = arith.constant dense<0.000000e+00> : vector<64xf32>
    %43 = vector.multi_reduction <add>, %42, %cst_26 [0] : vector<16x64xf32> to vector<64xf32>
    %44 = vector.shape_cast %43 : vector<64xf32> to vector<1x64xf32>
    %45 = tpu.concatenate %41, %44 in 0 : vector<1x64xf32>, vector<1x64xf32> -> vector<2x64xf32>
    %c0_27 = arith.constant 0 : index
    %c0_28 = arith.constant 0 : index
    %c0_29 = arith.constant 0 : index
    %46 = vector.load %arg7[%c0_27, %c0_28, %c0_29] : memref<1x2x64xf32, #tpu.memory_space<vmem>>, vector<1x2x64xf32>
    %47 = vector.shape_cast %46 : vector<1x2x64xf32> to vector<2x64xf32>
    %48 = vector.shape_cast %45 : vector<2x64xf32> to vector<1x2x64xf32>
    tpu.vector_store %arg7[%c0_27, %c0_28, %c0_29], %48 {strides = array<i32>} : memref<1x2x64xf32, #tpu.memory_space<vmem>>, vector<1x2x64xf32>,
    return
  }
  func.func @transform_0(%arg0: i32) -> (i32, i32, i32, i32) {
    %c0_i32 = arith.constant 0 : i32
    %c0_i32_0 = arith.constant 0 : i32
    %c0_i32_1 = arith.constant 0 : i32
    %c0_i32_2 = arith.constant 0 : i32
    return %arg0, %c0_i32, %c0_i32_0, %c0_i32_1 : i32, i32, i32, i32
  }
  func.func @transform_1(%arg0: i32) -> (i32, i32) {
    %c0_i32 = arith.constant 0 : i32
    %c0_i32_0 = arith.constant 0 : i32
    %c0_i32_1 = arith.constant 0 : i32
    return %c0_i32, %c0_i32_0 : i32, i32
  }
  func.func @transform_2(%arg0: i32) -> (i32, i32) {
    %c0_i32 = arith.constant 0 : i32
    %c0_i32_0 = arith.constant 0 : i32
    %c0_i32_1 = arith.constant 0 : i32
    return %c0_i32, %c0_i32_0 : i32, i32
  }
  func.func @transform_3(%arg0: i32) -> (i32, i32, i32) {
    %c0_i32 = arith.constant 0 : i32
    %c0_i32_0 = arith.constant 0 : i32
    %c0_i32_1 = arith.constant 0 : i32
    %c0_i32_2 = arith.constant 0 : i32
    return %c0_i32, %c0_i32_0, %c0_i32_1 : i32, i32, i32
  }
  func.func @transform_4(%arg0: i32) -> (i32, i32, i32) {
    %c0_i32 = arith.constant 0 : i32
    %c0_i32_0 = arith.constant 0 : i32
    %c0_i32_1 = arith.constant 0 : i32
    %c0_i32_2 = arith.constant 0 : i32
    return %c0_i32, %c0_i32_0, %c0_i32_1 : i32, i32, i32
  }
  func.func @transform_5(%arg0: i32) -> (i32, i32, i32) {
    %c0_i32 = arith.constant 0 : i32
    %c0_i32_0 = arith.constant 0 : i32
    %c0_i32_1 = arith.constant 0 : i32
    return %arg0, %c0_i32, %c0_i32_0 : i32, i32, i32
  }
  func.func @transform_6(%arg0: i32) -> (i32, i32, i32) {
    %c0_i32 = arith.constant 0 : i32
    %c0_i32_0 = arith.constant 0 : i32
    %c0_i32_1 = arith.constant 0 : i32
    return %arg0, %c0_i32, %c0_i32_0 : i32, i32, i32
  }
}

</mosaic_0001>

<llo_original>
// kernel: discriminator_forward.3
$region0: #{discriminator_forward.3}
  #allocation0 [shape = 'u32[]', space=smem, size = 0x4, offset = 0x4, fixed_abs, tag = 'smem constant byte address 0x4 - core index']
  #allocation1 [shape = 'u32[144,128]{1,0:T(1,128)}', space=vmem, size = 0x12000, scoped, tag = 'internal scratch']
  %s0 = inlined_call_operand.vmem [shape: f32[2,17,17,44], index: 0, kind: input, shape index: {}]
  %s1 = inlined_call_operand.vmem [shape: f32[176,16], index: 1, kind: input, shape index: {}]
  %s2 = inlined_call_operand.vmem [shape: f32[1,16], index: 2, kind: input, shape index: {}]
  %s3 = inlined_call_operand.vmem [shape: f32[2,256,16], index: 3, kind: output, shape index: {}]
  %s4 = sld [smem:[#allocation0]]
  $region45: #{discriminator_forward.3} parent=0
    _
  %s6 = ssub.s32 1, %s4
  %s7 = scalar_select 0, %s6, %s4
  loop: start=0, step=1, limit=4
  $region2: #{discriminator_forward.3} parent=0 // loop_pre_header
    _
  $region3: #{discriminator_forward.3} parent=0 // loop_header
    %s9 = sphi 0, %s13
    %p10 = scmp.ge.s32.totalorder %s9, 4
    %s19 = sphi 0, %s21
    %s22 = sphi 0, %s19
    %s23 = sphi 0, %s22
    %s39 = sphi 0, %s23
    %s43 = sphi 0, %s43
    %s45 = sphi 0, %s43
    %s46 = sphi 0, %s45
    %s60 = sphi 0, %s46
    %s64 = sphi 0, %s64
    %s66 = sphi 0, %s64
    %s67 = sphi 0, %s66
    %s81 = sphi 0, %s67
    %s87 = sphi 0, %s89
    %s90 = sphi 0, %s87
    %s91 = sphi 0, %s90
    %s107 = sphi 0, %s91
  $region4: #{discriminator_forward.3} parent=0 // loop_header_branch
    %12 = sbr.rel (%p10) target = $region8
  $region5: #{discriminator_forward.3} parent=0 // loop_body
    %s14 = ssub.s32 %s9, 1
    %s15 = ssub.s32 %s9, 2
    %s16 = sadd.s32 %s9, 1
    %s17 = ssub.s32 %s9, %s16
    %p18 = scmp.eq.s32.totalorder %s17, 0
    %s20 = sadd.s32 %s19, 1
    %s21 = scalar_select %p18, %s19, %s20
    %p24 = pneg %p18
    %p25 = scmp.eq.s32.totalorder %s9, 1
    %p26 = por %p24, %p25
    %p27 = scmp.ne.s32.totalorder %s19, %s22
    %p28 = scmp.eq.s32.totalorder %s9, 0
    %p29 = por %p27, %p28
    %p30 = scmp.ne.s32.totalorder %s19, %s22
    %p31 = scmp.eq.s32.totalorder %s14, 1
    %p32 = por %p30, %p31
    %p33 = scmp.ne.s32.totalorder %s22, %s23
    %p34 = scmp.eq.s32.totalorder %s14, 0
    %p35 = por %p33, %p34
    %p36 = scmp.ne.s32.totalorder %s22, %s23
    %p37 = scmp.eq.s32.totalorder %s15, 1
    %p38 = por %p36, %p37
    %p40 = scmp.ne.s32.totalorder %s23, %s39
    %p41 = scmp.eq.s32.totalorder %s15, 0
    %p42 = por %p40, %p41
    %s44 = sadd.s32 %s43, 1
    %p47 = scmp.eq.s32.totalorder %s9, 1
    %p48 = scmp.ne.s32.totalorder %s43, %s45
    %p49 = scmp.eq.s32.totalorder %s9, 0
    %p50 = por %p48, %p49
    %p51 = scmp.ne.s32.totalorder %s43, %s45
    %p52 = scmp.eq.s32.totalorder %s14, 1
    %p53 = por %p51, %p52
    %p54 = scmp.ne.s32.totalorder %s45, %s46
    %p55 = scmp.eq.s32.totalorder %s14, 0
    %p56 = por %p54, %p55
    %p57 = scmp.ne.s32.totalorder %s45, %s46
    %p58 = scmp.eq.s32.totalorder %s15, 1
    %p59 = por %p57, %p58
    %p61 = scmp.ne.s32.totalorder %s46, %s60
    %p62 = scmp.eq.s32.totalorder %s15, 0
    %p63 = por %p61, %p62
    %s65 = sadd.s32 %s64, 1
    %p68 = scmp.eq.s32.totalorder %s9, 1
    %p69 = scmp.ne.s32.totalorder %s64, %s66
    %p70 = scmp.eq.s32.totalorder %s9, 0
    %p71 = por %p69, %p70
    %p72 = scmp.ne.s32.totalorder %s64, %s66
    %p73 = scmp.eq.s32.totalorder %s14, 1
    %p74 = por %p72, %p73
    %p75 = scmp.ne.s32.totalorder %s66, %s67
    %p76 = scmp.eq.s32.totalorder %s14, 0
    %p77 = por %p75, %p76
    %p78 = scmp.ne.s32.totalorder %s66, %s67
    %p79 = scmp.eq.s32.totalorder %s15, 1
    %p80 = por %p78, %p79
    %p82 = scmp.ne.s32.totalorder %s67, %s81
    %p83 = scmp.eq.s32.totalorder %s15, 0
    %p84 = por %p82, %p83
    %s85 = ssub.s32 %s9, %s16
    %p86 = scmp.eq.s32.totalorder %s85, 0
    %s88 = sadd.s32 %s87, 1
    %s89 = scalar_select %p86, %s87, %s88
    %p92 = pneg %p86
    %p93 = scmp.eq.s32.totalorder %s9, 1
    %p94 = por %p92, %p93
    %p95 = scmp.ne.s32.totalorder %s87, %s90
    %p96 = scmp.eq.s32.totalorder %s9, 0
    %p97 = por %p95, %p96
    %p98 = scmp.ne.s32.totalorder %s87, %s90
    %p99 = scmp.eq.s32.totalorder %s14, 1
    %p100 = por %p98, %p99
    %p101 = scmp.ne.s32.totalorder %s90, %s91
    %p102 = scmp.eq.s32.totalorder %s14, 0
    %p103 = por %p101, %p102
    %p104 = scmp.ne.s32.totalorder %s90, %s91
    %p105 = scmp.eq.s32.totalorder %s15, 1
    %p106 = por %p104, %p105
    %p108 = scmp.ne.s32.totalorder %s91, %s107
    %p109 = scmp.eq.s32.totalorder %s15, 0
    %p110 = por %p108, %p109
    %p111 = scmp.le.s32.totalorder 1, %s9
    %p112 = scmp.lt.s32.totalorder %s9, 3
    %p113 = pnand %p111, %p112
    %p114 = pneg %p113
    // Predicated region
    $region9: #{discriminator_forward.3} parent=5 // pred_check
      _
    $region10: #{discriminator_forward.3} parent=5 // pred_check_branch
      %116 = sbr.rel (%p113) target = $region12
    $region11: #{discriminator_forward.3} parent=5 // pred_region
      %s117 = ssub.s32 %s9, 1
      // Predicated region
      $region13: #{discriminator_forward.3} parent=11 // pred_check
        %p118 = pneg %p56
      $region14: #{discriminator_forward.3} parent=11 // pred_check_branch
        %120 = sbr.rel (%p118) target = $region16
      $region15: #{discriminator_forward.3} parent=11 // pred_region
        _
      $region16: #{discriminator_forward.3} parent=11 // pred_fallthru
        _
      // Predicated region
      $region17: #{discriminator_forward.3} parent=11 // pred_check
        %p121 = pneg %p77
      $region18: #{discriminator_forward.3} parent=11 // pred_check_branch
        %123 = sbr.rel (%p121) target = $region20
      $region19: #{discriminator_forward.3} parent=11 // pred_region
        _
      $region20: #{discriminator_forward.3} parent=11 // pred_fallthru
        _
    $region12: #{discriminator_forward.3} parent=5 // pred_fallthru
      _
    %p124 = scmp.lt.s32.totalorder %s9, 2
    // Predicated region
    $region21: #{discriminator_forward.3} parent=5 // pred_check
      %p125 = pneg %p124
    $region22: #{discriminator_forward.3} parent=5 // pred_check_branch
      %127 = sbr.rel (%p125) target = $region24
    $region23: #{discriminator_forward.3} parent=5 // pred_region
      // Predicated region
      $region25: #{discriminator_forward.3} parent=23 // pred_check
        %p128 = pneg %p29
      $region26: #{discriminator_forward.3} parent=23 // pred_check_branch
        %130 = sbr.rel (%p128) target = $region28
      $region27: #{discriminator_forward.3} parent=23 // pred_region
        %p131 = scmp.lt.s32.totalorder %s9, 1
        %s132 = scalar_select %p131, %s9, 1
        %s133 = smul.addr %s132, 51
        %s134 = smul.addr %s133, 8
        %s135 = scalar_lea.vmem %s0, %s134
      $region28: #{discriminator_forward.3} parent=23 // pred_fallthru
        _
    $region24: #{discriminator_forward.3} parent=5 // pred_fallthru
      _
    %p136 = scmp.le.s32.totalorder 1, %s9
    %p137 = scmp.lt.s32.totalorder %s9, 3
    %p138 = pnand %p136, %p137
    %p139 = pneg %p138
    // Predicated region
    $region29: #{discriminator_forward.3} parent=5 // pred_check
      _
    $region30: #{discriminator_forward.3} parent=5 // pred_check_branch
      %141 = sbr.rel (%p138) target = $region32
    $region31: #{discriminator_forward.3} parent=5 // pred_region
      %s142 = ssub.s32 %s9, 1
      %p143 = scmp.lt.s32.totalorder %s14, 1
      %s144 = scalar_select %p143, %s14, 1
      %s145 = smul.addr %s144, 51
      %s146 = smul.addr %s145, 8
      %s147 = scalar_lea.vmem %s0, %s146
      %p148 = pneg %p35
      %p149 = pneg %p32
      %p150 = pneg %p56
      %p151 = pneg %p53
      %p152 = pneg %p77
      %p153 = pneg %p74
      %p154 = pneg %p103
      %p155 = pneg %p100
      %p156 = scmp.lt.s32.totalorder %s14, 1
      %s157 = scalar_select %p156, %s14, 1
      %s158 = smul.addr %s157, 32
      %s159 = smul.addr %s158, 8
      %s160 = scalar_lea.vmem %s3, %s159
      %p161 = scmp.lt.s32.totalorder %s14, 1
      %s162 = scalar_select %p161, %s14, 1
      %s163 = smul.addr %s162, 51
      %s164 = smul.addr %s163, 8
      %s165 = scalar_lea.vmem %s0, %s164
      %p166 = scmp.lt.s32.totalorder %s14, 1
      %s167 = scalar_select %p166, %s14, 1
      %s168 = smul.addr %s167, 32
      %s169 = smul.addr %s168, 8
      %s170 = scalar_lea.vmem %s3, %s169
      %v171 = vld [vmem:[%s165] sm:$0xff]
      %v172 = vld [vmem:[%s165 + $0x8] sm:$0xff]
      %v173 = vld [vmem:[%s165 + $0x10] sm:$0x1]
      %v174 = vld [vmem:[%s165 + $0x18] sm:$0xff]
      %v175 = vld [vmem:[%s165 + $0x20] sm:$0xff]
      %v176 = vld [vmem:[%s165 + $0x28] sm:$0x1]
      %v177 = vld [vmem:[%s165 + $0x30] sm:$0xff]
      %v178 = vld [vmem:[%s165 + $0x38] sm:$0xff]
      %v179 = vld [vmem:[%s165 + $0x40] sm:$0x1]
      %v180 = vld [vmem:[%s165 + $0x48] sm:$0xff]
      %v181 = vld [vmem:[%s165 + $0x50] sm:$0xff]
      %v182 = vld [vmem:[%s165 + $0x58] sm:$0x1]
      %v183 = vld [vmem:[%s165 + $0x60] sm:$0xff]
      %v184 = vld [vmem:[%s165 + $0x68] sm:$0xff]
      %v185 = vld [vmem:[%s165 + $0x70] sm:$0x1]
      %v186 = vld [vmem:[%s165 + $0x78] sm:$0xff]
      %v187 = vld [vmem:[%s165 + $0x80] sm:$0xff]
      %v188 = vld [vmem:[%s165 + $0x88] sm:$0x1]
      %v189 = vld [vmem:[%s165 + $0x90] sm:$0xff]
      %v190 = vld [vmem:[%s165 + $0x98] sm:$0xff]
      %v191 = vld [vmem:[%s165 + $0xa0] sm:$0x1]
      %v192 = vld [vmem:[%s165 + $0xa8] sm:$0xff]
      %v193 = vld [vmem:[%s165 + $0xb0] sm:$0xff]
      %v194 = vld [vmem:[%s165 + $0xb8] sm:$0x1]
      %v195 = vld [vmem:[%s165 + $0xc0] sm:$0xff]
      %v196 = vld [vmem:[%s165 + $0xc8] sm:$0xff]
      %v197 = vld [vmem:[%s165 + $0xd0] sm:$0x1]
      %v198 = vld [vmem:[%s165 + $0xd8] sm:$0xff]
      %v199 = vld [vmem:[%s165 + $0xe0] sm:$0xff]
      %v200 = vld [vmem:[%s165 + $0xe8] sm:$0x1]
      %v201 = vld [vmem:[%s165 + $0xf0] sm:$0xff]
      %v202 = vld [vmem:[%s165 + $0xf8] sm:$0xff]
      %v203 = vld [vmem:[%s165 + $0x100] sm:$0x1]
      %v204 = vld [vmem:[%s165 + $0x108] sm:$0xff]
      %v205 = vld [vmem:[%s165 + $0x110] sm:$0xff]
      %v206 = vld [vmem:[%s165 + $0x118] sm:$0x1]
      %v207 = vld [vmem:[%s165 + $0x120] sm:$0xff]
      %v208 = vld [vmem:[%s165 + $0x128] sm:$0xff]
      %v209 = vld [vmem:[%s165 + $0x130] sm:$0x1]
      %v210 = vld [vmem:[%s165 + $0x138] sm:$0xff]
      %v211 = vld [vmem:[%s165 + $0x140] sm:$0xff]
      %v212 = vld [vmem:[%s165 + $0x148] sm:$0x1]
      %v213 = vld [vmem:[%s165 + $0x150] sm:$0xff]
      %v214 = vld [vmem:[%s165 + $0x158] sm:$0xff]
      %v215 = vld [vmem:[%s165 + $0x160] sm:$0x1]
      %v216 = vld [vmem:[%s165 + $0x168] sm:$0xff]
      %v217 = vld [vmem:[%s165 + $0x170] sm:$0xff]
      %v218 = vld [vmem:[%s165 + $0x178] sm:$0x1]
      %v219 = vld [vmem:[%s165 + $0x180] sm:$0xff]
      %v220 = vld [vmem:[%s165 + $0x188] sm:$0xff]
      %v221 = vld [vmem:[%s165 + $0x190] sm:$0x1]
      %v222 = vld [vmem:[%s1] sm:$0xff]
      %v223 = vld [vmem:[%s1 + $0x8] sm:$0xff]
      %v224 = vld [vmem:[%s1 + $0x10] sm:$0xff]
      %v225 = vld [vmem:[%s1 + $0x18] sm:$0xff]
      %v226 = vld [vmem:[%s1 + $0x20] sm:$0xff]
      %v227 = vld [vmem:[%s1 + $0x28] sm:$0xf]
      %vm276 = vcmask 1046528
      %v277 = vrot.slane %v171, 1
      %v278 = vrot.slane %v172, 1
      %v279 = vsel %vm276, %v277, %v278
      %v280 = vrot.slane %v173, 1
      %v281 = vsel %vm276, %v278, %v280
      %v282 = vrot.slane %v174, 1
      %v283 = vrot.slane %v175, 1
      %v284 = vsel %vm276, %v282, %v283
      %v285 = vrot.slane %v176, 1
      %v286 = vsel %vm276, %v283, %v285
      %v287 = vrot.slane %v177, 1
      %v288 = vrot.slane %v178, 1
      %v289 = vsel %vm276, %v287, %v288
      %v290 = vrot.slane %v179, 1
      %v291 = vsel %vm276, %v288, %v290
      %v292 = vrot.slane %v180, 1
      %v293 = vrot.slane %v181, 1
      %v294 = vsel %vm276, %v292, %v293
      %v295 = vrot.slane %v182, 1
      %v296 = vsel %vm276, %v293, %v295
      %v297 = vrot.slane %v183, 1
      %v298 = vrot.slane %v184, 1
      %v299 = vsel %vm276, %v297, %v298
      %v300 = vrot.slane %v185, 1
      %v301 = vsel %vm276, %v298, %v300
      %v302 = vrot.slane %v186, 1
      %v303 = vrot.slane %v187, 1
      %v304 = vsel %vm276, %v302, %v303
      %v305 = vrot.slane %v188, 1
      %v306 = vsel %vm276, %v303, %v305
      %v307 = vrot.slane %v189, 1
      %v308 = vrot.slane %v190, 1
      %v309 = vsel %vm276, %v307, %v308
      %v310 = vrot.slane %v191, 1
      %v311 = vsel %vm276, %v308, %v310
      %v312 = vrot.slane %v192, 1
      %v313 = vrot.slane %v193, 1
      %v314 = vsel %vm276, %v312, %v313
      %v315 = vrot.slane %v194, 1
      %v316 = vsel %vm276, %v313, %v315
      %v317 = vrot.slane %v195, 1
      %v318 = vrot.slane %v196, 1
      %v319 = vsel %vm276, %v317, %v318
      %v320 = vrot.slane %v197, 1
      %v321 = vsel %vm276, %v318, %v320
      %v322 = vrot.slane %v198, 1
      %v323 = vrot.slane %v199, 1
      %v324 = vsel %vm276, %v322, %v323
      %v325 = vrot.slane %v200, 1
      %v326 = vsel %vm276, %v323, %v325
      %v327 = vrot.slane %v201, 1
      %v328 = vrot.slane %v202, 1
      %v329 = vsel %vm276, %v327, %v328
      %v330 = vrot.slane %v203, 1
      %v331 = vsel %vm276, %v328, %v330
      %v332 = vrot.slane %v204, 1
      %v333 = vrot.slane %v205, 1
      %v334 = vsel %vm276, %v332, %v333
      %v335 = vrot.slane %v206, 1
      %v336 = vsel %vm276, %v333, %v335
      %v337 = vrot.slane %v207, 1
      %v338 = vrot.slane %v208, 1
      %v339 = vsel %vm276, %v337, %v338
      %v340 = vrot.slane %v209, 1
      %v341 = vsel %vm276, %v338, %v340
      %v342 = vrot.slane %v210, 1
      %v343 = vrot.slane %v211, 1
      %v344 = vsel %vm276, %v342, %v343
      %v345 = vrot.slane %v212, 1
      %v346 = vsel %vm276, %v343, %v345
      %v347 = vrot.slane %v213, 1
      %v348 = vrot.slane %v214, 1
      %v349 = vsel %vm276, %v347, %v348
      %v350 = vrot.slane %v215, 1
      %v351 = vsel %vm276, %v348, %v350
      %v352 = vrot.slane %v216, 1
      %v353 = vrot.slane %v217, 1
      %v354 = vsel %vm276, %v352, %v353
      %v355 = vrot.slane %v218, 1
      %v356 = vsel %vm276, %v353, %v355
      %v357 = vld [vmem:[%s1 + $0x2c] sm:$0xff]
      %v358 = vld [vmem:[%s1 + $0x34] sm:$0xff]
      %v359 = vld [vmem:[%s1 + $0x3c] sm:$0xff]
      %v360 = vld [vmem:[%s1 + $0x44] sm:$0xff]
      %v361 = vld [vmem:[%s1 + $0x4c] sm:$0xff]
      %v362 = vld [vmem:[%s1 + $0x54] sm:$0xf]
      %vm363 = vcmask 359424
      %v364 = vsel %vm363, %v279, 0
      %v366 = vsel %vm363, %v281, 0
      %v368 = vsel %vm363, %v284, 0
      %v370 = vsel %vm363, %v286, 0
      %v372 = vsel %vm363, %v289, 0
      %v374 = vsel %vm363, %v291, 0
      %v376 = vsel %vm363, %v294, 0
      %v378 = vsel %vm363, %v296, 0
      %v380 = vsel %vm363, %v299, 0
      %v382 = vsel %vm363, %v301, 0
      %v384 = vsel %vm363, %v304, 0
      %v386 = vsel %vm363, %v306, 0
      %v388 = vsel %vm363, %v309, 0
      %v390 = vsel %vm363, %v311, 0
      %v392 = vsel %vm363, %v314, 0
      %v394 = vsel %vm363, %v316, 0
      %v396 = vsel %vm363, %v319, 0
      %v398 = vsel %vm363, %v321, 0
      %v400 = vsel %vm363, %v324, 0
      %v402 = vsel %vm363, %v326, 0
      %v404 = vsel %vm363, %v329, 0
      %v406 = vsel %vm363, %v331, 0
      %v408 = vsel %vm363, %v334, 0
      %v410 = vsel %vm363, %v336, 0
      %v412 = vsel %vm363, %v339, 0
      %v414 = vsel %vm363, %v341, 0
      %v416 = vsel %vm363, %v344, 0
      %v418 = vsel %vm363, %v346, 0
      %v420 = vsel %vm363, %v349, 0
      %v422 = vsel %vm363, %v351, 0
      %v424 = vsel %vm363, %v354, 0
      %v426 = vsel %vm363, %v356, 0
      %vm428 = vcmask 1043456
      %v430 = vsel %vm428, %v362, 0
      %432 = vmatprep.subr.mxu0 0.0
      %433 = vmatpush1.msra.mxu0 0.0
      %434 = vmatprep.subr.mxu0 0.0
      %435 = vmatpush1.msra.mxu0 0.0
      %436 = vmatprep.subr.mxu0 0.0
      %437 = vmatpush1.msra.mxu0 0.0
      %438 = vmatprep.subr.mxu0 0.0
      %439 = vmatpush1.msra.mxu0 0.0
      %440 = vmatprep.subr.mxu0 0.0
      %441 = vmatpush1.msra.mxu0 0.0
      %442 = vmatprep.subr.mxu0 0.0
      %443 = vmatpush1.msra.mxu0 0.0
      %444 = vmatprep.subr.mxu0 0.0
      %445 = vmatpush1.msra.mxu0 0.0
      %446 = vmatprep.subr.mxu0 0.0
      %447 = vmatpush1.msra.mxu0 0.0
      %448 = vmatprep.subr.mxu0 0.0
      %449 = vmatpush1.msra.mxu0 0.0
      %450 = vmatprep.subr.mxu0 0.0
      %451 = vmatpush1.msra.mxu0 0.0
      %452 = vmatprep.subr.mxu0 0.0
      %453 = vmatpush1.msra.mxu0 %v430
      %454 = vmatprep.subr.mxu0 0.0
      %455 = vmatpush1.msra.mxu0 %v361
      %456 = vmatprep.subr.mxu0 0.0
      %457 = vmatpush1.msra.mxu0 %v360
      %458 = vmatprep.subr.mxu0 0.0
      %459 = vmatpush1.msra.mxu0 %v359
      %460 = vmatprep.subr.mxu0 0.0
      %461 = vmatpush1.msra.mxu0 %v358
      %462 = vmatprep.subr.mxu0 0.0
      %463 = vmatpush1.msra.mxu0 %v357
      %464 = vmatprep.subr.mxu0 0.0
      %465 = vmatpush2.msra.mxu0 0.0
      %466 = vmatprep.subr.mxu0 0.0
      %467 = vmatpush2.msra.mxu0 0.0
      %468 = vmatprep.subr.mxu0 0.0
      %469 = vmatpush2.msra.mxu0 0.0
      %470 = vmatprep.subr.mxu0 0.0
      %471 = vmatpush2.msra.mxu0 0.0
      %472 = vmatprep.subr.mxu0 0.0
      %473 = vmatpush2.msra.mxu0 0.0
      %474 = vmatprep.subr.mxu0 0.0
      %475 = vmatpush2.msra.mxu0 0.0
      %476 = vmatprep.subr.mxu0 0.0
      %477 = vmatpush2.msra.mxu0 0.0
      %478 = vmatprep.subr.mxu0 0.0
      %479 = vmatpush2.msra.mxu0 0.0
      %480 = vmatprep.subr.mxu0 0.0
      %481 = vmatpush2.msra.mxu0 0.0
      %482 = vmatprep.subr.mxu0 0.0
      %483 = vmatpush2.msra.mxu0 0.0
      %484 = vmatprep.subr.mxu0 0.0
      %485 = vmatpush2.msra.mxu0 0.0
      %486 = vmatprep.subr.mxu0 0.0
      %487 = vmatpush2.msra.mxu0 0.0
      %488 = vmatprep.subr.mxu0 0.0
      %489 = vmatpush2.msra.mxu0 0.0
      %490 = vmatprep.subr.mxu0 0.0
      %491 = vmatpush2.msra.mxu0 0.0
      %492 = vmatprep.subr.mxu0 0.0
      %493 = vmatpush2.msra.mxu0 0.0
      %494 = vmatprep.subr.mxu0 0.0
      %495 = vmatpush2.msra.mxu0 0.0
      %496 = vmatprep.mubr.f32.mxu0 0.0
      %497 = vmatmul.mubr.f32.gmra.mxu0 %v364
      %v498 = vpop.f32.mrf.mxu0
      %v499 = vadd.f32 0.0, %v498
      %v500 = vpop.f32.mrf.mxu0
      %501 = vmatprep.mubr.f32.mxu0 0.0
      %502 = vmatmul.mubr.f32.gmra.mxu0 %v366
      %v503 = vpop.f32.mrf.mxu0
      %v504 = vadd.f32 0.0, %v503
      %v505 = vpop.f32.mrf.mxu0
      %506 = vmatprep.mubr.f32.mxu0 0.0
      %507 = vmatmul.mubr.f32.gmra.mxu0 %v368
      %v508 = vpop.f32.mrf.mxu0
      %v509 = vadd.f32 0.0, %v508
      %v510 = vpop.f32.mrf.mxu0
      %511 = vmatprep.mubr.f32.mxu0 0.0
      %512 = vmatmul.mubr.f32.gmra.mxu0 %v370
      %v513 = vpop.f32.mrf.mxu0
      %v514 = vadd.f32 0.0, %v513
      %v515 = vpop.f32.mrf.mxu0
      %516 = vmatprep.mubr.f32.mxu0 0.0
      %517 = vmatmul.mubr.f32.gmra.mxu0 %v372
      %v518 = vpop.f32.mrf.mxu0
      %v519 = vadd.f32 0.0, %v518
      %v520 = vpop.f32.mrf.mxu0
      %521 = vmatprep.mubr.f32.mxu0 0.0
      %522 = vmatmul.mubr.f32.gmra.mxu0 %v374
      %v523 = vpop.f32.mrf.mxu0
      %v524 = vadd.f32 0.0, %v523
      %v525 = vpop.f32.mrf.mxu0
      %526 = vmatprep.mubr.f32.mxu0 0.0
      %527 = vmatmul.mubr.f32.gmra.mxu0 %v376
      %v528 = vpop.f32.mrf.mxu0
      %v529 = vadd.f32 0.0, %v528
      %v530 = vpop.f32.mrf.mxu0
      %531 = vmatprep.mubr.f32.mxu0 0.0
      %532 = vmatmul.mubr.f32.gmra.mxu0 %v378
      %v533 = vpop.f32.mrf.mxu0
      %v534 = vadd.f32 0.0, %v533
      %v535 = vpop.f32.mrf.mxu0
      %536 = vmatprep.mubr.f32.mxu0 0.0
      %537 = vmatmul.mubr.f32.gmra.mxu0 %v380
      %v538 = vpop.f32.mrf.mxu0
      %v539 = vadd.f32 0.0, %v538
      %v540 = vpop.f32.mrf.mxu0
      %541 = vmatprep.mubr.f32.mxu0 0.0
      %542 = vmatmul.mubr.f32.gmra.mxu0 %v382
      %v543 = vpop.f32.mrf.mxu0
      %v544 = vadd.f32 0.0, %v543
      %v545 = vpop.f32.mrf.mxu0
      %546 = vmatprep.mubr.f32.mxu0 0.0
      %547 = vmatmul.mubr.f32.gmra.mxu0 %v384
      %v548 = vpop.f32.mrf.mxu0
      %v549 = vadd.f32 0.0, %v548
      %v550 = vpop.f32.mrf.mxu0
      %551 = vmatprep.mubr.f32.mxu0 0.0
      %552 = vmatmul.mubr.f32.gmra.mxu0 %v386
      %v553 = vpop.f32.mrf.mxu0
      %v554 = vadd.f32 0.0, %v553
      %v555 = vpop.f32.mrf.mxu0
      %556 = vmatprep.mubr.f32.mxu0 0.0
      %557 = vmatmul.mubr.f32.gmra.mxu0 %v388
      %v558 = vpop.f32.mrf.mxu0
      %v559 = vadd.f32 0.0, %v558
      %v560 = vpop.f32.mrf.mxu0
      %561 = vmatprep.mubr.f32.mxu0 0.0
      %562 = vmatmul.mubr.f32.gmra.mxu0 %v390
      %v563 = vpop.f32.mrf.mxu0
      %v564 = vadd.f32 0.0, %v563
      %v565 = vpop.f32.mrf.mxu0
      %566 = vmatprep.mubr.f32.mxu0 0.0
      %567 = vmatmul.mubr.f32.gmra.mxu0 %v392
      %v568 = vpop.f32.mrf.mxu0
      %v569 = vadd.f32 0.0, %v568
      %v570 = vpop.f32.mrf.mxu0
      %571 = vmatprep.mubr.f32.mxu0 0.0
      %572 = vmatmul.mubr.f32.gmra.mxu0 %v394
      %v573 = vpop.f32.mrf.mxu0
      %v574 = vadd.f32 0.0, %v573
      %v575 = vpop.f32.mrf.mxu0
      %576 = vmatprep.mubr.f32.mxu0 0.0
      %577 = vmatmul.mubr.f32.gmra.mxu0 %v396
      %v578 = vpop.f32.mrf.mxu0
      %v579 = vadd.f32 0.0, %v578
      %v580 = vpop.f32.mrf.mxu0
      %581 = vmatprep.mubr.f32.mxu0 0.0
      %582 = vmatmul.mubr.f32.gmra.mxu0 %v398
      %v583 = vpop.f32.mrf.mxu0
      %v584 = vadd.f32 0.0, %v583
      %v585 = vpop.f32.mrf.mxu0
      %586 = vmatprep.mubr.f32.mxu0 0.0
      %587 = vmatmul.mubr.f32.gmra.mxu0 %v400
      %v588 = vpop.f32.mrf.mxu0
      %v589 = vadd.f32 0.0, %v588
      %v590 = vpop.f32.mrf.mxu0
      %591 = vmatprep.mubr.f32.mxu0 0.0
      %592 = vmatmul.mubr.f32.gmra.mxu0 %v402
      %v593 = vpop.f32.mrf.mxu0
      %v594 = vadd.f32 0.0, %v593
      %v595 = vpop.f32.mrf.mxu0
      %596 = vmatprep.mubr.f32.mxu0 0.0
      %597 = vmatmul.mubr.f32.gmra.mxu0 %v404
      %v598 = vpop.f32.mrf.mxu0
      %v599 = vadd.f32 0.0, %v598
      %v600 = vpop.f32.mrf.mxu0
      %601 = vmatprep.mubr.f32.mxu0 0.0
      %602 = vmatmul.mubr.f32.gmra.mxu0 %v406
      %v603 = vpop.f32.mrf.mxu0
      %v604 = vadd.f32 0.0, %v603
      %v605 = vpop.f32.mrf.mxu0
      %606 = vmatprep.mubr.f32.mxu0 0.0
      %607 = vmatmul.mubr.f32.gmra.mxu0 %v408
      %v608 = vpop.f32.mrf.mxu0
      %v609 = vadd.f32 0.0, %v608
      %v610 = vpop.f32.mrf.mxu0
      %611 = vmatprep.mubr.f32.mxu0 0.0
      %612 = vmatmul.mubr.f32.gmra.mxu0 %v410
      %v613 = vpop.f32.mrf.mxu0
      %v614 = vadd.f32 0.0, %v613
      %v615 = vpop.f32.mrf.mxu0
      %616 = vmatprep.mubr.f32.mxu0 0.0
      %617 = vmatmul.mubr.f32.gmra.mxu0 %v412
      %v618 = vpop.f32.mrf.mxu0
      %v619 = vadd.f32 0.0, %v618
      %v620 = vpop.f32.mrf.mxu0
      %621 = vmatprep.mubr.f32.mxu0 0.0
      %622 = vmatmul.mubr.f32.gmra.mxu0 %v414
      %v623 = vpop.f32.mrf.mxu0
      %v624 = vadd.f32 0.0, %v623
      %v625 = vpop.f32.mrf.mxu0
      %626 = vmatprep.mubr.f32.mxu0 0.0
      %627 = vmatmul.mubr.f32.gmra.mxu0 %v416
      %v628 = vpop.f32.mrf.mxu0
      %v629 = vadd.f32 0.0, %v628
      %v630 = vpop.f32.mrf.mxu0
      %631 = vmatprep.mubr.f32.mxu0 0.0
      %632 = vmatmul.mubr.f32.gmra.mxu0 %v418
      %v633 = vpop.f32.mrf.mxu0
      %v634 = vadd.f32 0.0, %v633
      %v635 = vpop.f32.mrf.mxu0
      %636 = vmatprep.mubr.f32.mxu0 0.0
      %637 = vmatmul.mubr.f32.gmra.mxu0 %v420
      %v638 = vpop.f32.mrf.mxu0
      %v639 = vadd.f32 0.0, %v638
      %v640 = vpop.f32.mrf.mxu0
      %641 = vmatprep.mubr.f32.mxu0 0.0
      %642 = vmatmul.mubr.f32.gmra.mxu0 %v422
      %v643 = vpop.f32.mrf.mxu0
      %v644 = vadd.f32 0.0, %v643
      %v645 = vpop.f32.mrf.mxu0
      %646 = vmatprep.mubr.f32.mxu0 0.0
      %647 = vmatmul.mubr.f32.gmra.mxu0 %v424
      %v648 = vpop.f32.mrf.mxu0
      %v649 = vadd.f32 0.0, %v648
      %v650 = vpop.f32.mrf.mxu0
      %651 = vmatprep.mubr.f32.mxu0 0.0
      %652 = vmatmul.mubr.f32.gmra.mxu0 %v426
      %v653 = vpop.f32.mrf.mxu0
      %v654 = vadd.f32 0.0, %v653
      %v655 = vpop.f32.mrf.mxu0
      %656 = vdwg.mxu0
      %v657 = vsel %vm363, %v171, 0
      %v659 = vsel %vm363, %v172, 0
      %v661 = vsel %vm363, %v174, 0
      %v663 = vsel %vm363, %v175, 0
      %v665 = vsel %vm363, %v177, 0
      %v667 = vsel %vm363, %v178, 0
      %v669 = vsel %vm363, %v180, 0
      %v671 = vsel %vm363, %v181, 0
      %v673 = vsel %vm363, %v183, 0
      %v675 = vsel %vm363, %v184, 0
      %v677 = vsel %vm363, %v186, 0
      %v679 = vsel %vm363, %v187, 0
      %v681 = vsel %vm363, %v189, 0
      %v683 = vsel %vm363, %v190, 0
      %v685 = vsel %vm363, %v192, 0
      %v687 = vsel %vm363, %v193, 0
      %v689 = vsel %vm363, %v195, 0
      %v691 = vsel %vm363, %v196, 0
      %v693 = vsel %vm363, %v198, 0
      %v695 = vsel %vm363, %v199, 0
      %v697 = vsel %vm363, %v201, 0
      %v699 = vsel %vm363, %v202, 0
      %v701 = vsel %vm363, %v204, 0
      %v703 = vsel %vm363, %v205, 0
      %v705 = vsel %vm363, %v207, 0
      %v707 = vsel %vm363, %v208, 0
      %v709 = vsel %vm363, %v210, 0
      %v711 = vsel %vm363, %v211, 0
      %v713 = vsel %vm363, %v213, 0
      %v715 = vsel %vm363, %v214, 0
      %v717 = vsel %vm363, %v216, 0
      %v719 = vsel %vm363, %v217, 0
      %v722 = vsel %vm428, %v227, 0
      %724 = vmatprep.subr.mxu0 0.0
      %725 = vmatpush1.msra.mxu0 0.0
      %726 = vmatprep.subr.mxu0 0.0
      %727 = vmatpush1.msra.mxu0 0.0
      %728 = vmatprep.subr.mxu0 0.0
      %729 = vmatpush1.msra.mxu0 0.0
      %730 = vmatprep.subr.mxu0 0.0
      %731 = vmatpush1.msra.mxu0 0.0
      %732 = vmatprep.subr.mxu0 0.0
      %733 = vmatpush1.msra.mxu0 0.0
      %734 = vmatprep.subr.mxu0 0.0
      %735 = vmatpush1.msra.mxu0 0.0
      %736 = vmatprep.subr.mxu0 0.0
      %737 = vmatpush1.msra.mxu0 0.0
      %738 = vmatprep.subr.mxu0 0.0
      %739 = vmatpush1.msra.mxu0 0.0
      %740 = vmatprep.subr.mxu0 0.0
      %741 = vmatpush1.msra.mxu0 0.0
      %742 = vmatprep.subr.mxu0 0.0
      %743 = vmatpush1.msra.mxu0 0.0
      %744 = vmatprep.subr.mxu0 0.0
      %745 = vmatpush1.msra.mxu0 %v722
      %746 = vmatprep.subr.mxu0 0.0
      %747 = vmatpush1.msra.mxu0 %v226
      %748 = vmatprep.subr.mxu0 0.0
      %749 = vmatpush1.msra.mxu0 %v225
      %750 = vmatprep.subr.mxu0 0.0
      %751 = vmatpush1.msra.mxu0 %v224
      %752 = vmatprep.subr.mxu0 0.0
      %753 = vmatpush1.msra.mxu0 %v223
      %754 = vmatprep.subr.mxu0 0.0
      %755 = vmatpush1.msra.mxu0 %v222
      %756 = vmatprep.subr.mxu0 0.0
      %757 = vmatpush2.msra.mxu0 0.0
      %758 = vmatprep.subr.mxu0 0.0
      %759 = vmatpush2.msra.mxu0 0.0
      %760 = vmatprep.subr.mxu0 0.0
      %761 = vmatpush2.msra.mxu0 0.0
      %762 = vmatprep.subr.mxu0 0.0
      %763 = vmatpush2.msra.mxu0 0.0
      %764 = vmatprep.subr.mxu0 0.0
      %765 = vmatpush2.msra.mxu0 0.0
      %766 = vmatprep.subr.mxu0 0.0
      %767 = vmatpush2.msra.mxu0 0.0
      %768 = vmatprep.subr.mxu0 0.0
      %769 = vmatpush2.msra.mxu0 0.0
      %770 = vmatprep.subr.mxu0 0.0
      %771 = vmatpush2.msra.mxu0 0.0
      %772 = vmatprep.subr.mxu0 0.0
      %773 = vmatpush2.msra.mxu0 0.0
      %774 = vmatprep.subr.mxu0 0.0
      %775 = vmatpush2.msra.mxu0 0.0
      %776 = vmatprep.subr.mxu0 0.0
      %777 = vmatpush2.msra.mxu0 0.0
      %778 = vmatprep.subr.mxu0 0.0
      %779 = vmatpush2.msra.mxu0 0.0
      %780 = vmatprep.subr.mxu0 0.0
      %781 = vmatpush2.msra.mxu0 0.0
      %782 = vmatprep.subr.mxu0 0.0
      %783 = vmatpush2.msra.mxu0 0.0
      %784 = vmatprep.subr.mxu0 0.0
      %785 = vmatpush2.msra.mxu0 0.0
      %786 = vmatprep.subr.mxu0 0.0
      %787 = vmatpush2.msra.mxu0 0.0
      %788 = vmatprep.mubr.f32.mxu0 0.0
      %789 = vmatmul.mubr.f32.gmra.mxu0 %v657
      %v790 = vpop.f32.mrf.mxu0
      %v791 = vadd.f32 %v499, %v790
      %v792 = vpop.f32.mrf.mxu0
      %793 = vmatprep.mubr.f32.mxu0 0.0
      %794 = vmatmul.mubr.f32.gmra.mxu0 %v659
      %v795 = vpop.f32.mrf.mxu0
      %v796 = vadd.f32 %v504, %v795
      %v797 = vpop.f32.mrf.mxu0
      %798 = vmatprep.mubr.f32.mxu0 0.0
      %799 = vmatmul.mubr.f32.gmra.mxu0 %v661
      %v800 = vpop.f32.mrf.mxu0
      %v801 = vadd.f32 %v509, %v800
      %v802 = vpop.f32.mrf.mxu0
      %803 = vmatprep.mubr.f32.mxu0 0.0
      %804 = vmatmul.mubr.f32.gmra.mxu0 %v663
      %v805 = vpop.f32.mrf.mxu0
      %v806 = vadd.f32 %v514, %v805
      %v807 = vpop.f32.mrf.mxu0
      %808 = vmatprep.mubr.f32.mxu0 0.0
      %809 = vmatmul.mubr.f32.gmra.mxu0 %v665
      %v810 = vpop.f32.mrf.mxu0
      %v811 = vadd.f32 %v519, %v810
      %v812 = vpop.f32.mrf.mxu0
      %813 = vmatprep.mubr.f32.mxu0 0.0
      %814 = vmatmul.mubr.f32.gmra.mxu0 %v667
      %v815 = vpop.f32.mrf.mxu0
      %v816 = vadd.f32 %v524, %v815
      %v817 = vpop.f32.mrf.mxu0
      %818 = vmatprep.mubr.f32.mxu0 0.0
      %819 = vmatmul.mubr.f32.gmra.mxu0 %v669
      %v820 = vpop.f32.mrf.mxu0
      %v821 = vadd.f32 %v529, %v820
      %v822 = vpop.f32.mrf.mxu0
      %823 = vmatprep.mubr.f32.mxu0 0.0
      %824 = vmatmul.mubr.f32.gmra.mxu0 %v671
      %v825 = vpop.f32.mrf.mxu0
      %v826 = vadd.f32 %v534, %v825
      %v827 = vpop.f32.mrf.mxu0
      %828 = vmatprep.mubr.f32.mxu0 0.0
      %829 = vmatmul.mubr.f32.gmra.mxu0 %v673
      %v830 = vpop.f32.mrf.mxu0
      %v831 = vadd.f32 %v539, %v830
      %v832 = vpop.f32.mrf.mxu0
      %833 = vmatprep.mubr.f32.mxu0 0.0
      %834 = vmatmul.mubr.f32.gmra.mxu0 %v675
      %v835 = vpop.f32.mrf.mxu0
      %v836 = vadd.f32 %v544, %v835
      %v837 = vpop.f32.mrf.mxu0
      %838 = vmatprep.mubr.f32.mxu0 0.0
      %839 = vmatmul.mubr.f32.gmra.mxu0 %v677
      %v840 = vpop.f32.mrf.mxu0
      %v841 = vadd.f32 %v549, %v840
      %v842 = vpop.f32.mrf.mxu0
      %843 = vmatprep.mubr.f32.mxu0 0.0
      %844 = vmatmul.mubr.f32.gmra.mxu0 %v679
      %v845 = vpop.f32.mrf.mxu0
      %v846 = vadd.f32 %v554, %v845
      %v847 = vpop.f32.mrf.mxu0
      %848 = vmatprep.mubr.f32.mxu0 0.0
      %849 = vmatmul.mubr.f32.gmra.mxu0 %v681
      %v850 = vpop.f32.mrf.mxu0
      %v851 = vadd.f32 %v559, %v850
      %v852 = vpop.f32.mrf.mxu0
      %853 = vmatprep.mubr.f32.mxu0 0.0
      %854 = vmatmul.mubr.f32.gmra.mxu0 %v683
      %v855 = vpop.f32.mrf.mxu0
      %v856 = vadd.f32 %v564, %v855
      %v857 = vpop.f32.mrf.mxu0
      %858 = vmatprep.mubr.f32.mxu0 0.0
      %859 = vmatmul.mubr.f32.gmra.mxu0 %v685
      %v860 = vpop.f32.mrf.mxu0
      %v861 = vadd.f32 %v569, %v860
      %v862 = vpop.f32.mrf.mxu0
      %863 = vmatprep.mubr.f32.mxu0 0.0
      %864 = vmatmul.mubr.f32.gmra.mxu0 %v687
      %v865 = vpop.f32.mrf.mxu0
      %v866 = vadd.f32 %v574, %v865
      %v867 = vpop.f32.mrf.mxu0
      %868 = vmatprep.mubr.f32.mxu0 0.0
      %869 = vmatmul.mubr.f32.gmra.mxu0 %v689
      %v870 = vpop.f32.mrf.mxu0
      %v871 = vadd.f32 %v579, %v870
      %v872 = vpop.f32.mrf.mxu0
      %873 = vmatprep.mubr.f32.mxu0 0.0
      %874 = vmatmul.mubr.f32.gmra.mxu0 %v691
      %v875 = vpop.f32.mrf.mxu0
      %v876 = vadd.f32 %v584, %v875
      %v877 = vpop.f32.mrf.mxu0
      %878 = vmatprep.mubr.f32.mxu0 0.0
      %879 = vmatmul.mubr.f32.gmra.mxu0 %v693
      %v880 = vpop.f32.mrf.mxu0
      %v881 = vadd.f32 %v589, %v880
      %v882 = vpop.f32.mrf.mxu0
      %883 = vmatprep.mubr.f32.mxu0 0.0
      %884 = vmatmul.mubr.f32.gmra.mxu0 %v695
      %v885 = vpop.f32.mrf.mxu0
      %v886 = vadd.f32 %v594, %v885
      %v887 = vpop.f32.mrf.mxu0
      %888 = vmatprep.mubr.f32.mxu0 0.0
      %889 = vmatmul.mubr.f32.gmra.mxu0 %v697
      %v890 = vpop.f32.mrf.mxu0
      %v891 = vadd.f32 %v599, %v890
      %v892 = vpop.f32.mrf.mxu0
      %893 = vmatprep.mubr.f32.mxu0 0.0
      %894 = vmatmul.mubr.f32.gmra.mxu0 %v699
      %v895 = vpop.f32.mrf.mxu0
      %v896 = vadd.f32 %v604, %v895
      %v897 = vpop.f32.mrf.mxu0
      %898 = vmatprep.mubr.f32.mxu0 0.0
      %899 = vmatmul.mubr.f32.gmra.mxu0 %v701
      %v900 = vpop.f32.mrf.mxu0
      %v901 = vadd.f32 %v609, %v900
      %v902 = vpop.f32.mrf.mxu0
      %903 = vmatprep.mubr.f32.mxu0 0.0
      %904 = vmatmul.mubr.f32.gmra.mxu0 %v703
      %v905 = vpop.f32.mrf.mxu0
      %v906 = vadd.f32 %v614, %v905
      %v907 = vpop.f32.mrf.mxu0
      %908 = vmatprep.mubr.f32.mxu0 0.0
      %909 = vmatmul.mubr.f32.gmra.mxu0 %v705
      %v910 = vpop.f32.mrf.mxu0
      %v911 = vadd.f32 %v619, %v910
      %v912 = vpop.f32.mrf.mxu0
      %913 = vmatprep.mubr.f32.mxu0 0.0
      %914 = vmatmul.mubr.f32.gmra.mxu0 %v707
      %v915 = vpop.f32.mrf.mxu0
      %v916 = vadd.f32 %v624, %v915
      %v917 = vpop.f32.mrf.mxu0
      %918 = vmatprep.mubr.f32.mxu0 0.0
      %919 = vmatmul.mubr.f32.gmra.mxu0 %v709
      %v920 = vpop.f32.mrf.mxu0
      %v921 = vadd.f32 %v629, %v920
      %v922 = vpop.f32.mrf.mxu0
      %923 = vmatprep.mubr.f32.mxu0 0.0
      %924 = vmatmul.mubr.f32.gmra.mxu0 %v711
      %v925 = vpop.f32.mrf.mxu0
      %v926 = vadd.f32 %v634, %v925
      %v927 = vpop.f32.mrf.mxu0
      %928 = vmatprep.mubr.f32.mxu0 0.0
      %929 = vmatmul.mubr.f32.gmra.mxu0 %v713
      %v930 = vpop.f32.mrf.mxu0
      %v931 = vadd.f32 %v639, %v930
      %v932 = vpop.f32.mrf.mxu0
      %933 = vmatprep.mubr.f32.mxu0 0.0
      %934 = vmatmul.mubr.f32.gmra.mxu0 %v715
      %v935 = vpop.f32.mrf.mxu0
      %v936 = vadd.f32 %v644, %v935
      %v937 = vpop.f32.mrf.mxu0
      %938 = vmatprep.mubr.f32.mxu0 0.0
      %939 = vmatmul.mubr.f32.gmra.mxu0 %v717
      %v940 = vpop.f32.mrf.mxu0
      %v941 = vadd.f32 %v649, %v940
      %v942 = vpop.f32.mrf.mxu0
      %943 = vmatprep.mubr.f32.mxu0 0.0
      %944 = vmatmul.mubr.f32.gmra.mxu0 %v719
      %v945 = vpop.f32.mrf.mxu0
      %v946 = vadd.f32 %v654, %v945
      %v947 = vpop.f32.mrf.mxu0
      %948 = vdwg.mxu0
      %v949 = vld [vmem:[%s1 + $0x58] sm:$0xff]
      %v950 = vld [vmem:[%s1 + $0x60] sm:$0xff]
      %v951 = vld [vmem:[%s1 + $0x68] sm:$0xff]
      %v952 = vld [vmem:[%s1 + $0x70] sm:$0xff]
      %v953 = vld [vmem:[%s1 + $0x78] sm:$0xff]
      %v954 = vld [vmem:[%s1 + $0x80] sm:$0xf]
      %v956 = vsel %vm363, %v219, 0
      %v959 = vsel %vm363, %v220, 0
      %v962 = vsel %vm428, %v954, 0
      %964 = vmatprep.subr.mxu0 0.0
      %965 = vmatpush1.msra.mxu0 0.0
      %966 = vmatprep.subr.mxu0 0.0
      %967 = vmatpush1.msra.mxu0 0.0
      %968 = vmatprep.subr.mxu0 0.0
      %969 = vmatpush1.msra.mxu0 0.0
      %970 = vmatprep.subr.mxu0 0.0
      %971 = vmatpush1.msra.mxu0 0.0
      %972 = vmatprep.subr.mxu0 0.0
      %973 = vmatpush1.msra.mxu0 0.0
      %974 = vmatprep.subr.mxu0 0.0
      %975 = vmatpush1.msra.mxu0 0.0
      %976 = vmatprep.subr.mxu0 0.0
      %977 = vmatpush1.msra.mxu0 0.0
      %978 = vmatprep.subr.mxu0 0.0
      %979 = vmatpush1.msra.mxu0 0.0
      %980 = vmatprep.subr.mxu0 0.0
      %981 = vmatpush1.msra.mxu0 0.0
      %982 = vmatprep.subr.mxu0 0.0
      %983 = vmatpush1.msra.mxu0 0.0
      %984 = vmatprep.subr.mxu0 0.0
      %985 = vmatpush1.msra.mxu0 %v962
      %986 = vmatprep.subr.mxu0 0.0
      %987 = vmatpush1.msra.mxu0 %v953
      %988 = vmatprep.subr.mxu0 0.0
      %989 = vmatpush1.msra.mxu0 %v952
      %990 = vmatprep.subr.mxu0 0.0
      %991 = vmatpush1.msra.mxu0 %v951
      %992 = vmatprep.subr.mxu0 0.0
      %993 = vmatpush1.msra.mxu0 %v950
      %994 = vmatprep.subr.mxu0 0.0
      %995 = vmatpush1.msra.mxu0 %v949
      %996 = vmatprep.subr.mxu0 0.0
      %997 = vmatpush2.msra.mxu0 0.0
      %998 = vmatprep.subr.mxu0 0.0
      %999 = vmatpush2.msra.mxu0 0.0
      %1000 = vmatprep.subr.mxu0 0.0
      %1001 = vmatpush2.msra.mxu0 0.0
      %1002 = vmatprep.subr.mxu0 0.0
      %1003 = vmatpush2.msra.mxu0 0.0
      %1004 = vmatprep.subr.mxu0 0.0
      %1005 = vmatpush2.msra.mxu0 0.0
      %1006 = vmatprep.subr.mxu0 0.0
      %1007 = vmatpush2.msra.mxu0 0.0
      %1008 = vmatprep.subr.mxu0 0.0
      %1009 = vmatpush2.msra.mxu0 0.0
      %1010 = vmatprep.subr.mxu0 0.0
      %1011 = vmatpush2.msra.mxu0 0.0
      %1012 = vmatprep.subr.mxu0 0.0
      %1013 = vmatpush2.msra.mxu0 0.0
      %1014 = vmatprep.subr.mxu0 0.0
      %1015 = vmatpush2.msra.mxu0 0.0
      %1016 = vmatprep.subr.mxu0 0.0
      %1017 = vmatpush2.msra.mxu0 0.0
      %1018 = vmatprep.subr.mxu0 0.0
      %1019 = vmatpush2.msra.mxu0 0.0
      %1020 = vmatprep.subr.mxu0 0.0
      %1021 = vmatpush2.msra.mxu0 0.0
      %1022 = vmatprep.subr.mxu0 0.0
      %1023 = vmatpush2.msra.mxu0 0.0
      %1024 = vmatprep.subr.mxu0 0.0
      %1025 = vmatpush2.msra.mxu0 0.0
      %1026 = vmatprep.subr.mxu0 0.0
      %1027 = vmatpush2.msra.mxu0 0.0
      %1028 = vmatprep.mubr.f32.mxu0 0.0
      %1029 = vmatmul.mubr.f32.gmra.mxu0 %v661
      %v1030 = vpop.f32.mrf.mxu0
      %v1031 = vadd.f32 0.0, %v1030
      %v1032 = vpop.f32.mrf.mxu0
      %1033 = vmatprep.mubr.f32.mxu0 0.0
      %1034 = vmatmul.mubr.f32.gmra.mxu0 %v663
      %v1035 = vpop.f32.mrf.mxu0
      %v1036 = vadd.f32 0.0, %v1035
      %v1037 = vpop.f32.mrf.mxu0
      %1038 = vmatprep.mubr.f32.mxu0 0.0
      %1039 = vmatmul.mubr.f32.gmra.mxu0 %v665
      %v1040 = vpop.f32.mrf.mxu0
      %v1041 = vadd.f32 0.0, %v1040
      %v1042 = vpop.f32.mrf.mxu0
      %1043 = vmatprep.mubr.f32.mxu0 0.0
      %1044 = vmatmul.mubr.f32.gmra.mxu0 %v667
      %v1045 = vpop.f32.mrf.mxu0
      %v1046 = vadd.f32 0.0, %v1045
      %v1047 = vpop.f32.mrf.mxu0
      %1048 = vmatprep.mubr.f32.mxu0 0.0
      %1049 = vmatmul.mubr.f32.gmra.mxu0 %v669
      %v1050 = vpop.f32.mrf.mxu0
      %v1051 = vadd.f32 0.0, %v1050
      %v1052 = vpop.f32.mrf.mxu0
      %1053 = vmatprep.mubr.f32.mxu0 0.0
      %1054 = vmatmul.mubr.f32.gmra.mxu0 %v671
      %v1055 = vpop.f32.mrf.mxu0
      %v1056 = vadd.f32 0.0, %v1055
      %v1057 = vpop.f32.mrf.mxu0
      %1058 = vmatprep.mubr.f32.mxu0 0.0
      %1059 = vmatmul.mubr.f32.gmra.mxu0 %v673
      %v1060 = vpop.f32.mrf.mxu0
      %v1061 = vadd.f32 0.0, %v1060
      %v1062 = vpop.f32.mrf.mxu0
      %1063 = vmatprep.mubr.f32.mxu0 0.0
      %1064 = vmatmul.mubr.f32.gmra.mxu0 %v675
      %v1065 = vpop.f32.mrf.mxu0
      %v1066 = vadd.f32 0.0, %v1065
      %v1067 = vpop.f32.mrf.mxu0
      %1068 = vmatprep.mubr.f32.mxu0 0.0
      %1069 = vmatmul.mubr.f32.gmra.mxu0 %v677
      %v1070 = vpop.f32.mrf.mxu0
      %v1071 = vadd.f32 0.0, %v1070
      %v1072 = vpop.f32.mrf.mxu0
      %1073 = vmatprep.mubr.f32.mxu0 0.0
      %1074 = vmatmul.mubr.f32.gmra.mxu0 %v679
      %v1075 = vpop.f32.mrf.mxu0
      %v1076 = vadd.f32 0.0, %v1075
      %v1077 = vpop.f32.mrf.mxu0
      %1078 = vmatprep.mubr.f32.mxu0 0.0
      %1079 = vmatmul.mubr.f32.gmra.mxu0 %v681
      %v1080 = vpop.f32.mrf.mxu0
      %v1081 = vadd.f32 0.0, %v1080
      %v1082 = vpop.f32.mrf.mxu0
      %1083 = vmatprep.mubr.f32.mxu0 0.0
      %1084 = vmatmul.mubr.f32.gmra.mxu0 %v683
      %v1085 = vpop.f32.mrf.mxu0
      %v1086 = vadd.f32 0.0, %v1085
      %v1087 = vpop.f32.mrf.mxu0
      %1088 = vmatprep.mubr.f32.mxu0 0.0
      %1089 = vmatmul.mubr.f32.gmra.mxu0 %v685
      %v1090 = vpop.f32.mrf.mxu0
      %v1091 = vadd.f32 0.0, %v1090
      %v1092 = vpop.f32.mrf.mxu0
      %1093 = vmatprep.mubr.f32.mxu0 0.0
      %1094 = vmatmul.mubr.f32.gmra.mxu0 %v687
      %v1095 = vpop.f32.mrf.mxu0
      %v1096 = vadd.f32 0.0, %v1095
      %v1097 = vpop.f32.mrf.mxu0
      %1098 = vmatprep.mubr.f32.mxu0 0.0
      %1099 = vmatmul.mubr.f32.gmra.mxu0 %v689
      %v1100 = vpop.f32.mrf.mxu0
      %v1101 = vadd.f32 0.0, %v1100
      %v1102 = vpop.f32.mrf.mxu0
      %1103 = vmatprep.mubr.f32.mxu0 0.0
      %1104 = vmatmul.mubr.f32.gmra.mxu0 %v691
      %v1105 = vpop.f32.mrf.mxu0
      %v1106 = vadd.f32 0.0, %v1105
      %v1107 = vpop.f32.mrf.mxu0
      %1108 = vmatprep.mubr.f32.mxu0 0.0
      %1109 = vmatmul.mubr.f32.gmra.mxu0 %v693
      %v1110 = vpop.f32.mrf.mxu0
      %v1111 = vadd.f32 0.0, %v1110
      %v1112 = vpop.f32.mrf.mxu0
      %1113 = vmatprep.mubr.f32.mxu0 0.0
      %1114 = vmatmul.mubr.f32.gmra.mxu0 %v695
      %v1115 = vpop.f32.mrf.mxu0
      %v1116 = vadd.f32 0.0, %v1115
      %v1117 = vpop.f32.mrf.mxu0
      %1118 = vmatprep.mubr.f32.mxu0 0.0
      %1119 = vmatmul.mubr.f32.gmra.mxu0 %v697
      %v1120 = vpop.f32.mrf.mxu0
      %v1121 = vadd.f32 0.0, %v1120
      %v1122 = vpop.f32.mrf.mxu0
      %1123 = vmatprep.mubr.f32.mxu0 0.0
      %1124 = vmatmul.mubr.f32.gmra.mxu0 %v699
      %v1125 = vpop.f32.mrf.mxu0
      %v1126 = vadd.f32 0.0, %v1125
      %v1127 = vpop.f32.mrf.mxu0
      %1128 = vmatprep.mubr.f32.mxu0 0.0
      %1129 = vmatmul.mubr.f32.gmra.mxu0 %v701
      %v1130 = vpop.f32.mrf.mxu0
      %v1131 = vadd.f32 0.0, %v1130
      %v1132 = vpop.f32.mrf.mxu0
      %1133 = vmatprep.mubr.f32.mxu0 0.0
      %1134 = vmatmul.mubr.f32.gmra.mxu0 %v703
      %v1135 = vpop.f32.mrf.mxu0
      %v1136 = vadd.f32 0.0, %v1135
      %v1137 = vpop.f32.mrf.mxu0
      %1138 = vmatprep.mubr.f32.mxu0 0.0
      %1139 = vmatmul.mubr.f32.gmra.mxu0 %v705
      %v1140 = vpop.f32.mrf.mxu0
      %v1141 = vadd.f32 0.0, %v1140
      %v1142 = vpop.f32.mrf.mxu0
      %1143 = vmatprep.mubr.f32.mxu0 0.0
      %1144 = vmatmul.mubr.f32.gmra.mxu0 %v707
      %v1145 = vpop.f32.mrf.mxu0
      %v1146 = vadd.f32 0.0, %v1145
      %v1147 = vpop.f32.mrf.mxu0
      %1148 = vmatprep.mubr.f32.mxu0 0.0
      %1149 = vmatmul.mubr.f32.gmra.mxu0 %v709
      %v1150 = vpop.f32.mrf.mxu0
      %v1151 = vadd.f32 0.0, %v1150
      %v1152 = vpop.f32.mrf.mxu0
      %1153 = vmatprep.mubr.f32.mxu0 0.0
      %1154 = vmatmul.mubr.f32.gmra.mxu0 %v711
      %v1155 = vpop.f32.mrf.mxu0
      %v1156 = vadd.f32 0.0, %v1155
      %v1157 = vpop.f32.mrf.mxu0
      %1158 = vmatprep.mubr.f32.mxu0 0.0
      %1159 = vmatmul.mubr.f32.gmra.mxu0 %v713
      %v1160 = vpop.f32.mrf.mxu0
      %v1161 = vadd.f32 0.0, %v1160
      %v1162 = vpop.f32.mrf.mxu0
      %1163 = vmatprep.mubr.f32.mxu0 0.0
      %1164 = vmatmul.mubr.f32.gmra.mxu0 %v715
      %v1165 = vpop.f32.mrf.mxu0
      %v1166 = vadd.f32 0.0, %v1165
      %v1167 = vpop.f32.mrf.mxu0
      %1168 = vmatprep.mubr.f32.mxu0 0.0
      %1169 = vmatmul.mubr.f32.gmra.mxu0 %v717
      %v1170 = vpop.f32.mrf.mxu0
      %v1171 = vadd.f32 0.0, %v1170
      %v1172 = vpop.f32.mrf.mxu0
      %1173 = vmatprep.mubr.f32.mxu0 0.0
      %1174 = vmatmul.mubr.f32.gmra.mxu0 %v719
      %v1175 = vpop.f32.mrf.mxu0
      %v1176 = vadd.f32 0.0, %v1175
      %v1177 = vpop.f32.mrf.mxu0
      %1178 = vmatprep.mubr.f32.mxu0 0.0
      %1179 = vmatmul.mubr.f32.gmra.mxu0 %v956
      %v1180 = vpop.f32.mrf.mxu0
      %v1181 = vadd.f32 0.0, %v1180
      %v1182 = vpop.f32.mrf.mxu0
      %1183 = vmatprep.mubr.f32.mxu0 0.0
      %1184 = vmatmul.mubr.f32.gmra.mxu0 %v959
      %v1185 = vpop.f32.mrf.mxu0
      %v1186 = vadd.f32 0.0, %v1185
      %v1187 = vpop.f32.mrf.mxu0
      %1188 = vdwg.mxu0
      %v1189 = vadd.f32 %v791, %v1031
      %v1190 = vadd.f32 %v796, %v1036
      %v1191 = vadd.f32 %v801, %v1041
      %v1192 = vadd.f32 %v806, %v1046
      %v1193 = vadd.f32 %v811, %v1051
      %v1194 = vadd.f32 %v816, %v1056
      %v1195 = vadd.f32 %v821, %v1061
      %v1196 = vadd.f32 %v826, %v1066
      %v1197 = vadd.f32 %v831, %v1071
      %v1198 = vadd.f32 %v836, %v1076
      %v1199 = vadd.f32 %v841, %v1081
      %v1200 = vadd.f32 %v846, %v1086
      %v1201 = vadd.f32 %v851, %v1091
      %v1202 = vadd.f32 %v856, %v1096
      %v1203 = vadd.f32 %v861, %v1101
      %v1204 = vadd.f32 %v866, %v1106
      %v1205 = vadd.f32 %v871, %v1111
      %v1206 = vadd.f32 %v876, %v1116
      %v1207 = vadd.f32 %v881, %v1121
      %v1208 = vadd.f32 %v886, %v1126
      %v1209 = vadd.f32 %v891, %v1131
      %v1210 = vadd.f32 %v896, %v1136
      %v1211 = vadd.f32 %v901, %v1141
      %v1212 = vadd.f32 %v906, %v1146
      %v1213 = vadd.f32 %v911, %v1151
      %v1214 = vadd.f32 %v916, %v1156
      %v1215 = vadd.f32 %v921, %v1161
      %v1216 = vadd.f32 %v926, %v1166
      %v1217 = vadd.f32 %v931, %v1171
      %v1218 = vadd.f32 %v936, %v1176
      %v1219 = vadd.f32 %v941, %v1181
      %v1220 = vadd.f32 %v946, %v1186
      %v1222 = vrot.slane %v219, 1
      %v1223 = vrot.slane %v220, 1
      %v1224 = vsel %vm276, %v1222, %v1223
      %v1225 = vrot.slane %v221, 1
      %v1226 = vsel %vm276, %v1223, %v1225
      %v1227 = vld [vmem:[%s1 + $0x84] sm:$0xff]
      %v1228 = vld [vmem:[%s1 + $0x8c] sm:$0xff]
      %v1229 = vld [vmem:[%s1 + $0x94] sm:$0xff]
      %v1230 = vld [vmem:[%s1 + $0x9c] sm:$0xff]
      %v1231 = vld [vmem:[%s1 + $0xa4] sm:$0xff]
      %v1232 = vld [vmem:[%s1 + $0xac] sm:$0xf]
      %v1233 = vsel %vm363, %v1224, 0
      %v1235 = vsel %vm363, %v1226, 0
      %v1238 = vsel %vm428, %v1232, 0
      %1240 = vmatprep.subr.mxu0 0.0
      %1241 = vmatpush1.msra.mxu0 0.0
      %1242 = vmatprep.subr.mxu0 0.0
      %1243 = vmatpush1.msra.mxu0 0.0
      %1244 = vmatprep.subr.mxu0 0.0
      %1245 = vmatpush1.msra.mxu0 0.0
      %1246 = vmatprep.subr.mxu0 0.0
      %1247 = vmatpush1.msra.mxu0 0.0
      %1248 = vmatprep.subr.mxu0 0.0
      %1249 = vmatpush1.msra.mxu0 0.0
      %1250 = vmatprep.subr.mxu0 0.0
      %1251 = vmatpush1.msra.mxu0 0.0
      %1252 = vmatprep.subr.mxu0 0.0
      %1253 = vmatpush1.msra.mxu0 0.0
      %1254 = vmatprep.subr.mxu0 0.0
      %1255 = vmatpush1.msra.mxu0 0.0
      %1256 = vmatprep.subr.mxu0 0.0
      %1257 = vmatpush1.msra.mxu0 0.0
      %1258 = vmatprep.subr.mxu0 0.0
      %1259 = vmatpush1.msra.mxu0 0.0
      %1260 = vmatprep.subr.mxu0 0.0
      %1261 = vmatpush1.msra.mxu0 %v1238
      %1262 = vmatprep.subr.mxu0 0.0
      %1263 = vmatpush1.msra.mxu0 %v1231
      %1264 = vmatprep.subr.mxu0 0.0
      %1265 = vmatpush1.msra.mxu0 %v1230
      %1266 = vmatprep.subr.mxu0 0.0
      %1267 = vmatpush1.msra.mxu0 %v1229
      %1268 = vmatprep.subr.mxu0 0.0
      %1269 = vmatpush1.msra.mxu0 %v1228
      %1270 = vmatprep.subr.mxu0 0.0
      %1271 = vmatpush1.msra.mxu0 %v1227
      %1272 = vmatprep.subr.mxu0 0.0
      %1273 = vmatpush2.msra.mxu0 0.0
      %1274 = vmatprep.subr.mxu0 0.0
      %1275 = vmatpush2.msra.mxu0 0.0
      %1276 = vmatprep.subr.mxu0 0.0
      %1277 = vmatpush2.msra.mxu0 0.0
      %1278 = vmatprep.subr.mxu0 0.0
      %1279 = vmatpush2.msra.mxu0 0.0
      %1280 = vmatprep.subr.mxu0 0.0
      %1281 = vmatpush2.msra.mxu0 0.0
      %1282 = vmatprep.subr.mxu0 0.0
      %1283 = vmatpush2.msra.mxu0 0.0
      %1284 = vmatprep.subr.mxu0 0.0
      %1285 = vmatpush2.msra.mxu0 0.0
      %1286 = vmatprep.subr.mxu0 0.0
      %1287 = vmatpush2.msra.mxu0 0.0
      %1288 = vmatprep.subr.mxu0 0.0
      %1289 = vmatpush2.msra.mxu0 0.0
      %1290 = vmatprep.subr.mxu0 0.0
      %1291 = vmatpush2.msra.mxu0 0.0
      %1292 = vmatprep.subr.mxu0 0.0
      %1293 = vmatpush2.msra.mxu0 0.0
      %1294 = vmatprep.subr.mxu0 0.0
      %1295 = vmatpush2.msra.mxu0 0.0
      %1296 = vmatprep.subr.mxu0 0.0
      %1297 = vmatpush2.msra.mxu0 0.0
      %1298 = vmatprep.subr.mxu0 0.0
      %1299 = vmatpush2.msra.mxu0 0.0
      %1300 = vmatprep.subr.mxu0 0.0
      %1301 = vmatpush2.msra.mxu0 0.0
      %1302 = vmatprep.subr.mxu0 0.0
      %1303 = vmatpush2.msra.mxu0 0.0
      %1304 = vmatprep.mubr.f32.mxu0 0.0
      %1305 = vmatmul.mubr.f32.gmra.mxu0 %v368
      %v1306 = vpop.f32.mrf.mxu0
      %v1307 = vadd.f32 0.0, %v1306
      %v1308 = vpop.f32.mrf.mxu0
      %1309 = vmatprep.mubr.f32.mxu0 0.0
      %1310 = vmatmul.mubr.f32.gmra.mxu0 %v370
      %v1311 = vpop.f32.mrf.mxu0
      %v1312 = vadd.f32 0.0, %v1311
      %v1313 = vpop.f32.mrf.mxu0
      %1314 = vmatprep.mubr.f32.mxu0 0.0
      %1315 = vmatmul.mubr.f32.gmra.mxu0 %v372
      %v1316 = vpop.f32.mrf.mxu0
      %v1317 = vadd.f32 0.0, %v1316
      %v1318 = vpop.f32.mrf.mxu0
      %1319 = vmatprep.mubr.f32.mxu0 0.0
      %1320 = vmatmul.mubr.f32.gmra.mxu0 %v374
      %v1321 = vpop.f32.mrf.mxu0
      %v1322 = vadd.f32 0.0, %v1321
      %v1323 = vpop.f32.mrf.mxu0
      %1324 = vmatprep.mubr.f32.mxu0 0.0
      %1325 = vmatmul.mubr.f32.gmra.mxu0 %v376
      %v1326 = vpop.f32.mrf.mxu0
      %v1327 = vadd.f32 0.0, %v1326
      %v1328 = vpop.f32.mrf.mxu0
      %1329 = vmatprep.mubr.f32.mxu0 0.0
      %1330 = vmatmul.mubr.f32.gmra.mxu0 %v378
      %v1331 = vpop.f32.mrf.mxu0
      %v1332 = vadd.f32 0.0, %v1331
      %v1333 = vpop.f32.mrf.mxu0
      %1334 = vmatprep.mubr.f32.mxu0 0.0
      %1335 = vmatmul.mubr.f32.gmra.mxu0 %v380
      %v1336 = vpop.f32.mrf.mxu0
      %v1337 = vadd.f32 0.0, %v1336
      %v1338 = vpop.f32.mrf.mxu0
      %1339 = vmatprep.mubr.f32.mxu0 0.0
      %1340 = vmatmul.mubr.f32.gmra.mxu0 %v382
      %v1341 = vpop.f32.mrf.mxu0
      %v1342 = vadd.f32 0.0, %v1341
      %v1343 = vpop.f32.mrf.mxu0
      %1344 = vmatprep.mubr.f32.mxu0 0.0
      %1345 = vmatmul.mubr.f32.gmra.mxu0 %v384
      %v1346 = vpop.f32.mrf.mxu0
      %v1347 = vadd.f32 0.0, %v1346
      %v1348 = vpop.f32.mrf.mxu0
      %1349 = vmatprep.mubr.f32.mxu0 0.0
      %1350 = vmatmul.mubr.f32.gmra.mxu0 %v386
      %v1351 = vpop.f32.mrf.mxu0
      %v1352 = vadd.f32 0.0, %v1351
      %v1353 = vpop.f32.mrf.mxu0
      %1354 = vmatprep.mubr.f32.mxu0 0.0
      %1355 = vmatmul.mubr.f32.gmra.mxu0 %v388
      %v1356 = vpop.f32.mrf.mxu0
      %v1357 = vadd.f32 0.0, %v1356
      %v1358 = vpop.f32.mrf.mxu0
      %1359 = vmatprep.mubr.f32.mxu0 0.0
      %1360 = vmatmul.mubr.f32.gmra.mxu0 %v390
      %v1361 = vpop.f32.mrf.mxu0
      %v1362 = vadd.f32 0.0, %v1361
      %v1363 = vpop.f32.mrf.mxu0
      %1364 = vmatprep.mubr.f32.mxu0 0.0
      %1365 = vmatmul.mubr.f32.gmra.mxu0 %v392
      %v1366 = vpop.f32.mrf.mxu0
      %v1367 = vadd.f32 0.0, %v1366
      %v1368 = vpop.f32.mrf.mxu0
      %1369 = vmatprep.mubr.f32.mxu0 0.0
      %1370 = vmatmul.mubr.f32.gmra.mxu0 %v394
      %v1371 = vpop.f32.mrf.mxu0
      %v1372 = vadd.f32 0.0, %v1371
      %v1373 = vpop.f32.mrf.mxu0
      %1374 = vmatprep.mubr.f32.mxu0 0.0
      %1375 = vmatmul.mubr.f32.gmra.mxu0 %v396
      %v1376 = vpop.f32.mrf.mxu0
      %v1377 = vadd.f32 0.0, %v1376
      %v1378 = vpop.f32.mrf.mxu0
      %1379 = vmatprep.mubr.f32.mxu0 0.0
      %1380 = vmatmul.mubr.f32.gmra.mxu0 %v398
      %v1381 = vpop.f32.mrf.mxu0
      %v1382 = vadd.f32 0.0, %v1381
      %v1383 = vpop.f32.mrf.mxu0
      %1384 = vmatprep.mubr.f32.mxu0 0.0
      %1385 = vmatmul.mubr.f32.gmra.mxu0 %v400
      %v1386 = vpop.f32.mrf.mxu0
      %v1387 = vadd.f32 0.0, %v1386
      %v1388 = vpop.f32.mrf.mxu0
      %1389 = vmatprep.mubr.f32.mxu0 0.0
      %1390 = vmatmul.mubr.f32.gmra.mxu0 %v402
      %v1391 = vpop.f32.mrf.mxu0
      %v1392 = vadd.f32 0.0, %v1391
      %v1393 = vpop.f32.mrf.mxu0
      %1394 = vmatprep.mubr.f32.mxu0 0.0
      %1395 = vmatmul.mubr.f32.gmra.mxu0 %v404
      %v1396 = vpop.f32.mrf.mxu0
      %v1397 = vadd.f32 0.0, %v1396
      %v1398 = vpop.f32.mrf.mxu0
      %1399 = vmatprep.mubr.f32.mxu0 0.0
      %1400 = vmatmul.mubr.f32.gmra.mxu0 %v406
      %v1401 = vpop.f32.mrf.mxu0
      %v1402 = vadd.f32 0.0, %v1401
      %v1403 = vpop.f32.mrf.mxu0
      %1404 = vmatprep.mubr.f32.mxu0 0.0
      %1405 = vmatmul.mubr.f32.gmra.mxu0 %v408
      %v1406 = vpop.f32.mrf.mxu0
      %v1407 = vadd.f32 0.0, %v1406
      %v1408 = vpop.f32.mrf.mxu0
      %1409 = vmatprep.mubr.f32.mxu0 0.0
      %1410 = vmatmul.mubr.f32.gmra.mxu0 %v410
      %v1411 = vpop.f32.mrf.mxu0
      %v1412 = vadd.f32 0.0, %v1411
      %v1413 = vpop.f32.mrf.mxu0
      %1414 = vmatprep.mubr.f32.mxu0 0.0
      %1415 = vmatmul.mubr.f32.gmra.mxu0 %v412
      %v1416 = vpop.f32.mrf.mxu0
      %v1417 = vadd.f32 0.0, %v1416
      %v1418 = vpop.f32.mrf.mxu0
      %1419 = vmatprep.mubr.f32.mxu0 0.0
      %1420 = vmatmul.mubr.f32.gmra.mxu0 %v414
      %v1421 = vpop.f32.mrf.mxu0
      %v1422 = vadd.f32 0.0, %v1421
      %v1423 = vpop.f32.mrf.mxu0
      %1424 = vmatprep.mubr.f32.mxu0 0.0
      %1425 = vmatmul.mubr.f32.gmra.mxu0 %v416
      %v1426 = vpop.f32.mrf.mxu0
      %v1427 = vadd.f32 0.0, %v1426
      %v1428 = vpop.f32.mrf.mxu0
      %1429 = vmatprep.mubr.f32.mxu0 0.0
      %1430 = vmatmul.mubr.f32.gmra.mxu0 %v418
      %v1431 = vpop.f32.mrf.mxu0
      %v1432 = vadd.f32 0.0, %v1431
      %v1433 = vpop.f32.mrf.mxu0
      %1434 = vmatprep.mubr.f32.mxu0 0.0
      %1435 = vmatmul.mubr.f32.gmra.mxu0 %v420
      %v1436 = vpop.f32.mrf.mxu0
      %v1437 = vadd.f32 0.0, %v1436
      %v1438 = vpop.f32.mrf.mxu0
      %1439 = vmatprep.mubr.f32.mxu0 0.0
      %1440 = vmatmul.mubr.f32.gmra.mxu0 %v422
      %v1441 = vpop.f32.mrf.mxu0
      %v1442 = vadd.f32 0.0, %v1441
      %v1443 = vpop.f32.mrf.mxu0
      %1444 = vmatprep.mubr.f32.mxu0 0.0
      %1445 = vmatmul.mubr.f32.gmra.mxu0 %v424
      %v1446 = vpop.f32.mrf.mxu0
      %v1447 = vadd.f32 0.0, %v1446
      %v1448 = vpop.f32.mrf.mxu0
      %1449 = vmatprep.mubr.f32.mxu0 0.0
      %1450 = vmatmul.mubr.f32.gmra.mxu0 %v426
      %v1451 = vpop.f32.mrf.mxu0
      %v1452 = vadd.f32 0.0, %v1451
      %v1453 = vpop.f32.mrf.mxu0
      %1454 = vmatprep.mubr.f32.mxu0 0.0
      %1455 = vmatmul.mubr.f32.gmra.mxu0 %v1233
      %v1456 = vpop.f32.mrf.mxu0
      %v1457 = vadd.f32 0.0, %v1456
      %v1458 = vpop.f32.mrf.mxu0
      %1459 = vmatprep.mubr.f32.mxu0 0.0
      %1460 = vmatmul.mubr.f32.gmra.mxu0 %v1235
      %v1461 = vpop.f32.mrf.mxu0
      %v1462 = vadd.f32 0.0, %v1461
      %v1463 = vpop.f32.mrf.mxu0
      %1464 = vdwg.mxu0
      %v1465 = vadd.f32 %v1189, %v1307
      %v1466 = vadd.f32 %v1190, %v1312
      %v1467 = vadd.f32 %v1191, %v1317
      %v1468 = vadd.f32 %v1192, %v1322
      %v1469 = vadd.f32 %v1193, %v1327
      %v1470 = vadd.f32 %v1194, %v1332
      %v1471 = vadd.f32 %v1195, %v1337
      %v1472 = vadd.f32 %v1196, %v1342
      %v1473 = vadd.f32 %v1197, %v1347
      %v1474 = vadd.f32 %v1198, %v1352
      %v1475 = vadd.f32 %v1199, %v1357
      %v1476 = vadd.f32 %v1200, %v1362
      %v1477 = vadd.f32 %v1201, %v1367
      %v1478 = vadd.f32 %v1202, %v1372
      %v1479 = vadd.f32 %v1203, %v1377
      %v1480 = vadd.f32 %v1204, %v1382
      %v1481 = vadd.f32 %v1205, %v1387
      %v1482 = vadd.f32 %v1206, %v1392
      %v1483 = vadd.f32 %v1207, %v1397
      %v1484 = vadd.f32 %v1208, %v1402
      %v1485 = vadd.f32 %v1209, %v1407
      %v1486 = vadd.f32 %v1210, %v1412
      %v1487 = vadd.f32 %v1211, %v1417
      %v1488 = vadd.f32 %v1212, %v1422
      %v1489 = vadd.f32 %v1213, %v1427
      %v1490 = vadd.f32 %v1214, %v1432
      %v1491 = vadd.f32 %v1215, %v1437
      %v1492 = vadd.f32 %v1216, %v1442
      %v1493 = vadd.f32 %v1217, %v1447
      %v1494 = vadd.f32 %v1218, %v1452
      %v1495 = vadd.f32 %v1219, %v1457
      %v1496 = vadd.f32 %v1220, %v1462
      %v1497 = vld [vmem:[%s2] sm:$0x1]
      %v1499 = vlaneseq
      %v1500 = vshrl.u32 %v1499, 7
      %v1501 = vsub.s32 0, %v1500
      %v1502 = vrot.slane %v1497, %v1501
      %v1504 = vadd.f32 %v1465, %v1502
      %v1505 = vadd.f32 %v1466, %v1502
      %v1506 = vadd.f32 %v1467, %v1502
      %v1507 = vadd.f32 %v1468, %v1502
      %v1508 = vadd.f32 %v1469, %v1502
      %v1509 = vadd.f32 %v1470, %v1502
      %v1510 = vadd.f32 %v1471, %v1502
      %v1511 = vadd.f32 %v1472, %v1502
      %v1512 = vadd.f32 %v1473, %v1502
      %v1513 = vadd.f32 %v1474, %v1502
      %v1514 = vadd.f32 %v1475, %v1502
      %v1515 = vadd.f32 %v1476, %v1502
      %v1516 = vadd.f32 %v1477, %v1502
      %v1517 = vadd.f32 %v1478, %v1502
      %v1518 = vadd.f32 %v1479, %v1502
      %v1519 = vadd.f32 %v1480, %v1502
      %v1520 = vadd.f32 %v1481, %v1502
      %v1521 = vadd.f32 %v1482, %v1502
      %v1522 = vadd.f32 %v1483, %v1502
      %v1523 = vadd.f32 %v1484, %v1502
      %v1524 = vadd.f32 %v1485, %v1502
      %v1525 = vadd.f32 %v1486, %v1502
      %v1526 = vadd.f32 %v1487, %v1502
      %v1527 = vadd.f32 %v1488, %v1502
      %v1528 = vadd.f32 %v1489, %v1502
      %v1529 = vadd.f32 %v1490, %v1502
      %v1530 = vadd.f32 %v1491, %v1502
      %v1531 = vadd.f32 %v1492, %v1502
      %v1532 = vadd.f32 %v1493, %v1502
      %v1533 = vadd.f32 %v1494, %v1502
      %v1534 = vadd.f32 %v1495, %v1502
      %v1535 = vadd.f32 %v1496, %v1502
      %vm1536 = vcmask 130048
      %1537 = vst.msk [vmem:[%s170] sm:$0xff] %vm1536, %v1504
      %1538 = vst.msk [vmem:[%s170 + $0x8] sm:$0xff] %vm1536, %v1505
      %1539 = vst.msk [vmem:[%s170 + $0x10] sm:$0xff] %vm1536, %v1506
      %1540 = vst.msk [vmem:[%s170 + $0x18] sm:$0xff] %vm1536, %v1507
      %1541 = vst.msk [vmem:[%s170 + $0x20] sm:$0xff] %vm1536, %v1508
      %1542 = vst.msk [vmem:[%s170 + $0x28] sm:$0xff] %vm1536, %v1509
      %1543 = vst.msk [vmem:[%s170 + $0x30] sm:$0xff] %vm1536, %v1510
      %1544 = vst.msk [vmem:[%s170 + $0x38] sm:$0xff] %vm1536, %v1511
      %1545 = vst.msk [vmem:[%s170 + $0x40] sm:$0xff] %vm1536, %v1512
      %1546 = vst.msk [vmem:[%s170 + $0x48] sm:$0xff] %vm1536, %v1513
      %1547 = vst.msk [vmem:[%s170 + $0x50] sm:$0xff] %vm1536, %v1514
      %1548 = vst.msk [vmem:[%s170 + $0x58] sm:$0xff] %vm1536, %v1515
      %1549 = vst.msk [vmem:[%s170 + $0x60] sm:$0xff] %vm1536, %v1516
      %1550 = vst.msk [vmem:[%s170 + $0x68] sm:$0xff] %vm1536, %v1517
      %1551 = vst.msk [vmem:[%s170 + $0x70] sm:$0xff] %vm1536, %v1518
      %1552 = vst.msk [vmem:[%s170 + $0x78] sm:$0xff] %vm1536, %v1519
      %1553 = vst.msk [vmem:[%s170 + $0x80] sm:$0xff] %vm1536, %v1520
      %1554 = vst.msk [vmem:[%s170 + $0x88] sm:$0xff] %vm1536, %v1521
      %1555 = vst.msk [vmem:[%s170 + $0x90] sm:$0xff] %vm1536, %v1522
      %1556 = vst.msk [vmem:[%s170 + $0x98] sm:$0xff] %vm1536, %v1523
      %1557 = vst.msk [vmem:[%s170 + $0xa0] sm:$0xff] %vm1536, %v1524
      %1558 = vst.msk [vmem:[%s170 + $0xa8] sm:$0xff] %vm1536, %v1525
      %1559 = vst.msk [vmem:[%s170 + $0xb0] sm:$0xff] %vm1536, %v1526
      %1560 = vst.msk [vmem:[%s170 + $0xb8] sm:$0xff] %vm1536, %v1527
      %1561 = vst.msk [vmem:[%s170 + $0xc0] sm:$0xff] %vm1536, %v1528
      %1562 = vst.msk [vmem:[%s170 + $0xc8] sm:$0xff] %vm1536, %v1529
      %1563 = vst.msk [vmem:[%s170 + $0xd0] sm:$0xff] %vm1536, %v1530
      %1564 = vst.msk [vmem:[%s170 + $0xd8] sm:$0xff] %vm1536, %v1531
      %1565 = vst.msk [vmem:[%s170 + $0xe0] sm:$0xff] %vm1536, %v1532
      %1566 = vst.msk [vmem:[%s170 + $0xe8] sm:$0xff] %vm1536, %v1533
      %1567 = vst.msk [vmem:[%s170 + $0xf0] sm:$0xff] %vm1536, %v1534
      %1568 = vst.msk [vmem:[%s170 + $0xf8] sm:$0xff] %vm1536, %v1535
      %p1569 = scmp.lt.s32.totalorder %s14, 1
      %s1570 = scalar_select %p1569, %s14, 1
      %s1571 = smul.addr %s1570, 32
      %s1572 = smul.addr %s1571, 8
      %s1573 = scalar_lea.vmem %s3, %s1572
      // Predicated region
      $region33: #{discriminator_forward.3} parent=31 // pred_check
        %p1574 = pneg %p100
      $region34: #{discriminator_forward.3} parent=31 // pred_check_branch
        %1576 = sbr.rel (%p1574) target = $region36
      $region35: #{discriminator_forward.3} parent=31 // pred_region
        _
      $region36: #{discriminator_forward.3} parent=31 // pred_fallthru
        _
    $region32: #{discriminator_forward.3} parent=5 // pred_fallthru
      _
    %p1577 = scmp.le.s32.totalorder 2, %s9
    // Predicated region
    $region37: #{discriminator_forward.3} parent=5 // pred_check
      %p1578 = pneg %p1577
    $region38: #{discriminator_forward.3} parent=5 // pred_check_branch
      %1580 = sbr.rel (%p1578) target = $region40
    $region39: #{discriminator_forward.3} parent=5 // pred_region
      %s1581 = ssub.s32 %s9, 2
      // Predicated region
      $region41: #{discriminator_forward.3} parent=39 // pred_check
        %p1582 = pneg %p106
      $region42: #{discriminator_forward.3} parent=39 // pred_check_branch
        %1584 = sbr.rel (%p1582) target = $region44
      $region43: #{discriminator_forward.3} parent=39 // pred_region
        %p1585 = scmp.lt.s32.totalorder %s15, 1
        %s1586 = scalar_select %p1585, %s15, 1
        %s1587 = smul.addr %s1586, 32
        %s1588 = smul.addr %s1587, 8
        %s1589 = scalar_lea.vmem %s3, %s1588
      $region44: #{discriminator_forward.3} parent=39 // pred_fallthru
        _
    $region40: #{discriminator_forward.3} parent=5 // pred_fallthru
      _
  $region6: #{discriminator_forward.3} parent=0 // loop_footer
    %s13 = sadd.s32 1, %s9
  $region7: #{discriminator_forward.3} parent=0 // loop_footer_branch
    %8 = sbr.rel target = $region3
  $region8: #{discriminator_forward.3} parent=0 // loop_exit
    _

// kernel: tile.12
$region0: #{tile.12}
  #allocation0 [shape = 's32[1]{0}', space=sflag, size = 0x4, scoped, tag = 'scoped memory for tile.12']
  %s0 = inlined_call_operand.<no memory space> [shape: f32[], index: 0, kind: input, shape index: {}]
  %s1 = inlined_call_operand.vmem [shape: f32[1,1,64], index: 1, kind: output, shape index: {}]
  %v2 = vstv %s0
  %3 = vst [vmem:[%s1] sm:$0x1] %v2

// kernel: discriminator_forward.4
$region0: #{discriminator_forward.4}
  #allocation0 [shape = 'u32[]', space=smem, size = 0x4, offset = 0x4, fixed_abs, tag = 'smem constant byte address 0x4 - core index']
  #allocation1 [shape = 'u32[144,128]{1,0:T(1,128)}', space=vmem, size = 0x12000, scoped, tag = 'internal scratch']
  %s0 = inlined_call_operand.vmem [shape: f32[2,9,9,64], index: 0, kind: input, shape index: {}]
  %s1 = inlined_call_operand.vmem [shape: f32[256,32], index: 1, kind: input, shape index: {}]
  %s2 = inlined_call_operand.vmem [shape: f32[1,32], index: 2, kind: input, shape index: {}]
  %s3 = inlined_call_operand.vmem [shape: f32[1,1,64], index: 3, kind: input, shape index: {}]
  %s4 = inlined_call_operand.vmem [shape: f32[1,1,64], index: 4, kind: input, shape index: {}]
  %s5 = inlined_call_operand.vmem [shape: f32[2,64,32], index: 5, kind: output, shape index: {0}]
  %s6 = inlined_call_operand.vmem [shape: f32[2,2,32], index: 6, kind: output, shape index: {1}]
  %7 = xla_tuple %s5, %s6
  %s8 = sld [smem:[#allocation0]]
  $region61: #{discriminator_forward.4} parent=0
    _
  %s10 = ssub.s32 1, %s8
  %s11 = scalar_select 0, %s10, %s8
  loop: start=0, step=1, limit=4
  $region2: #{discriminator_forward.4} parent=0 // loop_pre_header
    _
  $region3: #{discriminator_forward.4} parent=0 // loop_header
    %s13 = sphi 0, %s17
    %p14 = scmp.ge.s32.totalorder %s13, 4
    %s23 = sphi 0, %s25
    %s26 = sphi 0, %s23
    %s27 = sphi 0, %s26
    %s43 = sphi 0, %s27
    %s47 = sphi 0, %s47
    %s49 = sphi 0, %s47
    %s50 = sphi 0, %s49
    %s64 = sphi 0, %s50
    %s68 = sphi 0, %s68
    %s70 = sphi 0, %s68
    %s71 = sphi 0, %s70
    %s85 = sphi 0, %s71
    %s89 = sphi 0, %s89
    %s91 = sphi 0, %s89
    %s92 = sphi 0, %s91
    %s106 = sphi 0, %s92
    %s110 = sphi 0, %s110
    %s112 = sphi 0, %s110
    %s113 = sphi 0, %s112
    %s127 = sphi 0, %s113
    %s133 = sphi 0, %s135
    %s136 = sphi 0, %s133
    %s137 = sphi 0, %s136
    %s153 = sphi 0, %s137
    %s159 = sphi 0, %s161
    %s162 = sphi 0, %s159
    %s163 = sphi 0, %s162
    %s179 = sphi 0, %s163
  $region4: #{discriminator_forward.4} parent=0 // loop_header_branch
    %16 = sbr.rel (%p14) target = $region8
  $region5: #{discriminator_forward.4} parent=0 // loop_body
    %s18 = ssub.s32 %s13, 1
    %s19 = ssub.s32 %s13, 2
    %s20 = sadd.s32 %s13, 1
    %s21 = ssub.s32 %s13, %s20
    %p22 = scmp.eq.s32.totalorder %s21, 0
    %s24 = sadd.s32 %s23, 1
    %s25 = scalar_select %p22, %s23, %s24
    %p28 = pneg %p22
    %p29 = scmp.eq.s32.totalorder %s13, 1
    %p30 = por %p28, %p29
    %p31 = scmp.ne.s32.totalorder %s23, %s26
    %p32 = scmp.eq.s32.totalorder %s13, 0
    %p33 = por %p31, %p32
    %p34 = scmp.ne.s32.totalorder %s23, %s26
    %p35 = scmp.eq.s32.totalorder %s18, 1
    %p36 = por %p34, %p35
    %p37 = scmp.ne.s32.totalorder %s26, %s27
    %p38 = scmp.eq.s32.totalorder %s18, 0
    %p39 = por %p37, %p38
    %p40 = scmp.ne.s32.totalorder %s26, %s27
    %p41 = scmp.eq.s32.totalorder %s19, 1
    %p42 = por %p40, %p41
    %p44 = scmp.ne.s32.totalorder %s27, %s43
    %p45 = scmp.eq.s32.totalorder %s19, 0
    %p46 = por %p44, %p45
    %s48 = sadd.s32 %s47, 1
    %p51 = scmp.eq.s32.totalorder %s13, 1
    %p52 = scmp.ne.s32.totalorder %s47, %s49
    %p53 = scmp.eq.s32.totalorder %s13, 0
    %p54 = por %p52, %p53
    %p55 = scmp.ne.s32.totalorder %s47, %s49
    %p56 = scmp.eq.s32.totalorder %s18, 1
    %p57 = por %p55, %p56
    %p58 = scmp.ne.s32.totalorder %s49, %s50
    %p59 = scmp.eq.s32.totalorder %s18, 0
    %p60 = por %p58, %p59
    %p61 = scmp.ne.s32.totalorder %s49, %s50
    %p62 = scmp.eq.s32.totalorder %s19, 1
    %p63 = por %p61, %p62
    %p65 = scmp.ne.s32.totalorder %s50, %s64
    %p66 = scmp.eq.s32.totalorder %s19, 0
    %p67 = por %p65, %p66
    %s69 = sadd.s32 %s68, 1
    %p72 = scmp.eq.s32.totalorder %s13, 1
    %p73 = scmp.ne.s32.totalorder %s68, %s70
    %p74 = scmp.eq.s32.totalorder %s13, 0
    %p75 = por %p73, %p74
    %p76 = scmp.ne.s32.totalorder %s68, %s70
    %p77 = scmp.eq.s32.totalorder %s18, 1
    %p78 = por %p76, %p77
    %p79 = scmp.ne.s32.totalorder %s70, %s71
    %p80 = scmp.eq.s32.totalorder %s18, 0
    %p81 = por %p79, %p80
    %p82 = scmp.ne.s32.totalorder %s70, %s71
    %p83 = scmp.eq.s32.totalorder %s19, 1
    %p84 = por %p82, %p83
    %p86 = scmp.ne.s32.totalorder %s71, %s85
    %p87 = scmp.eq.s32.totalorder %s19, 0
    %p88 = por %p86, %p87
    %s90 = sadd.s32 %s89, 1
    %p93 = scmp.eq.s32.totalorder %s13, 1
    %p94 = scmp.ne.s32.totalorder %s89, %s91
    %p95 = scmp.eq.s32.totalorder %s13, 0
    %p96 = por %p94, %p95
    %p97 = scmp.ne.s32.totalorder %s89, %s91
    %p98 = scmp.eq.s32.totalorder %s18, 1
    %p99 = por %p97, %p98
    %p100 = scmp.ne.s32.totalorder %s91, %s92
    %p101 = scmp.eq.s32.totalorder %s18, 0
    %p102 = por %p100, %p101
    %p103 = scmp.ne.s32.totalorder %s91, %s92
    %p104 = scmp.eq.s32.totalorder %s19, 1
    %p105 = por %p103, %p104
    %p107 = scmp.ne.s32.totalorder %s92, %s106
    %p108 = scmp.eq.s32.totalorder %s19, 0
    %p109 = por %p107, %p108
    %s111 = sadd.s32 %s110, 1
    %p114 = scmp.eq.s32.totalorder %s13, 1
    %p115 = scmp.ne.s32.totalorder %s110, %s112
    %p116 = scmp.eq.s32.totalorder %s13, 0
    %p117 = por %p115, %p116
    %p118 = scmp.ne.s32.totalorder %s110, %s112
    %p119 = scmp.eq.s32.totalorder %s18, 1
    %p120 = por %p118, %p119
    %p121 = scmp.ne.s32.totalorder %s112, %s113
    %p122 = scmp.eq.s32.totalorder %s18, 0
    %p123 = por %p121, %p122
    %p124 = scmp.ne.s32.totalorder %s112, %s113
    %p125 = scmp.eq.s32.totalorder %s19, 1
    %p126 = por %p124, %p125
    %p128 = scmp.ne.s32.totalorder %s113, %s127
    %p129 = scmp.eq.s32.totalorder %s19, 0
    %p130 = por %p128, %p129
    %s131 = ssub.s32 %s13, %s20
    %p132 = scmp.eq.s32.totalorder %s131, 0
    %s134 = sadd.s32 %s133, 1
    %s135 = scalar_select %p132, %s133, %s134
    %p138 = pneg %p132
    %p139 = scmp.eq.s32.totalorder %s13, 1
    %p140 = por %p138, %p139
    %p141 = scmp.ne.s32.totalorder %s133, %s136
    %p142 = scmp.eq.s32.totalorder %s13, 0
    %p143 = por %p141, %p142
    %p144 = scmp.ne.s32.totalorder %s133, %s136
    %p145 = scmp.eq.s32.totalorder %s18, 1
    %p146 = por %p144, %p145
    %p147 = scmp.ne.s32.totalorder %s136, %s137
    %p148 = scmp.eq.s32.totalorder %s18, 0
    %p149 = por %p147, %p148
    %p150 = scmp.ne.s32.totalorder %s136, %s137
    %p151 = scmp.eq.s32.totalorder %s19, 1
    %p152 = por %p150, %p151
    %p154 = scmp.ne.s32.totalorder %s137, %s153
    %p155 = scmp.eq.s32.totalorder %s19, 0
    %p156 = por %p154, %p155
    %s157 = ssub.s32 %s13, %s20
    %p158 = scmp.eq.s32.totalorder %s157, 0
    %s160 = sadd.s32 %s159, 1
    %s161 = scalar_select %p158, %s159, %s160
    %p164 = pneg %p158
    %p165 = scmp.eq.s32.totalorder %s13, 1
    %p166 = por %p164, %p165
    %p167 = scmp.ne.s32.totalorder %s159, %s162
    %p168 = scmp.eq.s32.totalorder %s13, 0
    %p169 = por %p167, %p168
    %p170 = scmp.ne.s32.totalorder %s159, %s162
    %p171 = scmp.eq.s32.totalorder %s18, 1
    %p172 = por %p170, %p171
    %p173 = scmp.ne.s32.totalorder %s162, %s163
    %p174 = scmp.eq.s32.totalorder %s18, 0
    %p175 = por %p173, %p174
    %p176 = scmp.ne.s32.totalorder %s162, %s163
    %p177 = scmp.eq.s32.totalorder %s19, 1
    %p178 = por %p176, %p177
    %p180 = scmp.ne.s32.totalorder %s163, %s179
    %p181 = scmp.eq.s32.totalorder %s19, 0
    %p182 = por %p180, %p181
    %p183 = scmp.le.s32.totalorder 1, %s13
    %p184 = scmp.lt.s32.totalorder %s13, 3
    %p185 = pnand %p183, %p184
    %p186 = pneg %p185
    // Predicated region
    $region9: #{discriminator_forward.4} parent=5 // pred_check
      _
    $region10: #{discriminator_forward.4} parent=5 // pred_check_branch
      %188 = sbr.rel (%p185) target = $region12
    $region11: #{discriminator_forward.4} parent=5 // pred_region
      %s189 = ssub.s32 %s13, 1
      // Predicated region
      $region13: #{discriminator_forward.4} parent=11 // pred_check
        %p190 = pneg %p60
      $region14: #{discriminator_forward.4} parent=11 // pred_check_branch
        %192 = sbr.rel (%p190) target = $region16
      $region15: #{discriminator_forward.4} parent=11 // pred_region
        _
      $region16: #{discriminator_forward.4} parent=11 // pred_fallthru
        _
      // Predicated region
      $region17: #{discriminator_forward.4} parent=11 // pred_check
        %p193 = pneg %p81
      $region18: #{discriminator_forward.4} parent=11 // pred_check_branch
        %195 = sbr.rel (%p193) target = $region20
      $region19: #{discriminator_forward.4} parent=11 // pred_region
        _
      $region20: #{discriminator_forward.4} parent=11 // pred_fallthru
        _
      // Predicated region
      $region21: #{discriminator_forward.4} parent=11 // pred_check
        %p196 = pneg %p102
      $region22: #{discriminator_forward.4} parent=11 // pred_check_branch
        %198 = sbr.rel (%p196) target = $region24
      $region23: #{discriminator_forward.4} parent=11 // pred_region
        _
      $region24: #{discriminator_forward.4} parent=11 // pred_fallthru
        _
      // Predicated region
      $region25: #{discriminator_forward.4} parent=11 // pred_check
        %p199 = pneg %p123
      $region26: #{discriminator_forward.4} parent=11 // pred_check_branch
        %201 = sbr.rel (%p199) target = $region28
      $region27: #{discriminator_forward.4} parent=11 // pred_region
        _
      $region28: #{discriminator_forward.4} parent=11 // pred_fallthru
        _
    $region12: #{discriminator_forward.4} parent=5 // pred_fallthru
      _
    %p202 = scmp.lt.s32.totalorder %s13, 2
    // Predicated region
    $region29: #{discriminator_forward.4} parent=5 // pred_check
      %p203 = pneg %p202
    $region30: #{discriminator_forward.4} parent=5 // pred_check_branch
      %205 = sbr.rel (%p203) target = $region32
    $region31: #{discriminator_forward.4} parent=5 // pred_region
      // Predicated region
      $region33: #{discriminator_forward.4} parent=31 // pred_check
        %p206 = pneg %p33
      $region34: #{discriminator_forward.4} parent=31 // pred_check_branch
        %208 = sbr.rel (%p206) target = $region36
      $region35: #{discriminator_forward.4} parent=31 // pred_region
        %p209 = scmp.lt.s32.totalorder %s13, 1
        %s210 = scalar_select %p209, %s13, 1
        %s211 = smul.addr %s210, 18
        %s212 = smul.addr %s211, 8
        %s213 = scalar_lea.vmem %s0, %s212
      $region36: #{discriminator_forward.4} parent=31 // pred_fallthru
        _
    $region32: #{discriminator_forward.4} parent=5 // pred_fallthru
      _
    %p214 = scmp.le.s32.totalorder 1, %s13
    %p215 = scmp.lt.s32.totalorder %s13, 3
    %p216 = pnand %p214, %p215
    %p217 = pneg %p216
    // Predicated region
    $region37: #{discriminator_forward.4} parent=5 // pred_check
      _
    $region38: #{discriminator_forward.4} parent=5 // pred_check_branch
      %219 = sbr.rel (%p216) target = $region40
    $region39: #{discriminator_forward.4} parent=5 // pred_region
      %s220 = ssub.s32 %s13, 1
      %p221 = scmp.lt.s32.totalorder %s18, 1
      %s222 = scalar_select %p221, %s18, 1
      %s223 = smul.addr %s222, 18
      %s224 = smul.addr %s223, 8
      %s225 = scalar_lea.vmem %s0, %s224
      %p226 = pneg %p39
      %p227 = pneg %p36
      %p228 = pneg %p60
      %p229 = pneg %p57
      %p230 = pneg %p81
      %p231 = pneg %p78
      %p232 = pneg %p102
      %p233 = pneg %p99
      %p234 = pneg %p123
      %p235 = pneg %p120
      %p236 = pneg %p149
      %p237 = pneg %p146
      %p238 = scmp.lt.s32.totalorder %s18, 1
      %s239 = scalar_select %p238, %s18, 1
      %s240 = smul.addr %s239, 8
      %s241 = smul.addr %s240, 8
      %s242 = scalar_lea.vmem %s5, %s241
      %p243 = pneg %p175
      %p244 = pneg %p172
      %p245 = scmp.lt.s32.totalorder %s18, 1
      %s246 = scalar_select %p245, %s18, 1
      %s247 = smul.addr %s246, 2
      %s248 = scalar_lea.vmem %s6, %s247
      %p249 = scmp.lt.s32.totalorder %s18, 1
      %s250 = scalar_select %p249, %s18, 1
      %s251 = smul.addr %s250, 18
      %s252 = smul.addr %s251, 8
      %s253 = scalar_lea.vmem %s0, %s252
      %p254 = scmp.lt.s32.totalorder %s18, 1
      %s255 = scalar_select %p254, %s18, 1
      %s256 = smul.addr %s255, 8
      %s257 = smul.addr %s256, 8
      %s258 = scalar_lea.vmem %s5, %s257
      %p259 = scmp.lt.s32.totalorder %s18, 1
      %s260 = scalar_select %p259, %s18, 1
      %s261 = smul.addr %s260, 2
      %s262 = scalar_lea.vmem %s6, %s261
      %v263 = vld [vmem:[%s253] sm:$0xff]
      %v264 = vld [vmem:[%s253 + $0x8] sm:$0x1]
      %v265 = vld [vmem:[%s253 + $0x10] sm:$0xff]
      %v266 = vld [vmem:[%s253 + $0x18] sm:$0x1]
      %v267 = vld [vmem:[%s253 + $0x20] sm:$0xff]
      %v268 = vld [vmem:[%s253 + $0x28] sm:$0x1]
      %v269 = vld [vmem:[%s253 + $0x30] sm:$0xff]
      %v270 = vld [vmem:[%s253 + $0x38] sm:$0x1]
      %v271 = vld [vmem:[%s253 + $0x40] sm:$0xff]
      %v272 = vld [vmem:[%s253 + $0x48] sm:$0x1]
      %v273 = vld [vmem:[%s253 + $0x50] sm:$0xff]
      %v274 = vld [vmem:[%s253 + $0x58] sm:$0x1]
      %v275 = vld [vmem:[%s253 + $0x60] sm:$0xff]
      %v276 = vld [vmem:[%s253 + $0x68] sm:$0x1]
      %v277 = vld [vmem:[%s253 + $0x70] sm:$0xff]
      %v278 = vld [vmem:[%s253 + $0x78] sm:$0x1]
      %v279 = vld [vmem:[%s253 + $0x80] sm:$0xff]
      %v280 = vld [vmem:[%s253 + $0x88] sm:$0x1]
      %v281 = vld [vmem:[%s3] sm:$0x1]
      %v283 = vlaneseq
      %v284 = vshrl.u32 %v283, 7
      %v285 = vsub.s32 0, %v284
      %v286 = vrot.slane %v281, %v285
      %v288 = vmul.f32 %v263, %v286
      %v289 = vmul.f32 %v264, %v286
      %v290 = vmul.f32 %v265, %v286
      %v291 = vmul.f32 %v266, %v286
      %v292 = vmul.f32 %v267, %v286
      %v293 = vmul.f32 %v268, %v286
      %v294 = vmul.f32 %v269, %v286
      %v295 = vmul.f32 %v270, %v286
      %v296 = vmul.f32 %v271, %v286
      %v297 = vmul.f32 %v272, %v286
      %v298 = vmul.f32 %v273, %v286
      %v299 = vmul.f32 %v274, %v286
      %v300 = vmul.f32 %v275, %v286
      %v301 = vmul.f32 %v276, %v286
      %v302 = vmul.f32 %v277, %v286
      %v303 = vmul.f32 %v278, %v286
      %v304 = vmul.f32 %v279, %v286
      %v305 = vmul.f32 %v280, %v286
      %v306 = vld [vmem:[%s4] sm:$0x1]
      %v308 = vlaneseq
      %v309 = vshrl.u32 %v308, 7
      %v310 = vsub.s32 0, %v309
      %v311 = vrot.slane %v306, %v310
      %v313 = vadd.f32 %v288, %v311
      %v314 = vadd.f32 %v289, %v311
      %v315 = vadd.f32 %v290, %v311
      %v316 = vadd.f32 %v291, %v311
      %v317 = vadd.f32 %v292, %v311
      %v318 = vadd.f32 %v293, %v311
      %v319 = vadd.f32 %v294, %v311
      %v320 = vadd.f32 %v295, %v311
      %v321 = vadd.f32 %v296, %v311
      %v322 = vadd.f32 %v297, %v311
      %v323 = vadd.f32 %v298, %v311
      %v324 = vadd.f32 %v299, %v311
      %v325 = vadd.f32 %v300, %v311
      %v326 = vadd.f32 %v301, %v311
      %v327 = vadd.f32 %v302, %v311
      %v328 = vadd.f32 %v303, %v311
      %v329 = vadd.f32 %v304, %v311
      %v330 = vadd.f32 %v305, %v311
      %vm331 = vcmp.gt.f32.partialorder %v313, 0.0
      %vm332 = vcmp.gt.f32.partialorder %v314, 0.0
      %vm333 = vcmp.gt.f32.partialorder %v315, 0.0
      %vm334 = vcmp.gt.f32.partialorder %v316, 0.0
      %vm335 = vcmp.gt.f32.partialorder %v317, 0.0
      %vm336 = vcmp.gt.f32.partialorder %v318, 0.0
      %vm337 = vcmp.gt.f32.partialorder %v319, 0.0
      %vm338 = vcmp.gt.f32.partialorder %v320, 0.0
      %vm339 = vcmp.gt.f32.partialorder %v321, 0.0
      %vm340 = vcmp.gt.f32.partialorder %v322, 0.0
      %vm341 = vcmp.gt.f32.partialorder %v323, 0.0
      %vm342 = vcmp.gt.f32.partialorder %v324, 0.0
      %vm343 = vcmp.gt.f32.partialorder %v325, 0.0
      %vm344 = vcmp.gt.f32.partialorder %v326, 0.0
      %vm345 = vcmp.gt.f32.partialorder %v327, 0.0
      %vm346 = vcmp.gt.f32.partialorder %v328, 0.0
      %vm347 = vcmp.gt.f32.partialorder %v329, 0.0
      %vm348 = vcmp.gt.f32.partialorder %v330, 0.0
      %v349 = vmul.f32 %v313, 0.2
      %v350 = vmul.f32 %v314, 0.2
      %v351 = vmul.f32 %v315, 0.2
      %v352 = vmul.f32 %v316, 0.2
      %v353 = vmul.f32 %v317, 0.2
      %v354 = vmul.f32 %v318, 0.2
      %v355 = vmul.f32 %v319, 0.2
      %v356 = vmul.f32 %v320, 0.2
      %v357 = vmul.f32 %v321, 0.2
      %v358 = vmul.f32 %v322, 0.2
      %v359 = vmul.f32 %v323, 0.2
      %v360 = vmul.f32 %v324, 0.2
      %v361 = vmul.f32 %v325, 0.2
      %v362 = vmul.f32 %v326, 0.2
      %v363 = vmul.f32 %v327, 0.2
      %v364 = vmul.f32 %v328, 0.2
      %v365 = vmul.f32 %v329, 0.2
      %v366 = vmul.f32 %v330, 0.2
      %v367 = vsel %vm331, %v313, %v349
      %v368 = vsel %vm332, %v314, %v350
      %v369 = vsel %vm333, %v315, %v351
      %v370 = vsel %vm334, %v316, %v352
      %v371 = vsel %vm335, %v317, %v353
      %v372 = vsel %vm336, %v318, %v354
      %v373 = vsel %vm337, %v319, %v355
      %v374 = vsel %vm338, %v320, %v356
      %v375 = vsel %vm339, %v321, %v357
      %v376 = vsel %vm340, %v322, %v358
      %v377 = vsel %vm341, %v323, %v359
      %v378 = vsel %vm342, %v324, %v360
      %v379 = vsel %vm343, %v325, %v361
      %v380 = vsel %vm344, %v326, %v362
      %v381 = vsel %vm345, %v327, %v363
      %v382 = vsel %vm346, %v328, %v364
      %v383 = vsel %vm347, %v329, %v365
      %v384 = vsel %vm348, %v330, %v366
      %v385 = vld [vmem:[%s1] sm:$0xff]
      %v386 = vld [vmem:[%s1 + $0x8] sm:$0xff]
      %v387 = vld [vmem:[%s1 + $0x10] sm:$0xff]
      %v388 = vld [vmem:[%s1 + $0x18] sm:$0xff]
      %v389 = vld [vmem:[%s1 + $0x20] sm:$0xff]
      %v390 = vld [vmem:[%s1 + $0x28] sm:$0xff]
      %v391 = vld [vmem:[%s1 + $0x30] sm:$0xff]
      %v392 = vld [vmem:[%s1 + $0x38] sm:$0xff]
      %vm409 = vcmask 1046528
      %v410 = vrot.slane %v367, 1
      %v411 = vrot.slane %v368, 1
      %v412 = vsel %vm409, %v410, %v411
      %v413 = vrot.slane %v369, 1
      %v414 = vrot.slane %v370, 1
      %v415 = vsel %vm409, %v413, %v414
      %v416 = vrot.slane %v371, 1
      %v417 = vrot.slane %v372, 1
      %v418 = vsel %vm409, %v416, %v417
      %v419 = vrot.slane %v373, 1
      %v420 = vrot.slane %v374, 1
      %v421 = vsel %vm409, %v419, %v420
      %v422 = vrot.slane %v375, 1
      %v423 = vrot.slane %v376, 1
      %v424 = vsel %vm409, %v422, %v423
      %v425 = vrot.slane %v377, 1
      %v426 = vrot.slane %v378, 1
      %v427 = vsel %vm409, %v425, %v426
      %v428 = vrot.slane %v379, 1
      %v429 = vrot.slane %v380, 1
      %v430 = vsel %vm409, %v428, %v429
      %v431 = vrot.slane %v381, 1
      %v432 = vrot.slane %v382, 1
      %v433 = vsel %vm409, %v431, %v432
      %v434 = vld [vmem:[%s1 + $0x40] sm:$0xff]
      %v435 = vld [vmem:[%s1 + $0x48] sm:$0xff]
      %v436 = vld [vmem:[%s1 + $0x50] sm:$0xff]
      %v437 = vld [vmem:[%s1 + $0x58] sm:$0xff]
      %v438 = vld [vmem:[%s1 + $0x60] sm:$0xff]
      %v439 = vld [vmem:[%s1 + $0x68] sm:$0xff]
      %v440 = vld [vmem:[%s1 + $0x70] sm:$0xff]
      %v441 = vld [vmem:[%s1 + $0x78] sm:$0xff]
      %vm442 = vcmask 523264
      %v443 = vsel %vm442, %v412, 0
      %v445 = vsel %vm442, %v415, 0
      %v447 = vsel %vm442, %v418, 0
      %v449 = vsel %vm442, %v421, 0
      %v451 = vsel %vm442, %v424, 0
      %v453 = vsel %vm442, %v427, 0
      %v455 = vsel %vm442, %v430, 0
      %v457 = vsel %vm442, %v433, 0
      %459 = vmatprep.subr.mxu0 0.0
      %460 = vmatpush1.msra.mxu0 0.0
      %461 = vmatprep.subr.mxu0 0.0
      %462 = vmatpush1.msra.mxu0 0.0
      %463 = vmatprep.subr.mxu0 0.0
      %464 = vmatpush1.msra.mxu0 0.0
      %465 = vmatprep.subr.mxu0 0.0
      %466 = vmatpush1.msra.mxu0 0.0
      %467 = vmatprep.subr.mxu0 0.0
      %468 = vmatpush1.msra.mxu0 0.0
      %469 = vmatprep.subr.mxu0 0.0
      %470 = vmatpush1.msra.mxu0 0.0
      %471 = vmatprep.subr.mxu0 0.0
      %472 = vmatpush1.msra.mxu0 0.0
      %473 = vmatprep.subr.mxu0 0.0
      %474 = vmatpush1.msra.mxu0 0.0
      %475 = vmatprep.subr.mxu0 0.0
      %476 = vmatpush1.msra.mxu0 %v441
      %477 = vmatprep.subr.mxu0 0.0
      %478 = vmatpush1.msra.mxu0 %v440
      %479 = vmatprep.subr.mxu0 0.0
      %480 = vmatpush1.msra.mxu0 %v439
      %481 = vmatprep.subr.mxu0 0.0
      %482 = vmatpush1.msra.mxu0 %v438
      %483 = vmatprep.subr.mxu0 0.0
      %484 = vmatpush1.msra.mxu0 %v437
      %485 = vmatprep.subr.mxu0 0.0
      %486 = vmatpush1.msra.mxu0 %v436
      %487 = vmatprep.subr.mxu0 0.0
      %488 = vmatpush1.msra.mxu0 %v435
      %489 = vmatprep.subr.mxu0 0.0
      %490 = vmatpush1.msra.mxu0 %v434
      %491 = vmatprep.subr.mxu0 0.0
      %492 = vmatpush2.msra.mxu0 0.0
      %493 = vmatprep.subr.mxu0 0.0
      %494 = vmatpush2.msra.mxu0 0.0
      %495 = vmatprep.subr.mxu0 0.0
      %496 = vmatpush2.msra.mxu0 0.0
      %497 = vmatprep.subr.mxu0 0.0
      %498 = vmatpush2.msra.mxu0 0.0
      %499 = vmatprep.subr.mxu0 0.0
      %500 = vmatpush2.msra.mxu0 0.0
      %501 = vmatprep.subr.mxu0 0.0
      %502 = vmatpush2.msra.mxu0 0.0
      %503 = vmatprep.subr.mxu0 0.0
      %504 = vmatpush2.msra.mxu0 0.0
      %505 = vmatprep.subr.mxu0 0.0
      %506 = vmatpush2.msra.mxu0 0.0
      %507 = vmatprep.subr.mxu0 0.0
      %508 = vmatpush2.msra.mxu0 0.0
      %509 = vmatprep.subr.mxu0 0.0
      %510 = vmatpush2.msra.mxu0 0.0
      %511 = vmatprep.subr.mxu0 0.0
      %512 = vmatpush2.msra.mxu0 0.0
      %513 = vmatprep.subr.mxu0 0.0
      %514 = vmatpush2.msra.mxu0 0.0
      %515 = vmatprep.subr.mxu0 0.0
      %516 = vmatpush2.msra.mxu0 0.0
      %517 = vmatprep.subr.mxu0 0.0
      %518 = vmatpush2.msra.mxu0 0.0
      %519 = vmatprep.subr.mxu0 0.0
      %520 = vmatpush2.msra.mxu0 0.0
      %521 = vmatprep.subr.mxu0 0.0
      %522 = vmatpush2.msra.mxu0 0.0
      %523 = vmatprep.mubr.f32.mxu0 0.0
      %524 = vmatmul.mubr.f32.gmra.mxu0 %v443
      %v525 = vpop.f32.mrf.mxu0
      %v526 = vadd.f32 0.0, %v525
      %v527 = vpop.f32.mrf.mxu0
      %528 = vmatprep.mubr.f32.mxu0 0.0
      %529 = vmatmul.mubr.f32.gmra.mxu0 %v445
      %v530 = vpop.f32.mrf.mxu0
      %v531 = vadd.f32 0.0, %v530
      %v532 = vpop.f32.mrf.mxu0
      %533 = vmatprep.mubr.f32.mxu0 0.0
      %534 = vmatmul.mubr.f32.gmra.mxu0 %v447
      %v535 = vpop.f32.mrf.mxu0
      %v536 = vadd.f32 0.0, %v535
      %v537 = vpop.f32.mrf.mxu0
      %538 = vmatprep.mubr.f32.mxu0 0.0
      %539 = vmatmul.mubr.f32.gmra.mxu0 %v449
      %v540 = vpop.f32.mrf.mxu0
      %v541 = vadd.f32 0.0, %v540
      %v542 = vpop.f32.mrf.mxu0
      %543 = vmatprep.mubr.f32.mxu0 0.0
      %544 = vmatmul.mubr.f32.gmra.mxu0 %v451
      %v545 = vpop.f32.mrf.mxu0
      %v546 = vadd.f32 0.0, %v545
      %v547 = vpop.f32.mrf.mxu0
      %548 = vmatprep.mubr.f32.mxu0 0.0
      %549 = vmatmul.mubr.f32.gmra.mxu0 %v453
      %v550 = vpop.f32.mrf.mxu0
      %v551 = vadd.f32 0.0, %v550
      %v552 = vpop.f32.mrf.mxu0
      %553 = vmatprep.mubr.f32.mxu0 0.0
      %554 = vmatmul.mubr.f32.gmra.mxu0 %v455
      %v555 = vpop.f32.mrf.mxu0
      %v556 = vadd.f32 0.0, %v555
      %v557 = vpop.f32.mrf.mxu0
      %558 = vmatprep.mubr.f32.mxu0 0.0
      %559 = vmatmul.mubr.f32.gmra.mxu0 %v457
      %v560 = vpop.f32.mrf.mxu0
      %v561 = vadd.f32 0.0, %v560
      %v562 = vpop.f32.mrf.mxu0
      %563 = vdwg.mxu0
      %v564 = vsel %vm442, %v367, 0
      %v566 = vsel %vm442, %v369, 0
      %v568 = vsel %vm442, %v371, 0
      %v570 = vsel %vm442, %v373, 0
      %v572 = vsel %vm442, %v375, 0
      %v574 = vsel %vm442, %v377, 0
      %v576 = vsel %vm442, %v379, 0
      %v578 = vsel %vm442, %v381, 0
      %580 = vmatprep.subr.mxu0 0.0
      %581 = vmatpush1.msra.mxu0 0.0
      %582 = vmatprep.subr.mxu0 0.0
      %583 = vmatpush1.msra.mxu0 0.0
      %584 = vmatprep.subr.mxu0 0.0
      %585 = vmatpush1.msra.mxu0 0.0
      %586 = vmatprep.subr.mxu0 0.0
      %587 = vmatpush1.msra.mxu0 0.0
      %588 = vmatprep.subr.mxu0 0.0
      %589 = vmatpush1.msra.mxu0 0.0
      %590 = vmatprep.subr.mxu0 0.0
      %591 = vmatpush1.msra.mxu0 0.0
      %592 = vmatprep.subr.mxu0 0.0
      %593 = vmatpush1.msra.mxu0 0.0
      %594 = vmatprep.subr.mxu0 0.0
      %595 = vmatpush1.msra.mxu0 0.0
      %596 = vmatprep.subr.mxu0 0.0
      %597 = vmatpush1.msra.mxu0 %v392
      %598 = vmatprep.subr.mxu0 0.0
      %599 = vmatpush1.msra.mxu0 %v391
      %600 = vmatprep.subr.mxu0 0.0
      %601 = vmatpush1.msra.mxu0 %v390
      %602 = vmatprep.subr.mxu0 0.0
      %603 = vmatpush1.msra.mxu0 %v389
      %604 = vmatprep.subr.mxu0 0.0
      %605 = vmatpush1.msra.mxu0 %v388
      %606 = vmatprep.subr.mxu0 0.0
      %607 = vmatpush1.msra.mxu0 %v387
      %608 = vmatprep.subr.mxu0 0.0
      %609 = vmatpush1.msra.mxu0 %v386
      %610 = vmatprep.subr.mxu0 0.0
      %611 = vmatpush1.msra.mxu0 %v385
      %612 = vmatprep.subr.mxu0 0.0
      %613 = vmatpush2.msra.mxu0 0.0
      %614 = vmatprep.subr.mxu0 0.0
      %615 = vmatpush2.msra.mxu0 0.0
      %616 = vmatprep.subr.mxu0 0.0
      %617 = vmatpush2.msra.mxu0 0.0
      %618 = vmatprep.subr.mxu0 0.0
      %619 = vmatpush2.msra.mxu0 0.0
      %620 = vmatprep.subr.mxu0 0.0
      %621 = vmatpush2.msra.mxu0 0.0
      %622 = vmatprep.subr.mxu0 0.0
      %623 = vmatpush2.msra.mxu0 0.0
      %624 = vmatprep.subr.mxu0 0.0
      %625 = vmatpush2.msra.mxu0 0.0
      %626 = vmatprep.subr.mxu0 0.0
      %627 = vmatpush2.msra.mxu0 0.0
      %628 = vmatprep.subr.mxu0 0.0
      %629 = vmatpush2.msra.mxu0 0.0
      %630 = vmatprep.subr.mxu0 0.0
      %631 = vmatpush2.msra.mxu0 0.0
      %632 = vmatprep.subr.mxu0 0.0
      %633 = vmatpush2.msra.mxu0 0.0
      %634 = vmatprep.subr.mxu0 0.0
      %635 = vmatpush2.msra.mxu0 0.0
      %636 = vmatprep.subr.mxu0 0.0
      %637 = vmatpush2.msra.mxu0 0.0
      %638 = vmatprep.subr.mxu0 0.0
      %639 = vmatpush2.msra.mxu0 0.0
      %640 = vmatprep.subr.mxu0 0.0
      %641 = vmatpush2.msra.mxu0 0.0
      %642 = vmatprep.subr.mxu0 0.0
      %643 = vmatpush2.msra.mxu0 0.0
      %644 = vmatprep.mubr.f32.mxu0 0.0
      %645 = vmatmul.mubr.f32.gmra.mxu0 %v564
      %v646 = vpop.f32.mrf.mxu0
      %v647 = vadd.f32 %v526, %v646
      %v648 = vpop.f32.mrf.mxu0
      %649 = vmatprep.mubr.f32.mxu0 0.0
      %650 = vmatmul.mubr.f32.gmra.mxu0 %v566
      %v651 = vpop.f32.mrf.mxu0
      %v652 = vadd.f32 %v531, %v651
      %v653 = vpop.f32.mrf.mxu0
      %654 = vmatprep.mubr.f32.mxu0 0.0
      %655 = vmatmul.mubr.f32.gmra.mxu0 %v568
      %v656 = vpop.f32.mrf.mxu0
      %v657 = vadd.f32 %v536, %v656
      %v658 = vpop.f32.mrf.mxu0
      %659 = vmatprep.mubr.f32.mxu0 0.0
      %660 = vmatmul.mubr.f32.gmra.mxu0 %v570
      %v661 = vpop.f32.mrf.mxu0
      %v662 = vadd.f32 %v541, %v661
      %v663 = vpop.f32.mrf.mxu0
      %664 = vmatprep.mubr.f32.mxu0 0.0
      %665 = vmatmul.mubr.f32.gmra.mxu0 %v572
      %v666 = vpop.f32.mrf.mxu0
      %v667 = vadd.f32 %v546, %v666
      %v668 = vpop.f32.mrf.mxu0
      %669 = vmatprep.mubr.f32.mxu0 0.0
      %670 = vmatmul.mubr.f32.gmra.mxu0 %v574
      %v671 = vpop.f32.mrf.mxu0
      %v672 = vadd.f32 %v551, %v671
      %v673 = vpop.f32.mrf.mxu0
      %674 = vmatprep.mubr.f32.mxu0 0.0
      %675 = vmatmul.mubr.f32.gmra.mxu0 %v576
      %v676 = vpop.f32.mrf.mxu0
      %v677 = vadd.f32 %v556, %v676
      %v678 = vpop.f32.mrf.mxu0
      %679 = vmatprep.mubr.f32.mxu0 0.0
      %680 = vmatmul.mubr.f32.gmra.mxu0 %v578
      %v681 = vpop.f32.mrf.mxu0
      %v682 = vadd.f32 %v561, %v681
      %v683 = vpop.f32.mrf.mxu0
      %684 = vdwg.mxu0
      %v685 = vld [vmem:[%s1 + $0x80] sm:$0xff]
      %v686 = vld [vmem:[%s1 + $0x88] sm:$0xff]
      %v687 = vld [vmem:[%s1 + $0x90] sm:$0xff]
      %v688 = vld [vmem:[%s1 + $0x98] sm:$0xff]
      %v689 = vld [vmem:[%s1 + $0xa0] sm:$0xff]
      %v690 = vld [vmem:[%s1 + $0xa8] sm:$0xff]
      %v691 = vld [vmem:[%s1 + $0xb0] sm:$0xff]
      %v692 = vld [vmem:[%s1 + $0xb8] sm:$0xff]
      %v694 = vsel %vm442, %v383, 0
      %696 = vmatprep.subr.mxu0 0.0
      %697 = vmatpush1.msra.mxu0 0.0
      %698 = vmatprep.subr.mxu0 0.0
      %699 = vmatpush1.msra.mxu0 0.0
      %700 = vmatprep.subr.mxu0 0.0
      %701 = vmatpush1.msra.mxu0 0.0
      %702 = vmatprep.subr.mxu0 0.0
      %703 = vmatpush1.msra.mxu0 0.0
      %704 = vmatprep.subr.mxu0 0.0
      %705 = vmatpush1.msra.mxu0 0.0
      %706 = vmatprep.subr.mxu0 0.0
      %707 = vmatpush1.msra.mxu0 0.0
      %708 = vmatprep.subr.mxu0 0.0
      %709 = vmatpush1.msra.mxu0 0.0
      %710 = vmatprep.subr.mxu0 0.0
      %711 = vmatpush1.msra.mxu0 0.0
      %712 = vmatprep.subr.mxu0 0.0
      %713 = vmatpush1.msra.mxu0 %v692
      %714 = vmatprep.subr.mxu0 0.0
      %715 = vmatpush1.msra.mxu0 %v691
      %716 = vmatprep.subr.mxu0 0.0
      %717 = vmatpush1.msra.mxu0 %v690
      %718 = vmatprep.subr.mxu0 0.0
      %719 = vmatpush1.msra.mxu0 %v689
      %720 = vmatprep.subr.mxu0 0.0
      %721 = vmatpush1.msra.mxu0 %v688
      %722 = vmatprep.subr.mxu0 0.0
      %723 = vmatpush1.msra.mxu0 %v687
      %724 = vmatprep.subr.mxu0 0.0
      %725 = vmatpush1.msra.mxu0 %v686
      %726 = vmatprep.subr.mxu0 0.0
      %727 = vmatpush1.msra.mxu0 %v685
      %728 = vmatprep.subr.mxu0 0.0
      %729 = vmatpush2.msra.mxu0 0.0
      %730 = vmatprep.subr.mxu0 0.0
      %731 = vmatpush2.msra.mxu0 0.0
      %732 = vmatprep.subr.mxu0 0.0
      %733 = vmatpush2.msra.mxu0 0.0
      %734 = vmatprep.subr.mxu0 0.0
      %735 = vmatpush2.msra.mxu0 0.0
      %736 = vmatprep.subr.mxu0 0.0
      %737 = vmatpush2.msra.mxu0 0.0
      %738 = vmatprep.subr.mxu0 0.0
      %739 = vmatpush2.msra.mxu0 0.0
      %740 = vmatprep.subr.mxu0 0.0
      %741 = vmatpush2.msra.mxu0 0.0
      %742 = vmatprep.subr.mxu0 0.0
      %743 = vmatpush2.msra.mxu0 0.0
      %744 = vmatprep.subr.mxu0 0.0
      %745 = vmatpush2.msra.mxu0 0.0
      %746 = vmatprep.subr.mxu0 0.0
      %747 = vmatpush2.msra.mxu0 0.0
      %748 = vmatprep.subr.mxu0 0.0
      %749 = vmatpush2.msra.mxu0 0.0
      %750 = vmatprep.subr.mxu0 0.0
      %751 = vmatpush2.msra.mxu0 0.0
      %752 = vmatprep.subr.mxu0 0.0
      %753 = vmatpush2.msra.mxu0 0.0
      %754 = vmatprep.subr.mxu0 0.0
      %755 = vmatpush2.msra.mxu0 0.0
      %756 = vmatprep.subr.mxu0 0.0
      %757 = vmatpush2.msra.mxu0 0.0
      %758 = vmatprep.subr.mxu0 0.0
      %759 = vmatpush2.msra.mxu0 0.0
      %760 = vmatprep.mubr.f32.mxu0 0.0
      %761 = vmatmul.mubr.f32.gmra.mxu0 %v566
      %v762 = vpop.f32.mrf.mxu0
      %v763 = vadd.f32 0.0, %v762
      %v764 = vpop.f32.mrf.mxu0
      %765 = vmatprep.mubr.f32.mxu0 0.0
      %766 = vmatmul.mubr.f32.gmra.mxu0 %v568
      %v767 = vpop.f32.mrf.mxu0
      %v768 = vadd.f32 0.0, %v767
      %v769 = vpop.f32.mrf.mxu0
      %770 = vmatprep.mubr.f32.mxu0 0.0
      %771 = vmatmul.mubr.f32.gmra.mxu0 %v570
      %v772 = vpop.f32.mrf.mxu0
      %v773 = vadd.f32 0.0, %v772
      %v774 = vpop.f32.mrf.mxu0
      %775 = vmatprep.mubr.f32.mxu0 0.0
      %776 = vmatmul.mubr.f32.gmra.mxu0 %v572
      %v777 = vpop.f32.mrf.mxu0
      %v778 = vadd.f32 0.0, %v777
      %v779 = vpop.f32.mrf.mxu0
      %780 = vmatprep.mubr.f32.mxu0 0.0
      %781 = vmatmul.mubr.f32.gmra.mxu0 %v574
      %v782 = vpop.f32.mrf.mxu0
      %v783 = vadd.f32 0.0, %v782
      %v784 = vpop.f32.mrf.mxu0
      %785 = vmatprep.mubr.f32.mxu0 0.0
      %786 = vmatmul.mubr.f32.gmra.mxu0 %v576
      %v787 = vpop.f32.mrf.mxu0
      %v788 = vadd.f32 0.0, %v787
      %v789 = vpop.f32.mrf.mxu0
      %790 = vmatprep.mubr.f32.mxu0 0.0
      %791 = vmatmul.mubr.f32.gmra.mxu0 %v578
      %v792 = vpop.f32.mrf.mxu0
      %v793 = vadd.f32 0.0, %v792
      %v794 = vpop.f32.mrf.mxu0
      %795 = vmatprep.mubr.f32.mxu0 0.0
      %796 = vmatmul.mubr.f32.gmra.mxu0 %v694
      %v797 = vpop.f32.mrf.mxu0
      %v798 = vadd.f32 0.0, %v797
      %v799 = vpop.f32.mrf.mxu0
      %800 = vdwg.mxu0
      %v801 = vadd.f32 %v647, %v763
      %v802 = vadd.f32 %v652, %v768
      %v803 = vadd.f32 %v657, %v773
      %v804 = vadd.f32 %v662, %v778
      %v805 = vadd.f32 %v667, %v783
      %v806 = vadd.f32 %v672, %v788
      %v807 = vadd.f32 %v677, %v793
      %v808 = vadd.f32 %v682, %v798
      %v810 = vrot.slane %v383, 1
      %v811 = vrot.slane %v384, 1
      %v812 = vsel %vm409, %v810, %v811
      %v813 = vld [vmem:[%s1 + $0xc0] sm:$0xff]
      %v814 = vld [vmem:[%s1 + $0xc8] sm:$0xff]
      %v815 = vld [vmem:[%s1 + $0xd0] sm:$0xff]
      %v816 = vld [vmem:[%s1 + $0xd8] sm:$0xff]
      %v817 = vld [vmem:[%s1 + $0xe0] sm:$0xff]
      %v818 = vld [vmem:[%s1 + $0xe8] sm:$0xff]
      %v819 = vld [vmem:[%s1 + $0xf0] sm:$0xff]
      %v820 = vld [vmem:[%s1 + $0xf8] sm:$0xff]
      %v821 = vsel %vm442, %v812, 0
      %823 = vmatprep.subr.mxu0 0.0
      %824 = vmatpush1.msra.mxu0 0.0
      %825 = vmatprep.subr.mxu0 0.0
      %826 = vmatpush1.msra.mxu0 0.0
      %827 = vmatprep.subr.mxu0 0.0
      %828 = vmatpush1.msra.mxu0 0.0
      %829 = vmatprep.subr.mxu0 0.0
      %830 = vmatpush1.msra.mxu0 0.0
      %831 = vmatprep.subr.mxu0 0.0
      %832 = vmatpush1.msra.mxu0 0.0
      %833 = vmatprep.subr.mxu0 0.0
      %834 = vmatpush1.msra.mxu0 0.0
      %835 = vmatprep.subr.mxu0 0.0
      %836 = vmatpush1.msra.mxu0 0.0
      %837 = vmatprep.subr.mxu0 0.0
      %838 = vmatpush1.msra.mxu0 0.0
      %839 = vmatprep.subr.mxu0 0.0
      %840 = vmatpush1.msra.mxu0 %v820
      %841 = vmatprep.subr.mxu0 0.0
      %842 = vmatpush1.msra.mxu0 %v819
      %843 = vmatprep.subr.mxu0 0.0
      %844 = vmatpush1.msra.mxu0 %v818
      %845 = vmatprep.subr.mxu0 0.0
      %846 = vmatpush1.msra.mxu0 %v817
      %847 = vmatprep.subr.mxu0 0.0
      %848 = vmatpush1.msra.mxu0 %v816
      %849 = vmatprep.subr.mxu0 0.0
      %850 = vmatpush1.msra.mxu0 %v815
      %851 = vmatprep.subr.mxu0 0.0
      %852 = vmatpush1.msra.mxu0 %v814
      %853 = vmatprep.subr.mxu0 0.0
      %854 = vmatpush1.msra.mxu0 %v813
      %855 = vmatprep.subr.mxu0 0.0
      %856 = vmatpush2.msra.mxu0 0.0
      %857 = vmatprep.subr.mxu0 0.0
      %858 = vmatpush2.msra.mxu0 0.0
      %859 = vmatprep.subr.mxu0 0.0
      %860 = vmatpush2.msra.mxu0 0.0
      %861 = vmatprep.subr.mxu0 0.0
      %862 = vmatpush2.msra.mxu0 0.0
      %863 = vmatprep.subr.mxu0 0.0
      %864 = vmatpush2.msra.mxu0 0.0
      %865 = vmatprep.subr.mxu0 0.0
      %866 = vmatpush2.msra.mxu0 0.0
      %867 = vmatprep.subr.mxu0 0.0
      %868 = vmatpush2.msra.mxu0 0.0
      %869 = vmatprep.subr.mxu0 0.0
      %870 = vmatpush2.msra.mxu0 0.0
      %871 = vmatprep.subr.mxu0 0.0
      %872 = vmatpush2.msra.mxu0 0.0
      %873 = vmatprep.subr.mxu0 0.0
      %874 = vmatpush2.msra.mxu0 0.0
      %875 = vmatprep.subr.mxu0 0.0
      %876 = vmatpush2.msra.mxu0 0.0
      %877 = vmatprep.subr.mxu0 0.0
      %878 = vmatpush2.msra.mxu0 0.0
      %879 = vmatprep.subr.mxu0 0.0
      %880 = vmatpush2.msra.mxu0 0.0
      %881 = vmatprep.subr.mxu0 0.0
      %882 = vmatpush2.msra.mxu0 0.0
      %883 = vmatprep.subr.mxu0 0.0
      %884 = vmatpush2.msra.mxu0 0.0
      %885 = vmatprep.subr.mxu0 0.0
      %886 = vmatpush2.msra.mxu0 0.0
      %887 = vmatprep.mubr.f32.mxu0 0.0
      %888 = vmatmul.mubr.f32.gmra.mxu0 %v445
      %v889 = vpop.f32.mrf.mxu0
      %v890 = vadd.f32 0.0, %v889
      %v891 = vpop.f32.mrf.mxu0
      %892 = vmatprep.mubr.f32.mxu0 0.0
      %893 = vmatmul.mubr.f32.gmra.mxu0 %v447
      %v894 = vpop.f32.mrf.mxu0
      %v895 = vadd.f32 0.0, %v894
      %v896 = vpop.f32.mrf.mxu0
      %897 = vmatprep.mubr.f32.mxu0 0.0
      %898 = vmatmul.mubr.f32.gmra.mxu0 %v449
      %v899 = vpop.f32.mrf.mxu0
      %v900 = vadd.f32 0.0, %v899
      %v901 = vpop.f32.mrf.mxu0
      %902 = vmatprep.mubr.f32.mxu0 0.0
      %903 = vmatmul.mubr.f32.gmra.mxu0 %v451
      %v904 = vpop.f32.mrf.mxu0
      %v905 = vadd.f32 0.0, %v904
      %v906 = vpop.f32.mrf.mxu0
      %907 = vmatprep.mubr.f32.mxu0 0.0
      %908 = vmatmul.mubr.f32.gmra.mxu0 %v453
      %v909 = vpop.f32.mrf.mxu0
      %v910 = vadd.f32 0.0, %v909
      %v911 = vpop.f32.mrf.mxu0
      %912 = vmatprep.mubr.f32.mxu0 0.0
      %913 = vmatmul.mubr.f32.gmra.mxu0 %v455
      %v914 = vpop.f32.mrf.mxu0
      %v915 = vadd.f32 0.0, %v914
      %v916 = vpop.f32.mrf.mxu0
      %917 = vmatprep.mubr.f32.mxu0 0.0
      %918 = vmatmul.mubr.f32.gmra.mxu0 %v457
      %v919 = vpop.f32.mrf.mxu0
      %v920 = vadd.f32 0.0, %v919
      %v921 = vpop.f32.mrf.mxu0
      %922 = vmatprep.mubr.f32.mxu0 0.0
      %923 = vmatmul.mubr.f32.gmra.mxu0 %v821
      %v924 = vpop.f32.mrf.mxu0
      %v925 = vadd.f32 0.0, %v924
      %v926 = vpop.f32.mrf.mxu0
      %927 = vdwg.mxu0
      %v928 = vadd.f32 %v801, %v890
      %v929 = vadd.f32 %v802, %v895
      %v930 = vadd.f32 %v803, %v900
      %v931 = vadd.f32 %v804, %v905
      %v932 = vadd.f32 %v805, %v910
      %v933 = vadd.f32 %v806, %v915
      %v934 = vadd.f32 %v807, %v920
      %v935 = vadd.f32 %v808, %v925
      %v936 = vld [vmem:[%s2] sm:$0x1]
      %v938 = vlaneseq
      %v939 = vshrl.u32 %v938, 7
      %v940 = vsub.s32 0, %v939
      %v941 = vrot.slane %v936, %v940
      %v943 = vadd.f32 %v928, %v941
      %v944 = vadd.f32 %v929, %v941
      %v945 = vadd.f32 %v930, %v941
      %v946 = vadd.f32 %v931, %v941
      %v947 = vadd.f32 %v932, %v941
      %v948 = vadd.f32 %v933, %v941
      %v949 = vadd.f32 %v934, %v941
      %v950 = vadd.f32 %v935, %v941
      %vm951 = vcmask 261120
      %952 = vst.msk [vmem:[%s258] sm:$0xff] %vm951, %v943
      %953 = vst.msk [vmem:[%s258 + $0x8] sm:$0xff] %vm951, %v944
      %954 = vst.msk [vmem:[%s258 + $0x10] sm:$0xff] %vm951, %v945
      %955 = vst.msk [vmem:[%s258 + $0x18] sm:$0xff] %vm951, %v946
      %956 = vst.msk [vmem:[%s258 + $0x20] sm:$0xff] %vm951, %v947
      %957 = vst.msk [vmem:[%s258 + $0x28] sm:$0xff] %vm951, %v948
      %958 = vst.msk [vmem:[%s258 + $0x30] sm:$0xff] %vm951, %v949
      %959 = vst.msk [vmem:[%s258 + $0x38] sm:$0xff] %vm951, %v950
      %v960 = vsel %vm951, %v943, 0.0
      %v961 = vsel %vm951, %v944, 0.0
      %v962 = vadd.f32 %v960, %v961
      %v963 = vsel %vm951, %v945, 0.0
      %v964 = vadd.f32 %v962, %v963
      %v965 = vsel %vm951, %v946, 0.0
      %v966 = vadd.f32 %v964, %v965
      %v967 = vsel %vm951, %v947, 0.0
      %v968 = vadd.f32 %v966, %v967
      %v969 = vsel %vm951, %v948, 0.0
      %v970 = vadd.f32 %v968, %v969
      %v971 = vsel %vm951, %v949, 0.0
      %v972 = vadd.f32 %v970, %v971
      %v973 = vsel %vm951, %v950, 0.0
      %v974 = vadd.f32 %v972, %v973
      %v975 = vrot.slane %v974, 4
      %v976 = vadd.f32 %v974, %v975
      %v977 = vrot.slane %v976, 2
      %v978 = vadd.f32 %v976, %v977
      %v979 = vrot.slane %v978, 1
      %v980 = vadd.f32 %v978, %v979
      %v981 = vmul.f32 %v943, %v943
      %v982 = vmul.f32 %v944, %v944
      %v983 = vmul.f32 %v945, %v945
      %v984 = vmul.f32 %v946, %v946
      %v985 = vmul.f32 %v947, %v947
      %v986 = vmul.f32 %v948, %v948
      %v987 = vmul.f32 %v949, %v949
      %v988 = vmul.f32 %v950, %v950
      %v989 = vsel %vm951, %v981, 0.0
      %v990 = vsel %vm951, %v982, 0.0
      %v991 = vadd.f32 %v989, %v990
      %v992 = vsel %vm951, %v983, 0.0
      %v993 = vadd.f32 %v991, %v992
      %v994 = vsel %vm951, %v984, 0.0
      %v995 = vadd.f32 %v993, %v994
      %v996 = vsel %vm951, %v985, 0.0
      %v997 = vadd.f32 %v995, %v996
      %v998 = vsel %vm951, %v986, 0.0
      %v999 = vadd.f32 %v997, %v998
      %v1000 = vsel %vm951, %v987, 0.0
      %v1001 = vadd.f32 %v999, %v1000
      %v1002 = vsel %vm951, %v988, 0.0
      %v1003 = vadd.f32 %v1001, %v1002
      %v1004 = vrot.slane %v1003, 4
      %v1005 = vadd.f32 %v1003, %v1004
      %v1006 = vrot.slane %v1005, 2
      %v1007 = vadd.f32 %v1005, %v1006
      %v1008 = vrot.slane %v1007, 1
      %v1009 = vadd.f32 %v1007, %v1008
      %vm1010 = vcmask 1040384
      %v1011 = vsel %vm1010, %v980, %v1009
      %vm1012 = vcmask 254976
      %1013 = vst.msk [vmem:[%s262] sm:$0x3] %vm1012, %v1011
      %p1014 = scmp.lt.s32.totalorder %s18, 1
      %s1015 = scalar_select %p1014, %s18, 1
      %s1016 = smul.addr %s1015, 8
      %s1017 = smul.addr %s1016, 8
      %s1018 = scalar_lea.vmem %s5, %s1017
      %p1019 = scmp.lt.s32.totalorder %s18, 1
      %s1020 = scalar_select %p1019, %s18, 1
      %s1021 = smul.addr %s1020, 2
      %s1022 = scalar_lea.vmem %s6, %s1021
      // Predicated region
      $region41: #{discriminator_forward.4} parent=39 // pred_check
        %p1023 = pneg %p146
      $region42: #{discriminator_forward.4} parent=39 // pred_check_branch
        %1025 = sbr.rel (%p1023) target = $region44
      $region43: #{discriminator_forward.4} parent=39 // pred_region
        _
      $region44: #{discriminator_forward.4} parent=39 // pred_fallthru
        _
      // Predicated region
      $region45: #{discriminator_forward.4} parent=39 // pred_check
        %p1026 = pneg %p172
      $region46: #{discriminator_forward.4} parent=39 // pred_check_branch
        %1028 = sbr.rel (%p1026) target = $region48
      $region47: #{discriminator_forward.4} parent=39 // pred_region
        _
      $region48: #{discriminator_forward.4} parent=39 // pred_fallthru
        _
    $region40: #{discriminator_forward.4} parent=5 // pred_fallthru
      _
    %p1029 = scmp.le.s32.totalorder 2, %s13
    // Predicated region
    $region49: #{discriminator_forward.4} parent=5 // pred_check
      %p1030 = pneg %p1029
    $region50: #{discriminator_forward.4} parent=5 // pred_check_branch
      %1032 = sbr.rel (%p1030) target = $region52
    $region51: #{discriminator_forward.4} parent=5 // pred_region
      %s1033 = ssub.s32 %s13, 2
      // Predicated region
      $region53: #{discriminator_forward.4} parent=51 // pred_check
        %p1034 = pneg %p152
      $region54: #{discriminator_forward.4} parent=51 // pred_check_branch
        %1036 = sbr.rel (%p1034) target = $region56
      $region55: #{discriminator_forward.4} parent=51 // pred_region
        %p1037 = scmp.lt.s32.totalorder %s19, 1
        %s1038 = scalar_select %p1037, %s19, 1
        %s1039 = smul.addr %s1038, 8
        %s1040 = smul.addr %s1039, 8
        %s1041 = scalar_lea.vmem %s5, %s1040
      $region56: #{discriminator_forward.4} parent=51 // pred_fallthru
        _
      // Predicated region
      $region57: #{discriminator_forward.4} parent=51 // pred_check
        %p1042 = pneg %p178
      $region58: #{discriminator_forward.4} parent=51 // pred_check_branch
        %1044 = sbr.rel (%p1042) target = $region60
      $region59: #{discriminator_forward.4} parent=51 // pred_region
        %p1045 = scmp.lt.s32.totalorder %s19, 1
        %s1046 = scalar_select %p1045, %s19, 1
        %s1047 = smul.addr %s1046, 2
        %s1048 = scalar_lea.vmem %s6, %s1047
      $region60: #{discriminator_forward.4} parent=51 // pred_fallthru
        _
    $region52: #{discriminator_forward.4} parent=5 // pred_fallthru
      _
  $region6: #{discriminator_forward.4} parent=0 // loop_footer
    %s17 = sadd.s32 1, %s13
  $region7: #{discriminator_forward.4} parent=0 // loop_footer_branch
    %12 = sbr.rel target = $region3
  $region8: #{discriminator_forward.4} parent=0 // loop_exit
    _

// kernel: tile.17
$region0: #{tile.17}
  #allocation0 [shape = 's32[1]{0}', space=sflag, size = 0x4, scoped, tag = 'scoped memory for tile.17']
  %s0 = inlined_call_operand.vmem [shape: f32[32], index: 0, kind: input, shape index: {}]
  %s1 = inlined_call_operand.vmem [shape: f32[4,32], index: 1, kind: output, shape index: {}]
  // Predicated region
  $region2: #{tile.17} parent=0 // pred_check
    _
  $region3: #{tile.17} parent=0 // pred_check_branch
    %3 = sbr.rel (0) target = $region5
  $region4: #{tile.17} parent=0 // pred_region
    _
  $region5: #{tile.17} parent=0 // pred_fallthru
    _
  %v4 = vld [vmem:[%s0] ss:$0 sm:$0xff]
  %5 = vst [vmem:[%s1] sm:$0xf] %v4

// kernel: tile.18
$region0: #{tile.18}
  %s0 = inlined_call_operand.vmem [shape: f32[4,32], index: 0, kind: input, shape index: {}]
  %s1 = inlined_call_operand.vmem [shape: f32[1,1,128], index: 1, kind: output, shape index: {}]
  $region1: #{tile.18} parent=0
    #allocation0 [shape = 'u8[4096]{0}', space=vmem, size = 0x1000, scoped, tag = 'scoped mem for output reshape']
    #allocation1 [shape = 'u8[4096]{0}', space=vmem, size = 0x1000, scoped, tag = 'scoped mem for input reshape']
    %s3 = sshll.u32 1, 4
    %s4 = ssub.s32 %s3, 1
    %v5 = vld [vmem:[%s0] sm:%s4]
    %6 = vst [vmem:[#allocation1] sm:%s4] %v5
    %v7 = vld [vmem:[#allocation1] sm:$0x1]
    %vm8 = vcmask 261120
    %9 = vst.msk [vmem:[#allocation0] sm:$0x1] %vm8, %v7
    %s10 = scalar_lea.vmem [#allocation1], 3
    %v11 = vld [vmem:[%s10] sm:$0x1]
    %12 = vrot.lane.b32.xlu0 %v11, 96
    %v13 = vpop.permute.xlu0 %12
    %vm14 = vcmask 1048320
    %15 = vst.msk [vmem:[#allocation0] sm:$0x1] %vm14, %v13
    %s16 = scalar_lea.vmem [#allocation1], 2
    %v17 = vld [vmem:[%s16] sm:$0x1]
    %18 = vrot.lane.b32.xlu0 %v17, 64
    %v19 = vpop.permute.xlu0 %18
    %vm20 = vcmask 785920
    %21 = vst.msk [vmem:[#allocation0] sm:$0x1] %vm20, %v19
    %s22 = scalar_lea.vmem [#allocation1], 1
    %v23 = vld [vmem:[%s22] sm:$0x1]
    %24 = vrot.lane.b32.xlu0 %v23, 32
    %v25 = vpop.permute.xlu0 %24
    %vm26 = vcmask 523520
    %27 = vst.msk [vmem:[#allocation0] sm:$0x1] %vm26, %v25
    %s29 = sshll.u32 1, 1
    %s30 = ssub.s32 %s29, 1
    %v32 = vld [vmem:[#allocation0] sm:%s30]
    %s33 = sshll.u32 1, 1
    %s34 = ssub.s32 %s33, 1
    %35 = vst [vmem:[%s1] sm:%s34] %v32

// kernel: discriminator_forward.5
$region0: #{discriminator_forward.5}
  #allocation0 [shape = 'u32[]', space=smem, size = 0x4, offset = 0x4, fixed_abs, tag = 'smem constant byte address 0x4 - core index']
  #allocation1 [shape = 'u32[144,128]{1,0:T(1,128)}', space=vmem, size = 0x12000, scoped, tag = 'internal scratch']
  %s0 = inlined_call_operand.vmem [shape: f32[2,5,5,128], index: 0, kind: input, shape index: {}]
  %s1 = inlined_call_operand.vmem [shape: f32[512,64], index: 1, kind: input, shape index: {}]
  %s2 = inlined_call_operand.vmem [shape: f32[1,64], index: 2, kind: input, shape index: {}]
  %s3 = inlined_call_operand.vmem [shape: f32[1,1,128], index: 3, kind: input, shape index: {}]
  %s4 = inlined_call_operand.vmem [shape: f32[1,1,128], index: 4, kind: input, shape index: {}]
  %s5 = inlined_call_operand.vmem [shape: f32[2,16,64], index: 5, kind: output, shape index: {0}]
  %s6 = inlined_call_operand.vmem [shape: f32[2,2,64], index: 6, kind: output, shape index: {1}]
  %7 = xla_tuple %s5, %s6
  %s8 = sld [smem:[#allocation0]]
  $region61: #{discriminator_forward.5} parent=0
    _
  %s10 = ssub.s32 1, %s8
  %s11 = scalar_select 0, %s10, %s8
  loop: start=0, step=1, limit=4
  $region2: #{discriminator_forward.5} parent=0 // loop_pre_header
    _
  $region3: #{discriminator_forward.5} parent=0 // loop_header
    %s13 = sphi 0, %s17
    %p14 = scmp.ge.s32.totalorder %s13, 4
    %s23 = sphi 0, %s25
    %s26 = sphi 0, %s23
    %s27 = sphi 0, %s26
    %s43 = sphi 0, %s27
    %s47 = sphi 0, %s47
    %s49 = sphi 0, %s47
    %s50 = sphi 0, %s49
    %s64 = sphi 0, %s50
    %s68 = sphi 0, %s68
    %s70 = sphi 0, %s68
    %s71 = sphi 0, %s70
    %s85 = sphi 0, %s71
    %s89 = sphi 0, %s89
    %s91 = sphi 0, %s89
    %s92 = sphi 0, %s91
    %s106 = sphi 0, %s92
    %s110 = sphi 0, %s110
    %s112 = sphi 0, %s110
    %s113 = sphi 0, %s112
    %s127 = sphi 0, %s113
    %s133 = sphi 0, %s135
    %s136 = sphi 0, %s133
    %s137 = sphi 0, %s136
    %s153 = sphi 0, %s137
    %s159 = sphi 0, %s161
    %s162 = sphi 0, %s159
    %s163 = sphi 0, %s162
    %s179 = sphi 0, %s163
  $region4: #{discriminator_forward.5} parent=0 // loop_header_branch
    %16 = sbr.rel (%p14) target = $region8
  $region5: #{discriminator_forward.5} parent=0 // loop_body
    %s18 = ssub.s32 %s13, 1
    %s19 = ssub.s32 %s13, 2
    %s20 = sadd.s32 %s13, 1
    %s21 = ssub.s32 %s13, %s20
    %p22 = scmp.eq.s32.totalorder %s21, 0
    %s24 = sadd.s32 %s23, 1
    %s25 = scalar_select %p22, %s23, %s24
    %p28 = pneg %p22
    %p29 = scmp.eq.s32.totalorder %s13, 1
    %p30 = por %p28, %p29
    %p31 = scmp.ne.s32.totalorder %s23, %s26
    %p32 = scmp.eq.s32.totalorder %s13, 0
    %p33 = por %p31, %p32
    %p34 = scmp.ne.s32.totalorder %s23, %s26
    %p35 = scmp.eq.s32.totalorder %s18, 1
    %p36 = por %p34, %p35
    %p37 = scmp.ne.s32.totalorder %s26, %s27
    %p38 = scmp.eq.s32.totalorder %s18, 0
    %p39 = por %p37, %p38
    %p40 = scmp.ne.s32.totalorder %s26, %s27
    %p41 = scmp.eq.s32.totalorder %s19, 1
    %p42 = por %p40, %p41
    %p44 = scmp.ne.s32.totalorder %s27, %s43
    %p45 = scmp.eq.s32.totalorder %s19, 0
    %p46 = por %p44, %p45
    %s48 = sadd.s32 %s47, 1
    %p51 = scmp.eq.s32.totalorder %s13, 1
    %p52 = scmp.ne.s32.totalorder %s47, %s49
    %p53 = scmp.eq.s32.totalorder %s13, 0
    %p54 = por %p52, %p53
    %p55 = scmp.ne.s32.totalorder %s47, %s49
    %p56 = scmp.eq.s32.totalorder %s18, 1
    %p57 = por %p55, %p56
    %p58 = scmp.ne.s32.totalorder %s49, %s50
    %p59 = scmp.eq.s32.totalorder %s18, 0
    %p60 = por %p58, %p59
    %p61 = scmp.ne.s32.totalorder %s49, %s50
    %p62 = scmp.eq.s32.totalorder %s19, 1
    %p63 = por %p61, %p62
    %p65 = scmp.ne.s32.totalorder %s50, %s64
    %p66 = scmp.eq.s32.totalorder %s19, 0
    %p67 = por %p65, %p66
    %s69 = sadd.s32 %s68, 1
    %p72 = scmp.eq.s32.totalorder %s13, 1
    %p73 = scmp.ne.s32.totalorder %s68, %s70
    %p74 = scmp.eq.s32.totalorder %s13, 0
    %p75 = por %p73, %p74
    %p76 = scmp.ne.s32.totalorder %s68, %s70
    %p77 = scmp.eq.s32.totalorder %s18, 1
    %p78 = por %p76, %p77
    %p79 = scmp.ne.s32.totalorder %s70, %s71
    %p80 = scmp.eq.s32.totalorder %s18, 0
    %p81 = por %p79, %p80
    %p82 = scmp.ne.s32.totalorder %s70, %s71
    %p83 = scmp.eq.s32.totalorder %s19, 1
    %p84 = por %p82, %p83
    %p86 = scmp.ne.s32.totalorder %s71, %s85
    %p87 = scmp.eq.s32.totalorder %s19, 0
    %p88 = por %p86, %p87
    %s90 = sadd.s32 %s89, 1
    %p93 = scmp.eq.s32.totalorder %s13, 1
    %p94 = scmp.ne.s32.totalorder %s89, %s91
    %p95 = scmp.eq.s32.totalorder %s13, 0
    %p96 = por %p94, %p95
    %p97 = scmp.ne.s32.totalorder %s89, %s91
    %p98 = scmp.eq.s32.totalorder %s18, 1
    %p99 = por %p97, %p98
    %p100 = scmp.ne.s32.totalorder %s91, %s92
    %p101 = scmp.eq.s32.totalorder %s18, 0
    %p102 = por %p100, %p101
    %p103 = scmp.ne.s32.totalorder %s91, %s92
    %p104 = scmp.eq.s32.totalorder %s19, 1
    %p105 = por %p103, %p104
    %p107 = scmp.ne.s32.totalorder %s92, %s106
    %p108 = scmp.eq.s32.totalorder %s19, 0
    %p109 = por %p107, %p108
    %s111 = sadd.s32 %s110, 1
    %p114 = scmp.eq.s32.totalorder %s13, 1
    %p115 = scmp.ne.s32.totalorder %s110, %s112
    %p116 = scmp.eq.s32.totalorder %s13, 0
    %p117 = por %p115, %p116
    %p118 = scmp.ne.s32.totalorder %s110, %s112
    %p119 = scmp.eq.s32.totalorder %s18, 1
    %p120 = por %p118, %p119
    %p121 = scmp.ne.s32.totalorder %s112, %s113
    %p122 = scmp.eq.s32.totalorder %s18, 0
    %p123 = por %p121, %p122
    %p124 = scmp.ne.s32.totalorder %s112, %s113
    %p125 = scmp.eq.s32.totalorder %s19, 1
    %p126 = por %p124, %p125
    %p128 = scmp.ne.s32.totalorder %s113, %s127
    %p129 = scmp.eq.s32.totalorder %s19, 0
    %p130 = por %p128, %p129
    %s131 = ssub.s32 %s13, %s20
    %p132 = scmp.eq.s32.totalorder %s131, 0
    %s134 = sadd.s32 %s133, 1
    %s135 = scalar_select %p132, %s133, %s134
    %p138 = pneg %p132
    %p139 = scmp.eq.s32.totalorder %s13, 1
    %p140 = por %p138, %p139
    %p141 = scmp.ne.s32.totalorder %s133, %s136
    %p142 = scmp.eq.s32.totalorder %s13, 0
    %p143 = por %p141, %p142
    %p144 = scmp.ne.s32.totalorder %s133, %s136
    %p145 = scmp.eq.s32.totalorder %s18, 1
    %p146 = por %p144, %p145
    %p147 = scmp.ne.s32.totalorder %s136, %s137
    %p148 = scmp.eq.s32.totalorder %s18, 0
    %p149 = por %p147, %p148
    %p150 = scmp.ne.s32.totalorder %s136, %s137
    %p151 = scmp.eq.s32.totalorder %s19, 1
    %p152 = por %p150, %p151
    %p154 = scmp.ne.s32.totalorder %s137, %s153
    %p155 = scmp.eq.s32.totalorder %s19, 0
    %p156 = por %p154, %p155
    %s157 = ssub.s32 %s13, %s20
    %p158 = scmp.eq.s32.totalorder %s157, 0
    %s160 = sadd.s32 %s159, 1
    %s161 = scalar_select %p158, %s159, %s160
    %p164 = pneg %p158
    %p165 = scmp.eq.s32.totalorder %s13, 1
    %p166 = por %p164, %p165
    %p167 = scmp.ne.s32.totalorder %s159, %s162
    %p168 = scmp.eq.s32.totalorder %s13, 0
    %p169 = por %p167, %p168
    %p170 = scmp.ne.s32.totalorder %s159, %s162
    %p171 = scmp.eq.s32.totalorder %s18, 1
    %p172 = por %p170, %p171
    %p173 = scmp.ne.s32.totalorder %s162, %s163
    %p174 = scmp.eq.s32.totalorder %s18, 0
    %p175 = por %p173, %p174
    %p176 = scmp.ne.s32.totalorder %s162, %s163
    %p177 = scmp.eq.s32.totalorder %s19, 1
    %p178 = por %p176, %p177
    %p180 = scmp.ne.s32.totalorder %s163, %s179
    %p181 = scmp.eq.s32.totalorder %s19, 0
    %p182 = por %p180, %p181
    %p183 = scmp.le.s32.totalorder 1, %s13
    %p184 = scmp.lt.s32.totalorder %s13, 3
    %p185 = pnand %p183, %p184
    %p186 = pneg %p185
    // Predicated region
    $region9: #{discriminator_forward.5} parent=5 // pred_check
      _
    $region10: #{discriminator_forward.5} parent=5 // pred_check_branch
      %188 = sbr.rel (%p185) target = $region12
    $region11: #{discriminator_forward.5} parent=5 // pred_region
      %s189 = ssub.s32 %s13, 1
      // Predicated region
      $region13: #{discriminator_forward.5} parent=11 // pred_check
        %p190 = pneg %p60
      $region14: #{discriminator_forward.5} parent=11 // pred_check_branch
        %192 = sbr.rel (%p190) target = $region16
      $region15: #{discriminator_forward.5} parent=11 // pred_region
        _
      $region16: #{discriminator_forward.5} parent=11 // pred_fallthru
        _
      // Predicated region
      $region17: #{discriminator_forward.5} parent=11 // pred_check
        %p193 = pneg %p81
      $region18: #{discriminator_forward.5} parent=11 // pred_check_branch
        %195 = sbr.rel (%p193) target = $region20
      $region19: #{discriminator_forward.5} parent=11 // pred_region
        _
      $region20: #{discriminator_forward.5} parent=11 // pred_fallthru
        _
      // Predicated region
      $region21: #{discriminator_forward.5} parent=11 // pred_check
        %p196 = pneg %p102
      $region22: #{discriminator_forward.5} parent=11 // pred_check_branch
        %198 = sbr.rel (%p196) target = $region24
      $region23: #{discriminator_forward.5} parent=11 // pred_region
        _
      $region24: #{discriminator_forward.5} parent=11 // pred_fallthru
        _
      // Predicated region
      $region25: #{discriminator_forward.5} parent=11 // pred_check
        %p199 = pneg %p123
      $region26: #{discriminator_forward.5} parent=11 // pred_check_branch
        %201 = sbr.rel (%p199) target = $region28
      $region27: #{discriminator_forward.5} parent=11 // pred_region
        _
      $region28: #{discriminator_forward.5} parent=11 // pred_fallthru
        _
    $region12: #{discriminator_forward.5} parent=5 // pred_fallthru
      _
    %p202 = scmp.lt.s32.totalorder %s13, 2
    // Predicated region
    $region29: #{discriminator_forward.5} parent=5 // pred_check
      %p203 = pneg %p202
    $region30: #{discriminator_forward.5} parent=5 // pred_check_branch
      %205 = sbr.rel (%p203) target = $region32
    $region31: #{discriminator_forward.5} parent=5 // pred_region
      // Predicated region
      $region33: #{discriminator_forward.5} parent=31 // pred_check
        %p206 = pneg %p33
      $region34: #{discriminator_forward.5} parent=31 // pred_check_branch
        %208 = sbr.rel (%p206) target = $region36
      $region35: #{discriminator_forward.5} parent=31 // pred_region
        %p209 = scmp.lt.s32.totalorder %s13, 1
        %s210 = scalar_select %p209, %s13, 1
        %s211 = smul.addr %s210, 5
        %s212 = smul.addr %s211, 8
        %s213 = scalar_lea.vmem %s0, %s212
      $region36: #{discriminator_forward.5} parent=31 // pred_fallthru
        _
    $region32: #{discriminator_forward.5} parent=5 // pred_fallthru
      _
    %p214 = scmp.le.s32.totalorder 1, %s13
    %p215 = scmp.lt.s32.totalorder %s13, 3
    %p216 = pnand %p214, %p215
    %p217 = pneg %p216
    // Predicated region
    $region37: #{discriminator_forward.5} parent=5 // pred_check
      _
    $region38: #{discriminator_forward.5} parent=5 // pred_check_branch
      %219 = sbr.rel (%p216) target = $region40
    $region39: #{discriminator_forward.5} parent=5 // pred_region
      %s220 = ssub.s32 %s13, 1
      %p221 = scmp.lt.s32.totalorder %s18, 1
      %s222 = scalar_select %p221, %s18, 1
      %s223 = smul.addr %s222, 5
      %s224 = smul.addr %s223, 8
      %s225 = scalar_lea.vmem %s0, %s224
      %p226 = pneg %p39
      %p227 = pneg %p36
      %p228 = pneg %p60
      %p229 = pneg %p57
      %p230 = pneg %p81
      %p231 = pneg %p78
      %p232 = pneg %p102
      %p233 = pneg %p99
      %p234 = pneg %p123
      %p235 = pneg %p120
      %p236 = pneg %p149
      %p237 = pneg %p146
      %p238 = scmp.lt.s32.totalorder %s18, 1
      %s239 = scalar_select %p238, %s18, 1
      %s240 = smul.addr %s239, 2
      %s241 = smul.addr %s240, 8
      %s242 = scalar_lea.vmem %s5, %s241
      %p243 = pneg %p175
      %p244 = pneg %p172
      %p245 = scmp.lt.s32.totalorder %s18, 1
      %s246 = scalar_select %p245, %s18, 1
      %s247 = smul.addr %s246, 2
      %s248 = scalar_lea.vmem %s6, %s247
      %p249 = scmp.lt.s32.totalorder %s18, 1
      %s250 = scalar_select %p249, %s18, 1
      %s251 = smul.addr %s250, 5
      %s252 = smul.addr %s251, 8
      %s253 = scalar_lea.vmem %s0, %s252
      %p254 = scmp.lt.s32.totalorder %s18, 1
      %s255 = scalar_select %p254, %s18, 1
      %s256 = smul.addr %s255, 2
      %s257 = smul.addr %s256, 8
      %s258 = scalar_lea.vmem %s5, %s257
      %p259 = scmp.lt.s32.totalorder %s18, 1
      %s260 = scalar_select %p259, %s18, 1
      %s261 = smul.addr %s260, 2
      %s262 = scalar_lea.vmem %s6, %s261
      %v263 = vld [vmem:[%s253] sm:$0x1f]
      %v264 = vld [vmem:[%s253 + $0x8] sm:$0x1f]
      %v265 = vld [vmem:[%s253 + $0x10] sm:$0x1f]
      %v266 = vld [vmem:[%s253 + $0x18] sm:$0x1f]
      %v267 = vld [vmem:[%s253 + $0x20] sm:$0x1f]
      %v268 = vld [vmem:[%s3] sm:$0x1]
      %v270 = vlaneseq
      %v271 = vshrl.u32 %v270, 7
      %v272 = vsub.s32 0, %v271
      %v273 = vrot.slane %v268, %v272
      %v275 = vmul.f32 %v263, %v273
      %v276 = vmul.f32 %v264, %v273
      %v277 = vmul.f32 %v265, %v273
      %v278 = vmul.f32 %v266, %v273
      %v279 = vmul.f32 %v267, %v273
      %v280 = vld [vmem:[%s4] sm:$0x1]
      %v282 = vlaneseq
      %v283 = vshrl.u32 %v282, 7
      %v284 = vsub.s32 0, %v283
      %v285 = vrot.slane %v280, %v284
      %v287 = vadd.f32 %v275, %v285
      %v288 = vadd.f32 %v276, %v285
      %v289 = vadd.f32 %v277, %v285
      %v290 = vadd.f32 %v278, %v285
      %v291 = vadd.f32 %v279, %v285
      %vm292 = vcmp.gt.f32.partialorder %v287, 0.0
      %vm293 = vcmp.gt.f32.partialorder %v288, 0.0
      %vm294 = vcmp.gt.f32.partialorder %v289, 0.0
      %vm295 = vcmp.gt.f32.partialorder %v290, 0.0
      %vm296 = vcmp.gt.f32.partialorder %v291, 0.0
      %v297 = vmul.f32 %v287, 0.2
      %v298 = vmul.f32 %v288, 0.2
      %v299 = vmul.f32 %v289, 0.2
      %v300 = vmul.f32 %v290, 0.2
      %v301 = vmul.f32 %v291, 0.2
      %v302 = vsel %vm292, %v287, %v297
      %v303 = vsel %vm293, %v288, %v298
      %v304 = vsel %vm294, %v289, %v299
      %v305 = vsel %vm295, %v290, %v300
      %v306 = vsel %vm296, %v291, %v301
      %v307 = vld [vmem:[%s1] sm:$0xff]
      %v308 = vld [vmem:[%s1 + $0x8] sm:$0xff]
      %v309 = vld [vmem:[%s1 + $0x10] sm:$0xff]
      %v310 = vld [vmem:[%s1 + $0x18] sm:$0xff]
      %v311 = vld [vmem:[%s1 + $0x20] sm:$0xff]
      %v312 = vld [vmem:[%s1 + $0x28] sm:$0xff]
      %v313 = vld [vmem:[%s1 + $0x30] sm:$0xff]
      %v314 = vld [vmem:[%s1 + $0x38] sm:$0xff]
      %v315 = vld [vmem:[%s1 + $0x40] sm:$0xff]
      %v316 = vld [vmem:[%s1 + $0x48] sm:$0xff]
      %v317 = vld [vmem:[%s1 + $0x50] sm:$0xff]
      %v318 = vld [vmem:[%s1 + $0x58] sm:$0xff]
      %v319 = vld [vmem:[%s1 + $0x60] sm:$0xff]
      %v320 = vld [vmem:[%s1 + $0x68] sm:$0xff]
      %v321 = vld [vmem:[%s1 + $0x70] sm:$0xff]
      %v322 = vld [vmem:[%s1 + $0x78] sm:$0xff]
      %v327 = vcombine.high %v302, %v302
      %v328 = vcombine.high %v303, %v303
      %v329 = vcombine.high %v304, %v304
      %v330 = vcombine.high %v305, %v305
      %vm331 = vcmask 1042432
      %vm332 = vcmask 1046532
      %vm333 = vmor %vm331, %vm332
      %v334 = vrot.slane %v302, 5
      %v335 = vrot.slane %v334, 4
      %v336 = vrot.slane %v327, 5
      %v337 = vsel %vm333, %v335, %v336
      %v338 = vrot.slane %v303, 5
      %v339 = vrot.slane %v338, 4
      %v340 = vrot.slane %v328, 5
      %v341 = vsel %vm333, %v339, %v340
      %v342 = vrot.slane %v304, 5
      %v343 = vrot.slane %v342, 4
      %v344 = vrot.slane %v329, 5
      %v345 = vsel %vm333, %v343, %v344
      %v346 = vrot.slane %v305, 5
      %v347 = vrot.slane %v346, 4
      %v348 = vrot.slane %v330, 5
      %v349 = vsel %vm333, %v347, %v348
      %v350 = vld [vmem:[%s1 + $0x80] sm:$0xff]
      %v351 = vld [vmem:[%s1 + $0x88] sm:$0xff]
      %v352 = vld [vmem:[%s1 + $0x90] sm:$0xff]
      %v353 = vld [vmem:[%s1 + $0x98] sm:$0xff]
      %v354 = vld [vmem:[%s1 + $0xa0] sm:$0xff]
      %v355 = vld [vmem:[%s1 + $0xa8] sm:$0xff]
      %v356 = vld [vmem:[%s1 + $0xb0] sm:$0xff]
      %v357 = vld [vmem:[%s1 + $0xb8] sm:$0xff]
      %v358 = vld [vmem:[%s1 + $0xc0] sm:$0xff]
      %v359 = vld [vmem:[%s1 + $0xc8] sm:$0xff]
      %v360 = vld [vmem:[%s1 + $0xd0] sm:$0xff]
      %v361 = vld [vmem:[%s1 + $0xd8] sm:$0xff]
      %v362 = vld [vmem:[%s1 + $0xe0] sm:$0xff]
      %v363 = vld [vmem:[%s1 + $0xe8] sm:$0xff]
      %v364 = vld [vmem:[%s1 + $0xf0] sm:$0xff]
      %v365 = vld [vmem:[%s1 + $0xf8] sm:$0xff]
      %v366 = vcombine.low %v337, %v341
      %v367 = vcombine.low %v345, %v349
      %370 = vmatprep.subr.mxu0 0.0
      %371 = vmatpush1.msra.mxu0 %v365
      %372 = vmatprep.subr.mxu0 0.0
      %373 = vmatpush1.msra.mxu0 %v364
      %374 = vmatprep.subr.mxu0 0.0
      %375 = vmatpush1.msra.mxu0 %v363
      %376 = vmatprep.subr.mxu0 0.0
      %377 = vmatpush1.msra.mxu0 %v362
      %378 = vmatprep.subr.mxu0 0.0
      %379 = vmatpush1.msra.mxu0 %v361
      %380 = vmatprep.subr.mxu0 0.0
      %381 = vmatpush1.msra.mxu0 %v360
      %382 = vmatprep.subr.mxu0 0.0
      %383 = vmatpush1.msra.mxu0 %v359
      %384 = vmatprep.subr.mxu0 0.0
      %385 = vmatpush1.msra.mxu0 %v358
      %386 = vmatprep.subr.mxu0 0.0
      %387 = vmatpush1.msra.mxu0 %v357
      %388 = vmatprep.subr.mxu0 0.0
      %389 = vmatpush1.msra.mxu0 %v356
      %390 = vmatprep.subr.mxu0 0.0
      %391 = vmatpush1.msra.mxu0 %v355
      %392 = vmatprep.subr.mxu0 0.0
      %393 = vmatpush1.msra.mxu0 %v354
      %394 = vmatprep.subr.mxu0 0.0
      %395 = vmatpush1.msra.mxu0 %v353
      %396 = vmatprep.subr.mxu0 0.0
      %397 = vmatpush1.msra.mxu0 %v352
      %398 = vmatprep.subr.mxu0 0.0
      %399 = vmatpush1.msra.mxu0 %v351
      %400 = vmatprep.subr.mxu0 0.0
      %401 = vmatpush1.msra.mxu0 %v350
      %402 = vmatprep.subr.mxu0 0.0
      %403 = vmatpush2.msra.mxu0 0.0
      %404 = vmatprep.subr.mxu0 0.0
      %405 = vmatpush2.msra.mxu0 0.0
      %406 = vmatprep.subr.mxu0 0.0
      %407 = vmatpush2.msra.mxu0 0.0
      %408 = vmatprep.subr.mxu0 0.0
      %409 = vmatpush2.msra.mxu0 0.0
      %410 = vmatprep.subr.mxu0 0.0
      %411 = vmatpush2.msra.mxu0 0.0
      %412 = vmatprep.subr.mxu0 0.0
      %413 = vmatpush2.msra.mxu0 0.0
      %414 = vmatprep.subr.mxu0 0.0
      %415 = vmatpush2.msra.mxu0 0.0
      %416 = vmatprep.subr.mxu0 0.0
      %417 = vmatpush2.msra.mxu0 0.0
      %418 = vmatprep.subr.mxu0 0.0
      %419 = vmatpush2.msra.mxu0 0.0
      %420 = vmatprep.subr.mxu0 0.0
      %421 = vmatpush2.msra.mxu0 0.0
      %422 = vmatprep.subr.mxu0 0.0
      %423 = vmatpush2.msra.mxu0 0.0
      %424 = vmatprep.subr.mxu0 0.0
      %425 = vmatpush2.msra.mxu0 0.0
      %426 = vmatprep.subr.mxu0 0.0
      %427 = vmatpush2.msra.mxu0 0.0
      %428 = vmatprep.subr.mxu0 0.0
      %429 = vmatpush2.msra.mxu0 0.0
      %430 = vmatprep.subr.mxu0 0.0
      %431 = vmatpush2.msra.mxu0 0.0
      %432 = vmatprep.subr.mxu0 0.0
      %433 = vmatpush2.msra.mxu0 0.0
      %434 = vmatprep.mubr.f32.mxu0 0.0
      %435 = vmatmul.mubr.f32.gmra.mxu0 %v366
      %v436 = vpop.f32.mrf.mxu0
      %v437 = vadd.f32 0.0, %v436
      %v438 = vpop.f32.mrf.mxu0
      %439 = vmatprep.mubr.f32.mxu0 0.0
      %440 = vmatmul.mubr.f32.gmra.mxu0 %v367
      %v441 = vpop.f32.mrf.mxu0
      %v442 = vadd.f32 0.0, %v441
      %v443 = vpop.f32.mrf.mxu0
      %444 = vdwg.mxu0
      %v445 = vcombine.low %v302, %v303
      %v446 = vcombine.low %v304, %v305
      %449 = vmatprep.subr.mxu0 0.0
      %450 = vmatpush1.msra.mxu0 %v322
      %451 = vmatprep.subr.mxu0 0.0
      %452 = vmatpush1.msra.mxu0 %v321
      %453 = vmatprep.subr.mxu0 0.0
      %454 = vmatpush1.msra.mxu0 %v320
      %455 = vmatprep.subr.mxu0 0.0
      %456 = vmatpush1.msra.mxu0 %v319
      %457 = vmatprep.subr.mxu0 0.0
      %458 = vmatpush1.msra.mxu0 %v318
      %459 = vmatprep.subr.mxu0 0.0
      %460 = vmatpush1.msra.mxu0 %v317
      %461 = vmatprep.subr.mxu0 0.0
      %462 = vmatpush1.msra.mxu0 %v316
      %463 = vmatprep.subr.mxu0 0.0
      %464 = vmatpush1.msra.mxu0 %v315
      %465 = vmatprep.subr.mxu0 0.0
      %466 = vmatpush1.msra.mxu0 %v314
      %467 = vmatprep.subr.mxu0 0.0
      %468 = vmatpush1.msra.mxu0 %v313
      %469 = vmatprep.subr.mxu0 0.0
      %470 = vmatpush1.msra.mxu0 %v312
      %471 = vmatprep.subr.mxu0 0.0
      %472 = vmatpush1.msra.mxu0 %v311
      %473 = vmatprep.subr.mxu0 0.0
      %474 = vmatpush1.msra.mxu0 %v310
      %475 = vmatprep.subr.mxu0 0.0
      %476 = vmatpush1.msra.mxu0 %v309
      %477 = vmatprep.subr.mxu0 0.0
      %478 = vmatpush1.msra.mxu0 %v308
      %479 = vmatprep.subr.mxu0 0.0
      %480 = vmatpush1.msra.mxu0 %v307
      %481 = vmatprep.subr.mxu0 0.0
      %482 = vmatpush2.msra.mxu0 0.0
      %483 = vmatprep.subr.mxu0 0.0
      %484 = vmatpush2.msra.mxu0 0.0
      %485 = vmatprep.subr.mxu0 0.0
      %486 = vmatpush2.msra.mxu0 0.0
      %487 = vmatprep.subr.mxu0 0.0
      %488 = vmatpush2.msra.mxu0 0.0
      %489 = vmatprep.subr.mxu0 0.0
      %490 = vmatpush2.msra.mxu0 0.0
      %491 = vmatprep.subr.mxu0 0.0
      %492 = vmatpush2.msra.mxu0 0.0
      %493 = vmatprep.subr.mxu0 0.0
      %494 = vmatpush2.msra.mxu0 0.0
      %495 = vmatprep.subr.mxu0 0.0
      %496 = vmatpush2.msra.mxu0 0.0
      %497 = vmatprep.subr.mxu0 0.0
      %498 = vmatpush2.msra.mxu0 0.0
      %499 = vmatprep.subr.mxu0 0.0
      %500 = vmatpush2.msra.mxu0 0.0
      %501 = vmatprep.subr.mxu0 0.0
      %502 = vmatpush2.msra.mxu0 0.0
      %503 = vmatprep.subr.mxu0 0.0
      %504 = vmatpush2.msra.mxu0 0.0
      %505 = vmatprep.subr.mxu0 0.0
      %506 = vmatpush2.msra.mxu0 0.0
      %507 = vmatprep.subr.mxu0 0.0
      %508 = vmatpush2.msra.mxu0 0.0
      %509 = vmatprep.subr.mxu0 0.0
      %510 = vmatpush2.msra.mxu0 0.0
      %511 = vmatprep.subr.mxu0 0.0
      %512 = vmatpush2.msra.mxu0 0.0
      %513 = vmatprep.mubr.f32.mxu0 0.0
      %514 = vmatmul.mubr.f32.gmra.mxu0 %v445
      %v515 = vpop.f32.mrf.mxu0
      %v516 = vadd.f32 %v437, %v515
      %v517 = vpop.f32.mrf.mxu0
      %518 = vmatprep.mubr.f32.mxu0 0.0
      %519 = vmatmul.mubr.f32.gmra.mxu0 %v446
      %v520 = vpop.f32.mrf.mxu0
      %v521 = vadd.f32 %v442, %v520
      %v522 = vpop.f32.mrf.mxu0
      %523 = vdwg.mxu0
      %v524 = vld [vmem:[%s1 + $0x100] sm:$0xff]
      %v525 = vld [vmem:[%s1 + $0x108] sm:$0xff]
      %v526 = vld [vmem:[%s1 + $0x110] sm:$0xff]
      %v527 = vld [vmem:[%s1 + $0x118] sm:$0xff]
      %v528 = vld [vmem:[%s1 + $0x120] sm:$0xff]
      %v529 = vld [vmem:[%s1 + $0x128] sm:$0xff]
      %v530 = vld [vmem:[%s1 + $0x130] sm:$0xff]
      %v531 = vld [vmem:[%s1 + $0x138] sm:$0xff]
      %v532 = vld [vmem:[%s1 + $0x140] sm:$0xff]
      %v533 = vld [vmem:[%s1 + $0x148] sm:$0xff]
      %v534 = vld [vmem:[%s1 + $0x150] sm:$0xff]
      %v535 = vld [vmem:[%s1 + $0x158] sm:$0xff]
      %v536 = vld [vmem:[%s1 + $0x160] sm:$0xff]
      %v537 = vld [vmem:[%s1 + $0x168] sm:$0xff]
      %v538 = vld [vmem:[%s1 + $0x170] sm:$0xff]
      %v539 = vld [vmem:[%s1 + $0x178] sm:$0xff]
      %v541 = vcombine.low %v303, %v304
      %v542 = vcombine.low %v305, %v306
      %545 = vmatprep.subr.mxu0 0.0
      %546 = vmatpush1.msra.mxu0 %v539
      %547 = vmatprep.subr.mxu0 0.0
      %548 = vmatpush1.msra.mxu0 %v538
      %549 = vmatprep.subr.mxu0 0.0
      %550 = vmatpush1.msra.mxu0 %v537
      %551 = vmatprep.subr.mxu0 0.0
      %552 = vmatpush1.msra.mxu0 %v536
      %553 = vmatprep.subr.mxu0 0.0
      %554 = vmatpush1.msra.mxu0 %v535
      %555 = vmatprep.subr.mxu0 0.0
      %556 = vmatpush1.msra.mxu0 %v534
      %557 = vmatprep.subr.mxu0 0.0
      %558 = vmatpush1.msra.mxu0 %v533
      %559 = vmatprep.subr.mxu0 0.0
      %560 = vmatpush1.msra.mxu0 %v532
      %561 = vmatprep.subr.mxu0 0.0
      %562 = vmatpush1.msra.mxu0 %v531
      %563 = vmatprep.subr.mxu0 0.0
      %564 = vmatpush1.msra.mxu0 %v530
      %565 = vmatprep.subr.mxu0 0.0
      %566 = vmatpush1.msra.mxu0 %v529
      %567 = vmatprep.subr.mxu0 0.0
      %568 = vmatpush1.msra.mxu0 %v528
      %569 = vmatprep.subr.mxu0 0.0
      %570 = vmatpush1.msra.mxu0 %v527
      %571 = vmatprep.subr.mxu0 0.0
      %572 = vmatpush1.msra.mxu0 %v526
      %573 = vmatprep.subr.mxu0 0.0
      %574 = vmatpush1.msra.mxu0 %v525
      %575 = vmatprep.subr.mxu0 0.0
      %576 = vmatpush1.msra.mxu0 %v524
      %577 = vmatprep.subr.mxu0 0.0
      %578 = vmatpush2.msra.mxu0 0.0
      %579 = vmatprep.subr.mxu0 0.0
      %580 = vmatpush2.msra.mxu0 0.0
      %581 = vmatprep.subr.mxu0 0.0
      %582 = vmatpush2.msra.mxu0 0.0
      %583 = vmatprep.subr.mxu0 0.0
      %584 = vmatpush2.msra.mxu0 0.0
      %585 = vmatprep.subr.mxu0 0.0
      %586 = vmatpush2.msra.mxu0 0.0
      %587 = vmatprep.subr.mxu0 0.0
      %588 = vmatpush2.msra.mxu0 0.0
      %589 = vmatprep.subr.mxu0 0.0
      %590 = vmatpush2.msra.mxu0 0.0
      %591 = vmatprep.subr.mxu0 0.0
      %592 = vmatpush2.msra.mxu0 0.0
      %593 = vmatprep.subr.mxu0 0.0
      %594 = vmatpush2.msra.mxu0 0.0
      %595 = vmatprep.subr.mxu0 0.0
      %596 = vmatpush2.msra.mxu0 0.0
      %597 = vmatprep.subr.mxu0 0.0
      %598 = vmatpush2.msra.mxu0 0.0
      %599 = vmatprep.subr.mxu0 0.0
      %600 = vmatpush2.msra.mxu0 0.0
      %601 = vmatprep.subr.mxu0 0.0
      %602 = vmatpush2.msra.mxu0 0.0
      %603 = vmatprep.subr.mxu0 0.0
      %604 = vmatpush2.msra.mxu0 0.0
      %605 = vmatprep.subr.mxu0 0.0
      %606 = vmatpush2.msra.mxu0 0.0
      %607 = vmatprep.subr.mxu0 0.0
      %608 = vmatpush2.msra.mxu0 0.0
      %609 = vmatprep.mubr.f32.mxu0 0.0
      %610 = vmatmul.mubr.f32.gmra.mxu0 %v541
      %v611 = vpop.f32.mrf.mxu0
      %v612 = vadd.f32 0.0, %v611
      %v613 = vpop.f32.mrf.mxu0
      %614 = vmatprep.mubr.f32.mxu0 0.0
      %615 = vmatmul.mubr.f32.gmra.mxu0 %v542
      %v616 = vpop.f32.mrf.mxu0
      %v617 = vadd.f32 0.0, %v616
      %v618 = vpop.f32.mrf.mxu0
      %619 = vdwg.mxu0
      %v620 = vadd.f32 %v516, %v612
      %v621 = vadd.f32 %v521, %v617
      %v622 = vcombine.high %v306, %v306
      %v623 = vrot.slane %v306, 5
      %v624 = vrot.slane %v623, 4
      %v625 = vrot.slane %v622, 5
      %v626 = vsel %vm333, %v624, %v625
      %v627 = vld [vmem:[%s1 + $0x180] sm:$0xff]
      %v628 = vld [vmem:[%s1 + $0x188] sm:$0xff]
      %v629 = vld [vmem:[%s1 + $0x190] sm:$0xff]
      %v630 = vld [vmem:[%s1 + $0x198] sm:$0xff]
      %v631 = vld [vmem:[%s1 + $0x1a0] sm:$0xff]
      %v632 = vld [vmem:[%s1 + $0x1a8] sm:$0xff]
      %v633 = vld [vmem:[%s1 + $0x1b0] sm:$0xff]
      %v634 = vld [vmem:[%s1 + $0x1b8] sm:$0xff]
      %v635 = vld [vmem:[%s1 + $0x1c0] sm:$0xff]
      %v636 = vld [vmem:[%s1 + $0x1c8] sm:$0xff]
      %v637 = vld [vmem:[%s1 + $0x1d0] sm:$0xff]
      %v638 = vld [vmem:[%s1 + $0x1d8] sm:$0xff]
      %v639 = vld [vmem:[%s1 + $0x1e0] sm:$0xff]
      %v640 = vld [vmem:[%s1 + $0x1e8] sm:$0xff]
      %v641 = vld [vmem:[%s1 + $0x1f0] sm:$0xff]
      %v642 = vld [vmem:[%s1 + $0x1f8] sm:$0xff]
      %v643 = vcombine.low %v341, %v345
      %v644 = vcombine.low %v349, %v626
      %647 = vmatprep.subr.mxu0 0.0
      %648 = vmatpush1.msra.mxu0 %v642
      %649 = vmatprep.subr.mxu0 0.0
      %650 = vmatpush1.msra.mxu0 %v641
      %651 = vmatprep.subr.mxu0 0.0
      %652 = vmatpush1.msra.mxu0 %v640
      %653 = vmatprep.subr.mxu0 0.0
      %654 = vmatpush1.msra.mxu0 %v639
      %655 = vmatprep.subr.mxu0 0.0
      %656 = vmatpush1.msra.mxu0 %v638
      %657 = vmatprep.subr.mxu0 0.0
      %658 = vmatpush1.msra.mxu0 %v637
      %659 = vmatprep.subr.mxu0 0.0
      %660 = vmatpush1.msra.mxu0 %v636
      %661 = vmatprep.subr.mxu0 0.0
      %662 = vmatpush1.msra.mxu0 %v635
      %663 = vmatprep.subr.mxu0 0.0
      %664 = vmatpush1.msra.mxu0 %v634
      %665 = vmatprep.subr.mxu0 0.0
      %666 = vmatpush1.msra.mxu0 %v633
      %667 = vmatprep.subr.mxu0 0.0
      %668 = vmatpush1.msra.mxu0 %v632
      %669 = vmatprep.subr.mxu0 0.0
      %670 = vmatpush1.msra.mxu0 %v631
      %671 = vmatprep.subr.mxu0 0.0
      %672 = vmatpush1.msra.mxu0 %v630
      %673 = vmatprep.subr.mxu0 0.0
      %674 = vmatpush1.msra.mxu0 %v629
      %675 = vmatprep.subr.mxu0 0.0
      %676 = vmatpush1.msra.mxu0 %v628
      %677 = vmatprep.subr.mxu0 0.0
      %678 = vmatpush1.msra.mxu0 %v627
      %679 = vmatprep.subr.mxu0 0.0
      %680 = vmatpush2.msra.mxu0 0.0
      %681 = vmatprep.subr.mxu0 0.0
      %682 = vmatpush2.msra.mxu0 0.0
      %683 = vmatprep.subr.mxu0 0.0
      %684 = vmatpush2.msra.mxu0 0.0
      %685 = vmatprep.subr.mxu0 0.0
      %686 = vmatpush2.msra.mxu0 0.0
      %687 = vmatprep.subr.mxu0 0.0
      %688 = vmatpush2.msra.mxu0 0.0
      %689 = vmatprep.subr.mxu0 0.0
      %690 = vmatpush2.msra.mxu0 0.0
      %691 = vmatprep.subr.mxu0 0.0
      %692 = vmatpush2.msra.mxu0 0.0
      %693 = vmatprep.subr.mxu0 0.0
      %694 = vmatpush2.msra.mxu0 0.0
      %695 = vmatprep.subr.mxu0 0.0
      %696 = vmatpush2.msra.mxu0 0.0
      %697 = vmatprep.subr.mxu0 0.0
      %698 = vmatpush2.msra.mxu0 0.0
      %699 = vmatprep.subr.mxu0 0.0
      %700 = vmatpush2.msra.mxu0 0.0
      %701 = vmatprep.subr.mxu0 0.0
      %702 = vmatpush2.msra.mxu0 0.0
      %703 = vmatprep.subr.mxu0 0.0
      %704 = vmatpush2.msra.mxu0 0.0
      %705 = vmatprep.subr.mxu0 0.0
      %706 = vmatpush2.msra.mxu0 0.0
      %707 = vmatprep.subr.mxu0 0.0
      %708 = vmatpush2.msra.mxu0 0.0
      %709 = vmatprep.subr.mxu0 0.0
      %710 = vmatpush2.msra.mxu0 0.0
      %711 = vmatprep.mubr.f32.mxu0 0.0
      %712 = vmatmul.mubr.f32.gmra.mxu0 %v643
      %v713 = vpop.f32.mrf.mxu0
      %v714 = vadd.f32 0.0, %v713
      %v715 = vpop.f32.mrf.mxu0
      %716 = vmatprep.mubr.f32.mxu0 0.0
      %717 = vmatmul.mubr.f32.gmra.mxu0 %v644
      %v718 = vpop.f32.mrf.mxu0
      %v719 = vadd.f32 0.0, %v718
      %v720 = vpop.f32.mrf.mxu0
      %721 = vdwg.mxu0
      %v722 = vadd.f32 %v620, %v714
      %v723 = vadd.f32 %v621, %v719
      %v724 = vld [vmem:[%s2] sm:$0x1]
      %v726 = vlaneseq
      %v727 = vshrl.u32 %v726, 7
      %v728 = vsub.s32 0, %v727
      %v729 = vrot.slane %v724, %v728
      %v731 = vadd.f32 %v722, %v729
      %v732 = vadd.f32 %v723, %v729
      %vm733 = vcmask 523264
      %734 = vst.msk [vmem:[%s258] sm:$0xff] %vm733, %v731
      %735 = vst.msk [vmem:[%s258 + $0x8] sm:$0xff] %vm733, %v732
      %v736 = vsel %vm733, %v731, 0.0
      %v737 = vsel %vm733, %v732, 0.0
      %v738 = vadd.f32 %v736, %v737
      %v739 = vrot.slane %v738, 4
      %v740 = vadd.f32 %v738, %v739
      %v741 = vrot.slane %v740, 2
      %v742 = vadd.f32 %v740, %v741
      %v743 = vrot.slane %v742, 1
      %v744 = vadd.f32 %v742, %v743
      %v745 = vmul.f32 %v731, %v731
      %v746 = vmul.f32 %v732, %v732
      %v747 = vsel %vm733, %v745, 0.0
      %v748 = vsel %vm733, %v746, 0.0
      %v749 = vadd.f32 %v747, %v748
      %v750 = vrot.slane %v749, 4
      %v751 = vadd.f32 %v749, %v750
      %v752 = vrot.slane %v751, 2
      %v753 = vadd.f32 %v751, %v752
      %v754 = vrot.slane %v753, 1
      %v755 = vadd.f32 %v753, %v754
      %vm756 = vcmask 1040384
      %v757 = vsel %vm756, %v744, %v755
      %vm758 = vcmask 517120
      %759 = vst.msk [vmem:[%s262] sm:$0x3] %vm758, %v757
      %p760 = scmp.lt.s32.totalorder %s18, 1
      %s761 = scalar_select %p760, %s18, 1
      %s762 = smul.addr %s761, 2
      %s763 = smul.addr %s762, 8
      %s764 = scalar_lea.vmem %s5, %s763
      %p765 = scmp.lt.s32.totalorder %s18, 1
      %s766 = scalar_select %p765, %s18, 1
      %s767 = smul.addr %s766, 2
      %s768 = scalar_lea.vmem %s6, %s767
      // Predicated region
      $region41: #{discriminator_forward.5} parent=39 // pred_check
        %p769 = pneg %p146
      $region42: #{discriminator_forward.5} parent=39 // pred_check_branch
        %771 = sbr.rel (%p769) target = $region44
      $region43: #{discriminator_forward.5} parent=39 // pred_region
        _
      $region44: #{discriminator_forward.5} parent=39 // pred_fallthru
        _
      // Predicated region
      $region45: #{discriminator_forward.5} parent=39 // pred_check
        %p772 = pneg %p172
      $region46: #{discriminator_forward.5} parent=39 // pred_check_branch
        %774 = sbr.rel (%p772) target = $region48
      $region47: #{discriminator_forward.5} parent=39 // pred_region
        _
      $region48: #{discriminator_forward.5} parent=39 // pred_fallthru
        _
    $region40: #{discriminator_forward.5} parent=5 // pred_fallthru
      _
    %p775 = scmp.le.s32.totalorder 2, %s13
    // Predicated region
    $region49: #{discriminator_forward.5} parent=5 // pred_check
      %p776 = pneg %p775
    $region50: #{discriminator_forward.5} parent=5 // pred_check_branch
      %778 = sbr.rel (%p776) target = $region52
    $region51: #{discriminator_forward.5} parent=5 // pred_region
      %s779 = ssub.s32 %s13, 2
      // Predicated region
      $region53: #{discriminator_forward.5} parent=51 // pred_check
        %p780 = pneg %p152
      $region54: #{discriminator_forward.5} parent=51 // pred_check_branch
        %782 = sbr.rel (%p780) target = $region56
      $region55: #{discriminator_forward.5} parent=51 // pred_region
        %p783 = scmp.lt.s32.totalorder %s19, 1
        %s784 = scalar_select %p783, %s19, 1
        %s785 = smul.addr %s784, 2
        %s786 = smul.addr %s785, 8
        %s787 = scalar_lea.vmem %s5, %s786
      $region56: #{discriminator_forward.5} parent=51 // pred_fallthru
        _
      // Predicated region
      $region57: #{discriminator_forward.5} parent=51 // pred_check
        %p788 = pneg %p178
      $region58: #{discriminator_forward.5} parent=51 // pred_check_branch
        %790 = sbr.rel (%p788) target = $region60
      $region59: #{discriminator_forward.5} parent=51 // pred_region
        %p791 = scmp.lt.s32.totalorder %s19, 1
        %s792 = scalar_select %p791, %s19, 1
        %s793 = smul.addr %s792, 2
        %s794 = scalar_lea.vmem %s6, %s793
      $region60: #{discriminator_forward.5} parent=51 // pred_fallthru
        _
    $region52: #{discriminator_forward.5} parent=5 // pred_fallthru
      _
  $region6: #{discriminator_forward.5} parent=0 // loop_footer
    %s17 = sadd.s32 1, %s13
  $region7: #{discriminator_forward.5} parent=0 // loop_footer_branch
    %12 = sbr.rel target = $region3
  $region8: #{discriminator_forward.5} parent=0 // loop_exit
    _

</llo_original>
